<compile_context>
chip_gen: v7x
topology: tpu7x:2x2x1
jax: 0.10.0
libtpu: 0.0.40
codegen_flags: <defaults>
</compile_context>

<pallas_src>
import math
import functools

import jax
import jax.numpy as jnp
from jax import lax
from jax.experimental import pallas as pl
from jax.experimental.pallas import tpu as pltpu

# ---------------- model config (small, consistent with module defaults scaled down) ----
VOCAB_SIZE = 50
D_MODEL = 32
NHEAD = 4
NUM_LAYERS = 2
NUM_KEYPOINTS = 8
DIM_FF = 64          # == 2 * D_MODEL (required by the packed FFN layout below)
MAX_LEN = 64
BATCH = 2
SEQ = 8
LN_EPS = 1e-5
NEG_INF = -1e9       # additive mask; exp underflows to exactly 0 (f32 cutoff ~ -104)


# ---------------- shared helpers -------------------------------------------------------
def _layer_norm(v, w, b):
    mu = jnp.mean(v, axis=-1, keepdims=True)
    var = jnp.mean((v - mu) ** 2, axis=-1, keepdims=True)
    return (v - mu) * lax.rsqrt(var + LN_EPS) * w + b


# ---------------- fused Pallas kernel ---------------------------------------------------
def fused_forward_kernel(src_ref, emb_pe_ref, wslab_ref, vecs_ref, o_ref, x_scr,
                         *, nhead, num_layers, batch, seq):
    """Embedding gather + PE + all encoder layers + fc head, entirely in VMEM.

    src_ref:    (M,) int32 SMEM   token ids, rows batch-major (r = n*L + l)
    emb_pe_ref: (VP+M, D) VMEM    rows [0,VOCAB): embedding * sqrt(D); rows [VP,VP+M): PE rows
    wslab_ref:  (NL*10+1, D, D)   per layer: [Wq_t, Wk_t, Wvo_0..3, w1a, w1b, w2a, w2b]; last: fc_w_t (padded)
    vecs_ref:   (NL*10+1, D)      per layer: [bq, bk, bo', ln1w, ln1b, ln2w, ln2b, b2, b1a, b1b]; last: fc_b (padded)
    o_ref:      (M, K2)
    x_scr:      (M, D) VMEM scratch for the gathered embedding rows
    """
    M, D = x_scr.shape
    N, L = batch, seq
    dh = D // nhead
    K2 = o_ref.shape[1]
    scale = 1.0 / math.sqrt(dh)
    vocab_pad = emb_pe_ref.shape[0] - M

    # ---- embedding gather (scale already folded into the table) -------------------
    for r in range(M):
        tok = src_ref[r]
        x_scr[pl.ds(r, 1), :] = emb_pe_ref[pl.ds(tok, 1), :]
    # positional encoding rows (module quirk: PE is indexed by the batch dim)
    x = x_scr[...] + emb_pe_ref[pl.ds(vocab_pad, M), :]                      # (M, D)
    # dropout p=0.1 -> identity (eval)

    # ---- constants built in-kernel ------------------------------------------------
    ri = lax.broadcasted_iota(jnp.int32, (M, M), 0)
    ci = lax.broadcasted_iota(jnp.int32, (M, M), 1)
    # rows r, r' attend to each other iff they share a sequence position (r % L)
    attn_bias = jnp.where((ri % L) == (ci % L), 0.0, NEG_INF)                # (M, M)
    lane = lax.broadcasted_iota(jnp.int32, (1, D), 1)
    head_masks = [((lane >= h * dh) & (lane < (h + 1) * dh)).astype(jnp.float32)
                  for h in range(nhead)]

    for li in range(num_layers):
        wb = 10 * li
        vb = 10 * li
        bq = vecs_ref[pl.ds(vb + 0, 1), :]
        bk = vecs_ref[pl.ds(vb + 1, 1), :]
        bo = vecs_ref[pl.ds(vb + 2, 1), :]       # includes folded v-bias @ Wo
        ln1w = vecs_ref[pl.ds(vb + 3, 1), :]
        ln1b = vecs_ref[pl.ds(vb + 4, 1), :]
        ln2w = vecs_ref[pl.ds(vb + 5, 1), :]
        ln2b = vecs_ref[pl.ds(vb + 6, 1), :]
        b2 = vecs_ref[pl.ds(vb + 7, 1), :]
        b1a = vecs_ref[pl.ds(vb + 8, 1), :]
        b1b = vecs_ref[pl.ds(vb + 9, 1), :]

        # --- self-attention (post-norm TransformerEncoderLayer, eval mode) ---------
        q = jnp.dot(x, wslab_ref[wb + 0], preferred_element_type=jnp.float32) + bq
        k = jnp.dot(x, wslab_ref[wb + 1], preferred_element_type=jnp.float32) + bk

        attn = None
        for h in range(nhead):
            # masked contraction == per-head score; no lane slicing of q/k needed
            s = lax.dot_general(q * head_masks[h], k, (((1,), (1,)), ((), ())),
                                preferred_element_type=jnp.float32)          # (M, M)
            s = s * scale + attn_bias
            p = jnp.exp(s)                       # masked entries underflow to exactly 0
            p = p * pl.reciprocal(jnp.sum(p, axis=-1, keepdims=True), approx=True)
            xvo = jnp.dot(x, wslab_ref[wb + 2 + h],
                          preferred_element_type=jnp.float32)                # (M, D)
            ph = jnp.dot(p, xvo, preferred_element_type=jnp.float32)         # (M, D)
            attn = ph if attn is None else attn + ph
        attn = attn + bo

        y = _layer_norm(x + attn, ln1w, ln1b)

        # --- feed-forward (ReLU), FF = 2*D split into two (D, D) matmul pairs ------
        ha = jnp.maximum(jnp.dot(y, wslab_ref[wb + 6],
                                 preferred_element_type=jnp.float32) + b1a, 0.0)
        hb = jnp.maximum(jnp.dot(y, wslab_ref[wb + 7],
                                 preferred_element_type=jnp.float32) + b1b, 0.0)
        ff = (jnp.dot(ha, wslab_ref[wb + 8], preferred_element_type=jnp.float32)
              + jnp.dot(hb, wslab_ref[wb + 9], preferred_element_type=jnp.float32)
              + b2)

        x = _layer_norm(y + ff, ln2w, ln2b)

    # ---- final fc head (rows already batch-major; no post-kernel transpose) -------
    fcw = wslab_ref[10 * num_layers]                                         # (D, D) padded
    fcb = vecs_ref[pl.ds(10 * num_layers, 1), :]                             # (1, D) padded
    out = jnp.dot(x, fcw, preferred_element_type=jnp.float32) + fcb
    o_ref[...] = out[:, :K2]


# ---------------- Pallas wrapper --------------------------------------------------------
def pose_transformer_forward(src, params):
    N, L = src.shape
    M = N * L
    D = D_MODEL
    K2 = NUM_KEYPOINTS * 2
    pk = params["packed"]

    src_flat = src.reshape(M).astype(jnp.int32)       # batch-major rows, r = n*L + l

    kern = functools.partial(fused_forward_kernel, nhead=NHEAD,
                             num_layers=NUM_LAYERS, batch=N, seq=L)
    y = pl.pallas_call(
        kern,
        out_shape=jax.ShapeDtypeStruct((M, K2), jnp.float32),
        grid_spec=pltpu.PrefetchScalarGridSpec(
            num_scalar_prefetch=1,
            grid=(1,),
            in_specs=[
                pl.BlockSpec(pk["emb_pe"].shape, lambda i, s: (0, 0)),
                pl.BlockSpec(pk["wslab"].shape, lambda i, s: (0, 0, 0)),
                pl.BlockSpec(pk["vecs"].shape, lambda i, s: (0, 0)),
            ],
            out_specs=pl.BlockSpec((M, K2), lambda i, s: (0, 0)),
            scratch_shapes=[pltpu.VMEM((M, D), jnp.float32)],
        ),
        compiler_params=pltpu.CompilerParams(dimension_semantics=("arbitrary",)),
    )(src_flat, pk["emb_pe"], pk["wslab"], pk["vecs"])

    # rows are already (batch, seq) ordered
    return y.reshape(N, L, NUM_KEYPOINTS, 2)


# ---------------- pure-JAX reference (for sanity check) --------------------------------
def _ref_layer(x, p, nhead):
    L, N, D = x.shape
    dh = D // nhead

    def one(xb):  # (N, D)
        qkv = xb @ p["wqkv"].T + p["bqkv"]
        q, k, v = qkv[:, :D], qkv[:, D:2 * D], qkv[:, 2 * D:]
        outs = []
        for h in range(nhead):
            qh, kh, vh = (t[:, h * dh:(h + 1) * dh] for t in (q, k, v))
            s = qh @ kh.T / math.sqrt(dh)
            pmat = jax.nn.softmax(s, axis=-1)
            outs.append(pmat @ vh)
        attn = jnp.concatenate(outs, -1) @ p["wo"].T + p["bo"]
        y = _layer_norm(xb + attn, p["ln1w"], p["ln1b"])
        ff = jnp.maximum(y @ p["w1"].T + p["b1"], 0.0) @ p["w2"].T + p["b2"]
        return _layer_norm(y + ff, p["ln2w"], p["ln2b"])

    return jax.vmap(one)(x)


def pose_transformer_ref(src, params):
    N, L = src.shape
    D = D_MODEL
    h = params["emb"][src] * math.sqrt(D)
    h = h + params["pe"][:N][:, None, :]
    x = jnp.transpose(h, (1, 0, 2))
    for lp in params["layers"]:
        x = _ref_layer(x, lp, NHEAD)
    out = jnp.transpose(x, (1, 0, 2))
    y = out.reshape(N * L, D) @ params["fc_w"].T + params["fc_b"]
    return y.reshape(N, L, NUM_KEYPOINTS, 2)


# ---------------- parameter packing ------------------------------------------------------
def _pack_params(layers, fc_w, fc_b, emb, pe):
    D, FF, dh = D_MODEL, DIM_FF, D_MODEL // NHEAD
    K2 = NUM_KEYPOINTS * 2
    assert FF == 2 * D, "packed FFN layout assumes dim_feedforward == 2 * d_model"

    w_rows, v_rows = [], []
    for lp in layers:
        wq_t = lp["wqkv"][:D, :].T                       # (D, D) (in, out)
        wk_t = lp["wqkv"][D:2 * D, :].T
        wv_pt = lp["wqkv"][2 * D:, :]                    # (D, D) PyTorch (out, in)
        wo_t = lp["wo"].T                                # (D, D) (in, out)
        wvo = [wv_pt[h * dh:(h + 1) * dh, :].T @ wo_t[h * dh:(h + 1) * dh, :]
               for h in range(NHEAD)]                    # fold Wo into Wv per head
        w1_t = lp["w1"].T                                # (D, FF)
        w2_t = lp["w2"].T                                # (FF, D)
        w_rows += [wq_t, wk_t, *wvo,
                   w1_t[:, :D], w1_t[:, D:], w2_t[:D, :], w2_t[D:, :]]

        bq, bk, bv = lp["bqkv"][:D], lp["bqkv"][D:2 * D], lp["bqkv"][2 * D:]
        bo_folded = bv @ wo_t + lp["bo"]                 # fold v-bias through out-proj
        v_rows += [bq, bk, bo_folded, lp["ln1w"], lp["ln1b"], lp["ln2w"], lp["ln2b"],
                   lp["b2"], lp["b1"][:D], lp["b1"][D:]]

    fcw_pad = jnp.zeros((D, D), jnp.float32).at[:, :K2].set(fc_w.T)
    w_rows.append(fcw_pad)
    v_rows.append(jnp.zeros((D,), jnp.float32).at[:K2].set(fc_b))

    # embedding*sqrt(D) rows + PE rows in one slab (PE section sublane-aligned)
    vocab_pad = ((VOCAB_SIZE + 7) // 8) * 8
    M = BATCH * SEQ
    pe_rows = jnp.repeat(pe[:BATCH], SEQ, axis=0)        # row r = n*L + l -> pe[n]
    emb_pe = jnp.zeros((vocab_pad + M, D), jnp.float32)
    emb_pe = emb_pe.at[:VOCAB_SIZE].set(emb * math.sqrt(D))
    emb_pe = emb_pe.at[vocab_pad:].set(pe_rows)

    return dict(wslab=jnp.stack(w_rows),                 # (NL*10+1, D, D)
                vecs=jnp.stack(v_rows),                  # (NL*10+1, D)
                emb_pe=emb_pe)                           # (vocab_pad+M, D)


def make_params(key):
    D, FF = D_MODEL, DIM_FF
    ks = jax.random.split(key, 4 + NUM_LAYERS)

    # positional encoding table (max_len, d_model), identical to PyTorch formula
    position = jnp.arange(MAX_LEN, dtype=jnp.float32)[:, None]
    div_term = jnp.exp(jnp.arange(0, D, 2, dtype=jnp.float32) * (-math.log(10000.0) / D))
    pe = jnp.zeros((MAX_LEN, D), jnp.float32)
    pe = pe.at[:, 0::2].set(jnp.sin(position * div_term))
    pe = pe.at[:, 1::2].set(jnp.cos(position * div_term))

    def w(k, shape, scale=0.05):
        return scale * jax.random.normal(k, shape, jnp.float32)

    layers = []
    for i in range(NUM_LAYERS):
        lk = jax.random.split(ks[4 + i], 8)
        layers.append(dict(
            wqkv=w(lk[0], (3 * D, D)), bqkv=w(lk[1], (3 * D,), 0.01),
            wo=w(lk[2], (D, D)), bo=w(lk[3], (D,), 0.01),
            ln1w=jnp.ones((D,), jnp.float32), ln1b=jnp.zeros((D,), jnp.float32),
            ln2w=jnp.ones((D,), jnp.float32), ln2b=jnp.zeros((D,), jnp.float32),
            w1=w(lk[4], (FF, D)), b1=w(lk[5], (FF,), 0.01),
            w2=w(lk[6], (D, FF)), b2=w(lk[7], (D,), 0.01),
        ))

    emb = jax.random.normal(ks[0], (VOCAB_SIZE, D), jnp.float32)
    fc_w = w(ks[1], (NUM_KEYPOINTS * 2, D))
    fc_b = w(ks[2], (NUM_KEYPOINTS * 2,), 0.01)

    return dict(
        emb=emb, pe=pe, layers=layers, fc_w=fc_w, fc_b=fc_b,
        packed=_pack_params(layers, fc_w, fc_b, emb, pe),
    )


# ---------------- main -------------------------------------------------------------------
if __name__ == "__main__":
    key = jax.random.PRNGKey(0)
    pkey, skey = jax.random.split(key)
    params = make_params(pkey)
    src = jax.random.randint(skey, (BATCH, SEQ), 0, VOCAB_SIZE, dtype=jnp.int32)

    out = jax.jit(pose_transformer_forward)(src, params)
    out = jax.block_until_ready(out)

    assert out.shape == (BATCH, SEQ, NUM_KEYPOINTS, 2), out.shape
    assert bool(jnp.all(jnp.isfinite(out)))

    ref = jax.block_until_ready(pose_transformer_ref(src, params))
    assert jnp.allclose(out, ref, rtol=1e-2, atol=1e-2), float(jnp.max(jnp.abs(out - ref)))

    print("KERNEL_OK")
</pallas_src>

<mosaic_0001>
module attributes {stable_mosaic.version = 11 : i64} {
  func.func @fused_forward_kernel(%arg0: i32, %arg1: memref<16xi32, #tpu.memory_space<smem>>, %arg2: memref<72x32xf32, #tpu.memory_space<vmem>>, %arg3: memref<21x32x32xf32, #tpu.memory_space<vmem>>, %arg4: memref<21x32xf32, #tpu.memory_space<vmem>>, %arg5: memref<16x16xf32, #tpu.memory_space<vmem>>, %arg6: memref<16x32xf32, #tpu.memory_space<vmem>>) attributes {dimension_semantics = [#tpu.dimension_semantics<arbitrary>], iteration_bounds = array<i64: 1>, scalar_prefetch = 1 : i64, scratch_operands = 1 : i64, tpu.core_type = #tpu.core_type<tc>, window_params = [{pipeline_mode = #tpu.pipeline_mode<synchronous>, transform_indices = @transform_0, window_bounds = array<i64: 72, 32>}, {pipeline_mode = #tpu.pipeline_mode<synchronous>, transform_indices = @transform_1, window_bounds = array<i64: 21, 32, 32>}, {pipeline_mode = #tpu.pipeline_mode<synchronous>, transform_indices = @transform_2, window_bounds = array<i64: 21, 32>}, {pipeline_mode = #tpu.pipeline_mode<synchronous>, transform_indices = @transform_3, window_bounds = array<i64: 16, 16>}]} {
    %c0 = arith.constant 0 : index
    %0 = memref.load %arg1[%c0] : memref<16xi32, #tpu.memory_space<smem>>
    %1 = arith.index_cast %0 : i32 to index
    %c0_0 = arith.constant 0 : index
    %2 = vector.load %arg2[%1, %c0_0] : memref<72x32xf32, #tpu.memory_space<vmem>>, vector<1x32xf32>
    %c0_1 = arith.constant 0 : index
    %c0_2 = arith.constant 0 : index
    %3 = vector.load %arg6[%c0_1, %c0_2] : memref<16x32xf32, #tpu.memory_space<vmem>>, vector<1x32xf32>
    tpu.vector_store %arg6[%c0_1, %c0_2], %2 {strides = array<i32>} : memref<16x32xf32, #tpu.memory_space<vmem>>, vector<1x32xf32>,
    %c1 = arith.constant 1 : index
    %4 = memref.load %arg1[%c1] : memref<16xi32, #tpu.memory_space<smem>>
    %5 = arith.index_cast %4 : i32 to index
    %c0_3 = arith.constant 0 : index
    %6 = vector.load %arg2[%5, %c0_3] : memref<72x32xf32, #tpu.memory_space<vmem>>, vector<1x32xf32>
    %c1_4 = arith.constant 1 : index
    %c0_5 = arith.constant 0 : index
    %7 = vector.load %arg6[%c1_4, %c0_5] : memref<16x32xf32, #tpu.memory_space<vmem>>, vector<1x32xf32>
    tpu.vector_store %arg6[%c1_4, %c0_5], %6 {strides = array<i32>} : memref<16x32xf32, #tpu.memory_space<vmem>>, vector<1x32xf32>,
    %c2 = arith.constant 2 : index
    %8 = memref.load %arg1[%c2] : memref<16xi32, #tpu.memory_space<smem>>
    %9 = arith.index_cast %8 : i32 to index
    %c0_6 = arith.constant 0 : index
    %10 = vector.load %arg2[%9, %c0_6] : memref<72x32xf32, #tpu.memory_space<vmem>>, vector<1x32xf32>
    %c2_7 = arith.constant 2 : index
    %c0_8 = arith.constant 0 : index
    %11 = vector.load %arg6[%c2_7, %c0_8] : memref<16x32xf32, #tpu.memory_space<vmem>>, vector<1x32xf32>
    tpu.vector_store %arg6[%c2_7, %c0_8], %10 {strides = array<i32>} : memref<16x32xf32, #tpu.memory_space<vmem>>, vector<1x32xf32>,
    %c3 = arith.constant 3 : index
    %12 = memref.load %arg1[%c3] : memref<16xi32, #tpu.memory_space<smem>>
    %13 = arith.index_cast %12 : i32 to index
    %c0_9 = arith.constant 0 : index
    %14 = vector.load %arg2[%13, %c0_9] : memref<72x32xf32, #tpu.memory_space<vmem>>, vector<1x32xf32>
    %c3_10 = arith.constant 3 : index
    %c0_11 = arith.constant 0 : index
    %15 = vector.load %arg6[%c3_10, %c0_11] : memref<16x32xf32, #tpu.memory_space<vmem>>, vector<1x32xf32>
    tpu.vector_store %arg6[%c3_10, %c0_11], %14 {strides = array<i32>} : memref<16x32xf32, #tpu.memory_space<vmem>>, vector<1x32xf32>,
    %c4 = arith.constant 4 : index
    %16 = memref.load %arg1[%c4] : memref<16xi32, #tpu.memory_space<smem>>
    %17 = arith.index_cast %16 : i32 to index
    %c0_12 = arith.constant 0 : index
    %18 = vector.load %arg2[%17, %c0_12] : memref<72x32xf32, #tpu.memory_space<vmem>>, vector<1x32xf32>
    %c4_13 = arith.constant 4 : index
    %c0_14 = arith.constant 0 : index
    %19 = vector.load %arg6[%c4_13, %c0_14] : memref<16x32xf32, #tpu.memory_space<vmem>>, vector<1x32xf32>
    tpu.vector_store %arg6[%c4_13, %c0_14], %18 {strides = array<i32>} : memref<16x32xf32, #tpu.memory_space<vmem>>, vector<1x32xf32>,
    %c5 = arith.constant 5 : index
    %20 = memref.load %arg1[%c5] : memref<16xi32, #tpu.memory_space<smem>>
    %21 = arith.index_cast %20 : i32 to index
    %c0_15 = arith.constant 0 : index
    %22 = vector.load %arg2[%21, %c0_15] : memref<72x32xf32, #tpu.memory_space<vmem>>, vector<1x32xf32>
    %c5_16 = arith.constant 5 : index
    %c0_17 = arith.constant 0 : index
    %23 = vector.load %arg6[%c5_16, %c0_17] : memref<16x32xf32, #tpu.memory_space<vmem>>, vector<1x32xf32>
    tpu.vector_store %arg6[%c5_16, %c0_17], %22 {strides = array<i32>} : memref<16x32xf32, #tpu.memory_space<vmem>>, vector<1x32xf32>,
    %c6 = arith.constant 6 : index
    %24 = memref.load %arg1[%c6] : memref<16xi32, #tpu.memory_space<smem>>
    %25 = arith.index_cast %24 : i32 to index
    %c0_18 = arith.constant 0 : index
    %26 = vector.load %arg2[%25, %c0_18] : memref<72x32xf32, #tpu.memory_space<vmem>>, vector<1x32xf32>
    %c6_19 = arith.constant 6 : index
    %c0_20 = arith.constant 0 : index
    %27 = vector.load %arg6[%c6_19, %c0_20] : memref<16x32xf32, #tpu.memory_space<vmem>>, vector<1x32xf32>
    tpu.vector_store %arg6[%c6_19, %c0_20], %26 {strides = array<i32>} : memref<16x32xf32, #tpu.memory_space<vmem>>, vector<1x32xf32>,
    %c7 = arith.constant 7 : index
    %28 = memref.load %arg1[%c7] : memref<16xi32, #tpu.memory_space<smem>>
    %29 = arith.index_cast %28 : i32 to index
    %c0_21 = arith.constant 0 : index
    %30 = vector.load %arg2[%29, %c0_21] : memref<72x32xf32, #tpu.memory_space<vmem>>, vector<1x32xf32>
    %c7_22 = arith.constant 7 : index
    %c0_23 = arith.constant 0 : index
    %31 = vector.load %arg6[%c7_22, %c0_23] : memref<16x32xf32, #tpu.memory_space<vmem>>, vector<1x32xf32>
    tpu.vector_store %arg6[%c7_22, %c0_23], %30 {strides = array<i32>} : memref<16x32xf32, #tpu.memory_space<vmem>>, vector<1x32xf32>,
    %c8 = arith.constant 8 : index
    %32 = memref.load %arg1[%c8] : memref<16xi32, #tpu.memory_space<smem>>
    %33 = arith.index_cast %32 : i32 to index
    %c0_24 = arith.constant 0 : index
    %34 = vector.load %arg2[%33, %c0_24] : memref<72x32xf32, #tpu.memory_space<vmem>>, vector<1x32xf32>
    %c8_25 = arith.constant 8 : index
    %c0_26 = arith.constant 0 : index
    %35 = vector.load %arg6[%c8_25, %c0_26] : memref<16x32xf32, #tpu.memory_space<vmem>>, vector<1x32xf32>
    tpu.vector_store %arg6[%c8_25, %c0_26], %34 {strides = array<i32>} : memref<16x32xf32, #tpu.memory_space<vmem>>, vector<1x32xf32>,
    %c9 = arith.constant 9 : index
    %36 = memref.load %arg1[%c9] : memref<16xi32, #tpu.memory_space<smem>>
    %37 = arith.index_cast %36 : i32 to index
    %c0_27 = arith.constant 0 : index
    %38 = vector.load %arg2[%37, %c0_27] : memref<72x32xf32, #tpu.memory_space<vmem>>, vector<1x32xf32>
    %c9_28 = arith.constant 9 : index
    %c0_29 = arith.constant 0 : index
    %39 = vector.load %arg6[%c9_28, %c0_29] : memref<16x32xf32, #tpu.memory_space<vmem>>, vector<1x32xf32>
    tpu.vector_store %arg6[%c9_28, %c0_29], %38 {strides = array<i32>} : memref<16x32xf32, #tpu.memory_space<vmem>>, vector<1x32xf32>,
    %c10 = arith.constant 10 : index
    %40 = memref.load %arg1[%c10] : memref<16xi32, #tpu.memory_space<smem>>
    %41 = arith.index_cast %40 : i32 to index
    %c0_30 = arith.constant 0 : index
    %42 = vector.load %arg2[%41, %c0_30] : memref<72x32xf32, #tpu.memory_space<vmem>>, vector<1x32xf32>
    %c10_31 = arith.constant 10 : index
    %c0_32 = arith.constant 0 : index
    %43 = vector.load %arg6[%c10_31, %c0_32] : memref<16x32xf32, #tpu.memory_space<vmem>>, vector<1x32xf32>
    tpu.vector_store %arg6[%c10_31, %c0_32], %42 {strides = array<i32>} : memref<16x32xf32, #tpu.memory_space<vmem>>, vector<1x32xf32>,
    %c11 = arith.constant 11 : index
    %44 = memref.load %arg1[%c11] : memref<16xi32, #tpu.memory_space<smem>>
    %45 = arith.index_cast %44 : i32 to index
    %c0_33 = arith.constant 0 : index
    %46 = vector.load %arg2[%45, %c0_33] : memref<72x32xf32, #tpu.memory_space<vmem>>, vector<1x32xf32>
    %c11_34 = arith.constant 11 : index
    %c0_35 = arith.constant 0 : index
    %47 = vector.load %arg6[%c11_34, %c0_35] : memref<16x32xf32, #tpu.memory_space<vmem>>, vector<1x32xf32>
    tpu.vector_store %arg6[%c11_34, %c0_35], %46 {strides = array<i32>} : memref<16x32xf32, #tpu.memory_space<vmem>>, vector<1x32xf32>,
    %c12 = arith.constant 12 : index
    %48 = memref.load %arg1[%c12] : memref<16xi32, #tpu.memory_space<smem>>
    %49 = arith.index_cast %48 : i32 to index
    %c0_36 = arith.constant 0 : index
    %50 = vector.load %arg2[%49, %c0_36] : memref<72x32xf32, #tpu.memory_space<vmem>>, vector<1x32xf32>
    %c12_37 = arith.constant 12 : index
    %c0_38 = arith.constant 0 : index
    %51 = vector.load %arg6[%c12_37, %c0_38] : memref<16x32xf32, #tpu.memory_space<vmem>>, vector<1x32xf32>
    tpu.vector_store %arg6[%c12_37, %c0_38], %50 {strides = array<i32>} : memref<16x32xf32, #tpu.memory_space<vmem>>, vector<1x32xf32>,
    %c13 = arith.constant 13 : index
    %52 = memref.load %arg1[%c13] : memref<16xi32, #tpu.memory_space<smem>>
    %53 = arith.index_cast %52 : i32 to index
    %c0_39 = arith.constant 0 : index
    %54 = vector.load %arg2[%53, %c0_39] : memref<72x32xf32, #tpu.memory_space<vmem>>, vector<1x32xf32>
    %c13_40 = arith.constant 13 : index
    %c0_41 = arith.constant 0 : index
    %55 = vector.load %arg6[%c13_40, %c0_41] : memref<16x32xf32, #tpu.memory_space<vmem>>, vector<1x32xf32>
    tpu.vector_store %arg6[%c13_40, %c0_41], %54 {strides = array<i32>} : memref<16x32xf32, #tpu.memory_space<vmem>>, vector<1x32xf32>,
    %c14 = arith.constant 14 : index
    %56 = memref.load %arg1[%c14] : memref<16xi32, #tpu.memory_space<smem>>
    %57 = arith.index_cast %56 : i32 to index
    %c0_42 = arith.constant 0 : index
    %58 = vector.load %arg2[%57, %c0_42] : memref<72x32xf32, #tpu.memory_space<vmem>>, vector<1x32xf32>
    %c14_43 = arith.constant 14 : index
    %c0_44 = arith.constant 0 : index
    %59 = vector.load %arg6[%c14_43, %c0_44] : memref<16x32xf32, #tpu.memory_space<vmem>>, vector<1x32xf32>
    tpu.vector_store %arg6[%c14_43, %c0_44], %58 {strides = array<i32>} : memref<16x32xf32, #tpu.memory_space<vmem>>, vector<1x32xf32>,
    %c15 = arith.constant 15 : index
    %60 = memref.load %arg1[%c15] : memref<16xi32, #tpu.memory_space<smem>>
    %61 = arith.index_cast %60 : i32 to index
    %c0_45 = arith.constant 0 : index
    %62 = vector.load %arg2[%61, %c0_45] : memref<72x32xf32, #tpu.memory_space<vmem>>, vector<1x32xf32>
    %c15_46 = arith.constant 15 : index
    %c0_47 = arith.constant 0 : index
    %63 = vector.load %arg6[%c15_46, %c0_47] : memref<16x32xf32, #tpu.memory_space<vmem>>, vector<1x32xf32>
    tpu.vector_store %arg6[%c15_46, %c0_47], %62 {strides = array<i32>} : memref<16x32xf32, #tpu.memory_space<vmem>>, vector<1x32xf32>,
    %c0_48 = arith.constant 0 : index
    %c0_49 = arith.constant 0 : index
    %64 = vector.load %arg6[%c0_48, %c0_49] : memref<16x32xf32, #tpu.memory_space<vmem>>, vector<16x32xf32>
    %c56 = arith.constant 56 : index
    %c0_50 = arith.constant 0 : index
    %65 = vector.load %arg2[%c56, %c0_50] : memref<72x32xf32, #tpu.memory_space<vmem>>, vector<16x32xf32>
    %66 = arith.addf %64, %65 : vector<16x32xf32>
    %67 = tpu.iota {dimensions = array<i32: 0>} : vector<16x16xi32>
    %68 = tpu.iota {dimensions = array<i32: 1>} : vector<16x16xi32>
    %c8_i32 = arith.constant 8 : i32
    %c0_i32 = arith.constant 0 : i32
    %69 = arith.cmpi eq, %c8_i32, %c0_i32 : i32
    %c1_i32 = arith.constant 1 : i32
    %70 = arith.select %69, %c1_i32, %c8_i32 : i32
    %71 = vector.broadcast %70 : i32 to vector<16x16xi32>
    %72 = arith.remsi %67, %71 : vector<16x16xi32>
    %c0_i32_51 = arith.constant 0 : i32
    %73 = vector.broadcast %c0_i32_51 : i32 to vector<16x16xi32>
    %74 = arith.cmpi ne, %72, %73 : vector<16x16xi32>
    %c0_i32_52 = arith.constant 0 : i32
    %75 = vector.broadcast %c0_i32_52 : i32 to vector<16x16xi32>
    %76 = arith.cmpi slt, %72, %75 : vector<16x16xi32>
    %c0_i32_53 = arith.constant 0 : i32
    %77 = arith.cmpi slt, %70, %c0_i32_53 : i32
    %78 = vector.broadcast %77 : i1 to vector<16x16xi1>
    %79 = vector.broadcast %78 : vector<16x16xi1> to vector<16x16xi1>
    %80 = arith.xori %76, %79 : vector<16x16xi1>
    %81 = arith.andi %80, %74 : vector<16x16xi1>
    %82 = vector.broadcast %70 : i32 to vector<16x16xi32>
    %83 = arith.addi %72, %82 : vector<16x16xi32>
    %84 = arith.select %81, %83, %72 : vector<16x16xi1>, vector<16x16xi32>
    %c8_i32_54 = arith.constant 8 : i32
    %c0_i32_55 = arith.constant 0 : i32
    %85 = arith.cmpi eq, %c8_i32_54, %c0_i32_55 : i32
    %c1_i32_56 = arith.constant 1 : i32
    %86 = arith.select %85, %c1_i32_56, %c8_i32_54 : i32
    %87 = vector.broadcast %86 : i32 to vector<16x16xi32>
    %88 = arith.remsi %68, %87 : vector<16x16xi32>
    %c0_i32_57 = arith.constant 0 : i32
    %89 = vector.broadcast %c0_i32_57 : i32 to vector<16x16xi32>
    %90 = arith.cmpi ne, %88, %89 : vector<16x16xi32>
    %c0_i32_58 = arith.constant 0 : i32
    %91 = vector.broadcast %c0_i32_58 : i32 to vector<16x16xi32>
    %92 = arith.cmpi slt, %88, %91 : vector<16x16xi32>
    %c0_i32_59 = arith.constant 0 : i32
    %93 = arith.cmpi slt, %86, %c0_i32_59 : i32
    %94 = vector.broadcast %93 : i1 to vector<16x16xi1>
    %95 = vector.broadcast %94 : vector<16x16xi1> to vector<16x16xi1>
    %96 = arith.xori %92, %95 : vector<16x16xi1>
    %97 = arith.andi %96, %90 : vector<16x16xi1>
    %98 = vector.broadcast %86 : i32 to vector<16x16xi32>
    %99 = arith.addi %88, %98 : vector<16x16xi32>
    %100 = arith.select %97, %99, %88 : vector<16x16xi1>, vector<16x16xi32>
    %101 = arith.cmpi eq, %84, %100 : vector<16x16xi32>
    %cst = arith.constant 0.000000e+00 : f32
    %cst_60 = arith.constant -1.000000e+09 : f32
    %102 = vector.broadcast %cst : f32 to vector<16x16xf32>
    %103 = vector.broadcast %cst_60 : f32 to vector<16x16xf32>
    %104 = arith.select %101, %102, %103 : vector<16x16xi1>, vector<16x16xf32>
    %105 = tpu.iota {dimensions = array<i32: 1>} : vector<1x32xi32>
    %c0_i32_61 = arith.constant 0 : i32
    %106 = vector.broadcast %c0_i32_61 : i32 to vector<1x32xi32>
    %107 = arith.cmpi sge, %105, %106 : vector<1x32xi32>
    %c8_i32_62 = arith.constant 8 : i32
    %108 = vector.broadcast %c8_i32_62 : i32 to vector<1x32xi32>
    %109 = arith.cmpi slt, %105, %108 : vector<1x32xi32>
    %110 = arith.andi %107, %109 : vector<1x32xi1>
    %111 = arith.extui %110 : vector<1x32xi1> to vector<1x32xi32>
    %112 = arith.sitofp %111 : vector<1x32xi32> to vector<1x32xf32>
    %c8_i32_63 = arith.constant 8 : i32
    %113 = vector.broadcast %c8_i32_63 : i32 to vector<1x32xi32>
    %114 = arith.cmpi sge, %105, %113 : vector<1x32xi32>
    %c16_i32 = arith.constant 16 : i32
    %115 = vector.broadcast %c16_i32 : i32 to vector<1x32xi32>
    %116 = arith.cmpi slt, %105, %115 : vector<1x32xi32>
    %117 = arith.andi %114, %116 : vector<1x32xi1>
    %118 = arith.extui %117 : vector<1x32xi1> to vector<1x32xi32>
    %119 = arith.sitofp %118 : vector<1x32xi32> to vector<1x32xf32>
    %c16_i32_64 = arith.constant 16 : i32
    %120 = vector.broadcast %c16_i32_64 : i32 to vector<1x32xi32>
    %121 = arith.cmpi sge, %105, %120 : vector<1x32xi32>
    %c24_i32 = arith.constant 24 : i32
    %122 = vector.broadcast %c24_i32 : i32 to vector<1x32xi32>
    %123 = arith.cmpi slt, %105, %122 : vector<1x32xi32>
    %124 = arith.andi %121, %123 : vector<1x32xi1>
    %125 = arith.extui %124 : vector<1x32xi1> to vector<1x32xi32>
    %126 = arith.sitofp %125 : vector<1x32xi32> to vector<1x32xf32>
    %c24_i32_65 = arith.constant 24 : i32
    %127 = vector.broadcast %c24_i32_65 : i32 to vector<1x32xi32>
    %128 = arith.cmpi sge, %105, %127 : vector<1x32xi32>
    %c32_i32 = arith.constant 32 : i32
    %129 = vector.broadcast %c32_i32 : i32 to vector<1x32xi32>
    %130 = arith.cmpi slt, %105, %129 : vector<1x32xi32>
    %131 = arith.andi %128, %130 : vector<1x32xi1>
    %132 = arith.extui %131 : vector<1x32xi1> to vector<1x32xi32>
    %133 = arith.sitofp %132 : vector<1x32xi32> to vector<1x32xf32>
    %c0_66 = arith.constant 0 : index
    %c0_67 = arith.constant 0 : index
    %134 = vector.load %arg4[%c0_66, %c0_67] : memref<21x32xf32, #tpu.memory_space<vmem>>, vector<1x32xf32>
    %c1_68 = arith.constant 1 : index
    %c0_69 = arith.constant 0 : index
    %135 = vector.load %arg4[%c1_68, %c0_69] : memref<21x32xf32, #tpu.memory_space<vmem>>, vector<1x32xf32>
    %c2_70 = arith.constant 2 : index
    %c0_71 = arith.constant 0 : index
    %136 = vector.load %arg4[%c2_70, %c0_71] : memref<21x32xf32, #tpu.memory_space<vmem>>, vector<1x32xf32>
    %c3_72 = arith.constant 3 : index
    %c0_73 = arith.constant 0 : index
    %137 = vector.load %arg4[%c3_72, %c0_73] : memref<21x32xf32, #tpu.memory_space<vmem>>, vector<1x32xf32>
    %c4_74 = arith.constant 4 : index
    %c0_75 = arith.constant 0 : index
    %138 = vector.load %arg4[%c4_74, %c0_75] : memref<21x32xf32, #tpu.memory_space<vmem>>, vector<1x32xf32>
    %c5_76 = arith.constant 5 : index
    %c0_77 = arith.constant 0 : index
    %139 = vector.load %arg4[%c5_76, %c0_77] : memref<21x32xf32, #tpu.memory_space<vmem>>, vector<1x32xf32>
    %c6_78 = arith.constant 6 : index
    %c0_79 = arith.constant 0 : index
    %140 = vector.load %arg4[%c6_78, %c0_79] : memref<21x32xf32, #tpu.memory_space<vmem>>, vector<1x32xf32>
    %c7_80 = arith.constant 7 : index
    %c0_81 = arith.constant 0 : index
    %141 = vector.load %arg4[%c7_80, %c0_81] : memref<21x32xf32, #tpu.memory_space<vmem>>, vector<1x32xf32>
    %c8_82 = arith.constant 8 : index
    %c0_83 = arith.constant 0 : index
    %142 = vector.load %arg4[%c8_82, %c0_83] : memref<21x32xf32, #tpu.memory_space<vmem>>, vector<1x32xf32>
    %c9_84 = arith.constant 9 : index
    %c0_85 = arith.constant 0 : index
    %143 = vector.load %arg4[%c9_84, %c0_85] : memref<21x32xf32, #tpu.memory_space<vmem>>, vector<1x32xf32>
    %c0_86 = arith.constant 0 : index
    %c0_87 = arith.constant 0 : index
    %c0_88 = arith.constant 0 : index
    %144 = vector.load %arg3[%c0_86, %c0_87, %c0_88] : memref<21x32x32xf32, #tpu.memory_space<vmem>>, vector<1x32x32xf32>
    %145 = vector.shape_cast %144 : vector<1x32x32xf32> to vector<32x32xf32>
    %cst_89 = arith.constant dense<0.000000e+00> : vector<16x32xf32>
    %146 = tpu.matmul %66, %145, %cst_89 {dimension_numbers = #tpu.dot_dimension_numbers<[1], [0], [0], [1], [0, 0, 1, 1], [], []>} : vector<16x32xf32>, vector<32x32xf32>, vector<16x32xf32> -> vector<16x32xf32>
    %147 = vector.broadcast %134 : vector<1x32xf32> to vector<16x32xf32>
    %148 = arith.addf %146, %147 : vector<16x32xf32>
    %c1_90 = arith.constant 1 : index
    %c0_91 = arith.constant 0 : index
    %c0_92 = arith.constant 0 : index
    %149 = vector.load %arg3[%c1_90, %c0_91, %c0_92] : memref<21x32x32xf32, #tpu.memory_space<vmem>>, vector<1x32x32xf32>
    %150 = vector.shape_cast %149 : vector<1x32x32xf32> to vector<32x32xf32>
    %cst_93 = arith.constant dense<0.000000e+00> : vector<16x32xf32>
    %151 = tpu.matmul %66, %150, %cst_93 {dimension_numbers = #tpu.dot_dimension_numbers<[1], [0], [0], [1], [0, 0, 1, 1], [], []>} : vector<16x32xf32>, vector<32x32xf32>, vector<16x32xf32> -> vector<16x32xf32>
    %152 = vector.broadcast %135 : vector<1x32xf32> to vector<16x32xf32>
    %153 = arith.addf %151, %152 : vector<16x32xf32>
    %154 = vector.broadcast %112 : vector<1x32xf32> to vector<16x32xf32>
    %155 = arith.mulf %148, %154 : vector<16x32xf32>
    %cst_94 = arith.constant dense<0.000000e+00> : vector<16x16xf32>
    %156 = tpu.matmul %155, %153, %cst_94 {dimension_numbers = #tpu.dot_dimension_numbers<[1], [1], [0], [0], [0, 0, 1, 0], [], []>} : vector<16x32xf32>, vector<16x32xf32>, vector<16x16xf32> -> vector<16x16xf32>
    %cst_95 = arith.constant 0.353553385 : f32
    %157 = vector.broadcast %cst_95 : f32 to vector<16x16xf32>
    %158 = arith.mulf %156, %157 : vector<16x16xf32>
    %159 = arith.addf %158, %104 : vector<16x16xf32>
    %160 = math.exp %159 : vector<16x16xf32>
    %cst_96 = arith.constant dense<0.000000e+00> : vector<16xf32>
    %161 = vector.multi_reduction <add>, %160, %cst_96 [1] : vector<16x16xf32> to vector<16xf32>
    %162 = vector.shape_cast %161 : vector<16xf32> to vector<16x1xf32>
    %163 = tpu.reciprocal %162 {approx = true} : vector<16x1xf32> -> vector<16x1xf32>
    %164 = vector.broadcast %163 : vector<16x1xf32> to vector<16x16xf32>
    %165 = arith.mulf %160, %164 : vector<16x16xf32>
    %c2_97 = arith.constant 2 : index
    %c0_98 = arith.constant 0 : index
    %c0_99 = arith.constant 0 : index
    %166 = vector.load %arg3[%c2_97, %c0_98, %c0_99] : memref<21x32x32xf32, #tpu.memory_space<vmem>>, vector<1x32x32xf32>
    %167 = vector.shape_cast %166 : vector<1x32x32xf32> to vector<32x32xf32>
    %cst_100 = arith.constant dense<0.000000e+00> : vector<16x32xf32>
    %168 = tpu.matmul %66, %167, %cst_100 {dimension_numbers = #tpu.dot_dimension_numbers<[1], [0], [0], [1], [0, 0, 1, 1], [], []>} : vector<16x32xf32>, vector<32x32xf32>, vector<16x32xf32> -> vector<16x32xf32>
    %cst_101 = arith.constant dense<0.000000e+00> : vector<16x32xf32>
    %169 = tpu.matmul %165, %168, %cst_101 {dimension_numbers = #tpu.dot_dimension_numbers<[1], [0], [0], [1], [0, 0, 1, 1], [], []>} : vector<16x16xf32>, vector<16x32xf32>, vector<16x32xf32> -> vector<16x32xf32>
    %170 = vector.broadcast %119 : vector<1x32xf32> to vector<16x32xf32>
    %171 = arith.mulf %148, %170 : vector<16x32xf32>
    %cst_102 = arith.constant dense<0.000000e+00> : vector<16x16xf32>
    %172 = tpu.matmul %171, %153, %cst_102 {dimension_numbers = #tpu.dot_dimension_numbers<[1], [1], [0], [0], [0, 0, 1, 0], [], []>} : vector<16x32xf32>, vector<16x32xf32>, vector<16x16xf32> -> vector<16x16xf32>
    %cst_103 = arith.constant 0.353553385 : f32
    %173 = vector.broadcast %cst_103 : f32 to vector<16x16xf32>
    %174 = arith.mulf %172, %173 : vector<16x16xf32>
    %175 = arith.addf %174, %104 : vector<16x16xf32>
    %176 = math.exp %175 : vector<16x16xf32>
    %cst_104 = arith.constant dense<0.000000e+00> : vector<16xf32>
    %177 = vector.multi_reduction <add>, %176, %cst_104 [1] : vector<16x16xf32> to vector<16xf32>
    %178 = vector.shape_cast %177 : vector<16xf32> to vector<16x1xf32>
    %179 = tpu.reciprocal %178 {approx = true} : vector<16x1xf32> -> vector<16x1xf32>
    %180 = vector.broadcast %179 : vector<16x1xf32> to vector<16x16xf32>
    %181 = arith.mulf %176, %180 : vector<16x16xf32>
    %c3_105 = arith.constant 3 : index
    %c0_106 = arith.constant 0 : index
    %c0_107 = arith.constant 0 : index
    %182 = vector.load %arg3[%c3_105, %c0_106, %c0_107] : memref<21x32x32xf32, #tpu.memory_space<vmem>>, vector<1x32x32xf32>
    %183 = vector.shape_cast %182 : vector<1x32x32xf32> to vector<32x32xf32>
    %cst_108 = arith.constant dense<0.000000e+00> : vector<16x32xf32>
    %184 = tpu.matmul %66, %183, %cst_108 {dimension_numbers = #tpu.dot_dimension_numbers<[1], [0], [0], [1], [0, 0, 1, 1], [], []>} : vector<16x32xf32>, vector<32x32xf32>, vector<16x32xf32> -> vector<16x32xf32>
    %cst_109 = arith.constant dense<0.000000e+00> : vector<16x32xf32>
    %185 = tpu.matmul %181, %184, %cst_109 {dimension_numbers = #tpu.dot_dimension_numbers<[1], [0], [0], [1], [0, 0, 1, 1], [], []>} : vector<16x16xf32>, vector<16x32xf32>, vector<16x32xf32> -> vector<16x32xf32>
    %186 = arith.addf %169, %185 : vector<16x32xf32>
    %187 = vector.broadcast %126 : vector<1x32xf32> to vector<16x32xf32>
    %188 = arith.mulf %148, %187 : vector<16x32xf32>
    %cst_110 = arith.constant dense<0.000000e+00> : vector<16x16xf32>
    %189 = tpu.matmul %188, %153, %cst_110 {dimension_numbers = #tpu.dot_dimension_numbers<[1], [1], [0], [0], [0, 0, 1, 0], [], []>} : vector<16x32xf32>, vector<16x32xf32>, vector<16x16xf32> -> vector<16x16xf32>
    %cst_111 = arith.constant 0.353553385 : f32
    %190 = vector.broadcast %cst_111 : f32 to vector<16x16xf32>
    %191 = arith.mulf %189, %190 : vector<16x16xf32>
    %192 = arith.addf %191, %104 : vector<16x16xf32>
    %193 = math.exp %192 : vector<16x16xf32>
    %cst_112 = arith.constant dense<0.000000e+00> : vector<16xf32>
    %194 = vector.multi_reduction <add>, %193, %cst_112 [1] : vector<16x16xf32> to vector<16xf32>
    %195 = vector.shape_cast %194 : vector<16xf32> to vector<16x1xf32>
    %196 = tpu.reciprocal %195 {approx = true} : vector<16x1xf32> -> vector<16x1xf32>
    %197 = vector.broadcast %196 : vector<16x1xf32> to vector<16x16xf32>
    %198 = arith.mulf %193, %197 : vector<16x16xf32>
    %c4_113 = arith.constant 4 : index
    %c0_114 = arith.constant 0 : index
    %c0_115 = arith.constant 0 : index
    %199 = vector.load %arg3[%c4_113, %c0_114, %c0_115] : memref<21x32x32xf32, #tpu.memory_space<vmem>>, vector<1x32x32xf32>
    %200 = vector.shape_cast %199 : vector<1x32x32xf32> to vector<32x32xf32>
    %cst_116 = arith.constant dense<0.000000e+00> : vector<16x32xf32>
    %201 = tpu.matmul %66, %200, %cst_116 {dimension_numbers = #tpu.dot_dimension_numbers<[1], [0], [0], [1], [0, 0, 1, 1], [], []>} : vector<16x32xf32>, vector<32x32xf32>, vector<16x32xf32> -> vector<16x32xf32>
    %cst_117 = arith.constant dense<0.000000e+00> : vector<16x32xf32>
    %202 = tpu.matmul %198, %201, %cst_117 {dimension_numbers = #tpu.dot_dimension_numbers<[1], [0], [0], [1], [0, 0, 1, 1], [], []>} : vector<16x16xf32>, vector<16x32xf32>, vector<16x32xf32> -> vector<16x32xf32>
    %203 = arith.addf %186, %202 : vector<16x32xf32>
    %204 = vector.broadcast %133 : vector<1x32xf32> to vector<16x32xf32>
    %205 = arith.mulf %148, %204 : vector<16x32xf32>
    %cst_118 = arith.constant dense<0.000000e+00> : vector<16x16xf32>
    %206 = tpu.matmul %205, %153, %cst_118 {dimension_numbers = #tpu.dot_dimension_numbers<[1], [1], [0], [0], [0, 0, 1, 0], [], []>} : vector<16x32xf32>, vector<16x32xf32>, vector<16x16xf32> -> vector<16x16xf32>
    %cst_119 = arith.constant 0.353553385 : f32
    %207 = vector.broadcast %cst_119 : f32 to vector<16x16xf32>
    %208 = arith.mulf %206, %207 : vector<16x16xf32>
    %209 = arith.addf %208, %104 : vector<16x16xf32>
    %210 = math.exp %209 : vector<16x16xf32>
    %cst_120 = arith.constant dense<0.000000e+00> : vector<16xf32>
    %211 = vector.multi_reduction <add>, %210, %cst_120 [1] : vector<16x16xf32> to vector<16xf32>
    %212 = vector.shape_cast %211 : vector<16xf32> to vector<16x1xf32>
    %213 = tpu.reciprocal %212 {approx = true} : vector<16x1xf32> -> vector<16x1xf32>
    %214 = vector.broadcast %213 : vector<16x1xf32> to vector<16x16xf32>
    %215 = arith.mulf %210, %214 : vector<16x16xf32>
    %c5_121 = arith.constant 5 : index
    %c0_122 = arith.constant 0 : index
    %c0_123 = arith.constant 0 : index
    %216 = vector.load %arg3[%c5_121, %c0_122, %c0_123] : memref<21x32x32xf32, #tpu.memory_space<vmem>>, vector<1x32x32xf32>
    %217 = vector.shape_cast %216 : vector<1x32x32xf32> to vector<32x32xf32>
    %cst_124 = arith.constant dense<0.000000e+00> : vector<16x32xf32>
    %218 = tpu.matmul %66, %217, %cst_124 {dimension_numbers = #tpu.dot_dimension_numbers<[1], [0], [0], [1], [0, 0, 1, 1], [], []>} : vector<16x32xf32>, vector<32x32xf32>, vector<16x32xf32> -> vector<16x32xf32>
    %cst_125 = arith.constant dense<0.000000e+00> : vector<16x32xf32>
    %219 = tpu.matmul %215, %218, %cst_125 {dimension_numbers = #tpu.dot_dimension_numbers<[1], [0], [0], [1], [0, 0, 1, 1], [], []>} : vector<16x16xf32>, vector<16x32xf32>, vector<16x32xf32> -> vector<16x32xf32>
    %220 = arith.addf %203, %219 : vector<16x32xf32>
    %221 = vector.broadcast %136 : vector<1x32xf32> to vector<16x32xf32>
    %222 = arith.addf %220, %221 : vector<16x32xf32>
    %223 = arith.addf %66, %222 : vector<16x32xf32>
    %cst_126 = arith.constant dense<0.000000e+00> : vector<16xf32>
    %224 = vector.multi_reduction <add>, %223, %cst_126 [1] : vector<16x32xf32> to vector<16xf32>
    %225 = vector.shape_cast %224 : vector<16xf32> to vector<16x1xf32>
    %cst_127 = arith.constant 3.200000e+01 : f32
    %226 = vector.broadcast %cst_127 : f32 to vector<16x1xf32>
    %227 = arith.divf %225, %226 : vector<16x1xf32>
    %228 = vector.broadcast %227 : vector<16x1xf32> to vector<16x32xf32>
    %229 = arith.subf %223, %228 : vector<16x32xf32>
    %230 = arith.mulf %229, %229 : vector<16x32xf32>
    %cst_128 = arith.constant dense<0.000000e+00> : vector<16xf32>
    %231 = vector.multi_reduction <add>, %230, %cst_128 [1] : vector<16x32xf32> to vector<16xf32>
    %232 = vector.shape_cast %231 : vector<16xf32> to vector<16x1xf32>
    %cst_129 = arith.constant 3.200000e+01 : f32
    %233 = vector.broadcast %cst_129 : f32 to vector<16x1xf32>
    %234 = arith.divf %232, %233 : vector<16x1xf32>
    %235 = vector.broadcast %227 : vector<16x1xf32> to vector<16x32xf32>
    %236 = arith.subf %223, %235 : vector<16x32xf32>
    %cst_130 = arith.constant 9.99999974E-6 : f32
    %237 = vector.broadcast %cst_130 : f32 to vector<16x1xf32>
    %238 = arith.addf %234, %237 : vector<16x1xf32>
    %239 = math.rsqrt %238 : vector<16x1xf32>
    %240 = vector.broadcast %239 : vector<16x1xf32> to vector<16x32xf32>
    %241 = arith.mulf %236, %240 : vector<16x32xf32>
    %242 = vector.broadcast %137 : vector<1x32xf32> to vector<16x32xf32>
    %243 = arith.mulf %241, %242 : vector<16x32xf32>
    %244 = vector.broadcast %138 : vector<1x32xf32> to vector<16x32xf32>
    %245 = arith.addf %243, %244 : vector<16x32xf32>
    %c6_131 = arith.constant 6 : index
    %c0_132 = arith.constant 0 : index
    %c0_133 = arith.constant 0 : index
    %246 = vector.load %arg3[%c6_131, %c0_132, %c0_133] : memref<21x32x32xf32, #tpu.memory_space<vmem>>, vector<1x32x32xf32>
    %247 = vector.shape_cast %246 : vector<1x32x32xf32> to vector<32x32xf32>
    %cst_134 = arith.constant dense<0.000000e+00> : vector<16x32xf32>
    %248 = tpu.matmul %245, %247, %cst_134 {dimension_numbers = #tpu.dot_dimension_numbers<[1], [0], [0], [1], [0, 0, 1, 1], [], []>} : vector<16x32xf32>, vector<32x32xf32>, vector<16x32xf32> -> vector<16x32xf32>
    %249 = vector.broadcast %142 : vector<1x32xf32> to vector<16x32xf32>
    %250 = arith.addf %248, %249 : vector<16x32xf32>
    %cst_135 = arith.constant 0.000000e+00 : f32
    %251 = vector.broadcast %cst_135 : f32 to vector<16x32xf32>
    %252 = arith.maximumf %250, %251 : vector<16x32xf32>
    %c7_136 = arith.constant 7 : index
    %c0_137 = arith.constant 0 : index
    %c0_138 = arith.constant 0 : index
    %253 = vector.load %arg3[%c7_136, %c0_137, %c0_138] : memref<21x32x32xf32, #tpu.memory_space<vmem>>, vector<1x32x32xf32>
    %254 = vector.shape_cast %253 : vector<1x32x32xf32> to vector<32x32xf32>
    %cst_139 = arith.constant dense<0.000000e+00> : vector<16x32xf32>
    %255 = tpu.matmul %245, %254, %cst_139 {dimension_numbers = #tpu.dot_dimension_numbers<[1], [0], [0], [1], [0, 0, 1, 1], [], []>} : vector<16x32xf32>, vector<32x32xf32>, vector<16x32xf32> -> vector<16x32xf32>
    %256 = vector.broadcast %143 : vector<1x32xf32> to vector<16x32xf32>
    %257 = arith.addf %255, %256 : vector<16x32xf32>
    %cst_140 = arith.constant 0.000000e+00 : f32
    %258 = vector.broadcast %cst_140 : f32 to vector<16x32xf32>
    %259 = arith.maximumf %257, %258 : vector<16x32xf32>
    %c8_141 = arith.constant 8 : index
    %c0_142 = arith.constant 0 : index
    %c0_143 = arith.constant 0 : index
    %260 = vector.load %arg3[%c8_141, %c0_142, %c0_143] : memref<21x32x32xf32, #tpu.memory_space<vmem>>, vector<1x32x32xf32>
    %261 = vector.shape_cast %260 : vector<1x32x32xf32> to vector<32x32xf32>
    %cst_144 = arith.constant dense<0.000000e+00> : vector<16x32xf32>
    %262 = tpu.matmul %252, %261, %cst_144 {dimension_numbers = #tpu.dot_dimension_numbers<[1], [0], [0], [1], [0, 0, 1, 1], [], []>} : vector<16x32xf32>, vector<32x32xf32>, vector<16x32xf32> -> vector<16x32xf32>
    %c9_145 = arith.constant 9 : index
    %c0_146 = arith.constant 0 : index
    %c0_147 = arith.constant 0 : index
    %263 = vector.load %arg3[%c9_145, %c0_146, %c0_147] : memref<21x32x32xf32, #tpu.memory_space<vmem>>, vector<1x32x32xf32>
    %264 = vector.shape_cast %263 : vector<1x32x32xf32> to vector<32x32xf32>
    %cst_148 = arith.constant dense<0.000000e+00> : vector<16x32xf32>
    %265 = tpu.matmul %259, %264, %cst_148 {dimension_numbers = #tpu.dot_dimension_numbers<[1], [0], [0], [1], [0, 0, 1, 1], [], []>} : vector<16x32xf32>, vector<32x32xf32>, vector<16x32xf32> -> vector<16x32xf32>
    %266 = arith.addf %262, %265 : vector<16x32xf32>
    %267 = vector.broadcast %141 : vector<1x32xf32> to vector<16x32xf32>
    %268 = arith.addf %266, %267 : vector<16x32xf32>
    %269 = arith.addf %245, %268 : vector<16x32xf32>
    %cst_149 = arith.constant dense<0.000000e+00> : vector<16xf32>
    %270 = vector.multi_reduction <add>, %269, %cst_149 [1] : vector<16x32xf32> to vector<16xf32>
    %271 = vector.shape_cast %270 : vector<16xf32> to vector<16x1xf32>
    %cst_150 = arith.constant 3.200000e+01 : f32
    %272 = vector.broadcast %cst_150 : f32 to vector<16x1xf32>
    %273 = arith.divf %271, %272 : vector<16x1xf32>
    %274 = vector.broadcast %273 : vector<16x1xf32> to vector<16x32xf32>
    %275 = arith.subf %269, %274 : vector<16x32xf32>
    %276 = arith.mulf %275, %275 : vector<16x32xf32>
    %cst_151 = arith.constant dense<0.000000e+00> : vector<16xf32>
    %277 = vector.multi_reduction <add>, %276, %cst_151 [1] : vector<16x32xf32> to vector<16xf32>
    %278 = vector.shape_cast %277 : vector<16xf32> to vector<16x1xf32>
    %cst_152 = arith.constant 3.200000e+01 : f32
    %279 = vector.broadcast %cst_152 : f32 to vector<16x1xf32>
    %280 = arith.divf %278, %279 : vector<16x1xf32>
    %281 = vector.broadcast %273 : vector<16x1xf32> to vector<16x32xf32>
    %282 = arith.subf %269, %281 : vector<16x32xf32>
    %cst_153 = arith.constant 9.99999974E-6 : f32
    %283 = vector.broadcast %cst_153 : f32 to vector<16x1xf32>
    %284 = arith.addf %280, %283 : vector<16x1xf32>
    %285 = math.rsqrt %284 : vector<16x1xf32>
    %286 = vector.broadcast %285 : vector<16x1xf32> to vector<16x32xf32>
    %287 = arith.mulf %282, %286 : vector<16x32xf32>
    %288 = vector.broadcast %139 : vector<1x32xf32> to vector<16x32xf32>
    %289 = arith.mulf %287, %288 : vector<16x32xf32>
    %290 = vector.broadcast %140 : vector<1x32xf32> to vector<16x32xf32>
    %291 = arith.addf %289, %290 : vector<16x32xf32>
    %c10_154 = arith.constant 10 : index
    %c0_155 = arith.constant 0 : index
    %292 = vector.load %arg4[%c10_154, %c0_155] : memref<21x32xf32, #tpu.memory_space<vmem>>, vector<1x32xf32>
    %c11_156 = arith.constant 11 : index
    %c0_157 = arith.constant 0 : index
    %293 = vector.load %arg4[%c11_156, %c0_157] : memref<21x32xf32, #tpu.memory_space<vmem>>, vector<1x32xf32>
    %c12_158 = arith.constant 12 : index
    %c0_159 = arith.constant 0 : index
    %294 = vector.load %arg4[%c12_158, %c0_159] : memref<21x32xf32, #tpu.memory_space<vmem>>, vector<1x32xf32>
    %c13_160 = arith.constant 13 : index
    %c0_161 = arith.constant 0 : index
    %295 = vector.load %arg4[%c13_160, %c0_161] : memref<21x32xf32, #tpu.memory_space<vmem>>, vector<1x32xf32>
    %c14_162 = arith.constant 14 : index
    %c0_163 = arith.constant 0 : index
    %296 = vector.load %arg4[%c14_162, %c0_163] : memref<21x32xf32, #tpu.memory_space<vmem>>, vector<1x32xf32>
    %c15_164 = arith.constant 15 : index
    %c0_165 = arith.constant 0 : index
    %297 = vector.load %arg4[%c15_164, %c0_165] : memref<21x32xf32, #tpu.memory_space<vmem>>, vector<1x32xf32>
    %c16 = arith.constant 16 : index
    %c0_166 = arith.constant 0 : index
    %298 = vector.load %arg4[%c16, %c0_166] : memref<21x32xf32, #tpu.memory_space<vmem>>, vector<1x32xf32>
    %c17 = arith.constant 17 : index
    %c0_167 = arith.constant 0 : index
    %299 = vector.load %arg4[%c17, %c0_167] : memref<21x32xf32, #tpu.memory_space<vmem>>, vector<1x32xf32>
    %c18 = arith.constant 18 : index
    %c0_168 = arith.constant 0 : index
    %300 = vector.load %arg4[%c18, %c0_168] : memref<21x32xf32, #tpu.memory_space<vmem>>, vector<1x32xf32>
    %c19 = arith.constant 19 : index
    %c0_169 = arith.constant 0 : index
    %301 = vector.load %arg4[%c19, %c0_169] : memref<21x32xf32, #tpu.memory_space<vmem>>, vector<1x32xf32>
    %c10_170 = arith.constant 10 : index
    %c0_171 = arith.constant 0 : index
    %c0_172 = arith.constant 0 : index
    %302 = vector.load %arg3[%c10_170, %c0_171, %c0_172] : memref<21x32x32xf32, #tpu.memory_space<vmem>>, vector<1x32x32xf32>
    %303 = vector.shape_cast %302 : vector<1x32x32xf32> to vector<32x32xf32>
    %cst_173 = arith.constant dense<0.000000e+00> : vector<16x32xf32>
    %304 = tpu.matmul %291, %303, %cst_173 {dimension_numbers = #tpu.dot_dimension_numbers<[1], [0], [0], [1], [0, 0, 1, 1], [], []>} : vector<16x32xf32>, vector<32x32xf32>, vector<16x32xf32> -> vector<16x32xf32>
    %305 = vector.broadcast %292 : vector<1x32xf32> to vector<16x32xf32>
    %306 = arith.addf %304, %305 : vector<16x32xf32>
    %c11_174 = arith.constant 11 : index
    %c0_175 = arith.constant 0 : index
    %c0_176 = arith.constant 0 : index
    %307 = vector.load %arg3[%c11_174, %c0_175, %c0_176] : memref<21x32x32xf32, #tpu.memory_space<vmem>>, vector<1x32x32xf32>
    %308 = vector.shape_cast %307 : vector<1x32x32xf32> to vector<32x32xf32>
    %cst_177 = arith.constant dense<0.000000e+00> : vector<16x32xf32>
    %309 = tpu.matmul %291, %308, %cst_177 {dimension_numbers = #tpu.dot_dimension_numbers<[1], [0], [0], [1], [0, 0, 1, 1], [], []>} : vector<16x32xf32>, vector<32x32xf32>, vector<16x32xf32> -> vector<16x32xf32>
    %310 = vector.broadcast %293 : vector<1x32xf32> to vector<16x32xf32>
    %311 = arith.addf %309, %310 : vector<16x32xf32>
    %312 = vector.broadcast %112 : vector<1x32xf32> to vector<16x32xf32>
    %313 = arith.mulf %306, %312 : vector<16x32xf32>
    %cst_178 = arith.constant dense<0.000000e+00> : vector<16x16xf32>
    %314 = tpu.matmul %313, %311, %cst_178 {dimension_numbers = #tpu.dot_dimension_numbers<[1], [1], [0], [0], [0, 0, 1, 0], [], []>} : vector<16x32xf32>, vector<16x32xf32>, vector<16x16xf32> -> vector<16x16xf32>
    %cst_179 = arith.constant 0.353553385 : f32
    %315 = vector.broadcast %cst_179 : f32 to vector<16x16xf32>
    %316 = arith.mulf %314, %315 : vector<16x16xf32>
    %317 = arith.addf %316, %104 : vector<16x16xf32>
    %318 = math.exp %317 : vector<16x16xf32>
    %cst_180 = arith.constant dense<0.000000e+00> : vector<16xf32>
    %319 = vector.multi_reduction <add>, %318, %cst_180 [1] : vector<16x16xf32> to vector<16xf32>
    %320 = vector.shape_cast %319 : vector<16xf32> to vector<16x1xf32>
    %321 = tpu.reciprocal %320 {approx = true} : vector<16x1xf32> -> vector<16x1xf32>
    %322 = vector.broadcast %321 : vector<16x1xf32> to vector<16x16xf32>
    %323 = arith.mulf %318, %322 : vector<16x16xf32>
    %c12_181 = arith.constant 12 : index
    %c0_182 = arith.constant 0 : index
    %c0_183 = arith.constant 0 : index
    %324 = vector.load %arg3[%c12_181, %c0_182, %c0_183] : memref<21x32x32xf32, #tpu.memory_space<vmem>>, vector<1x32x32xf32>
    %325 = vector.shape_cast %324 : vector<1x32x32xf32> to vector<32x32xf32>
    %cst_184 = arith.constant dense<0.000000e+00> : vector<16x32xf32>
    %326 = tpu.matmul %291, %325, %cst_184 {dimension_numbers = #tpu.dot_dimension_numbers<[1], [0], [0], [1], [0, 0, 1, 1], [], []>} : vector<16x32xf32>, vector<32x32xf32>, vector<16x32xf32> -> vector<16x32xf32>
    %cst_185 = arith.constant dense<0.000000e+00> : vector<16x32xf32>
    %327 = tpu.matmul %323, %326, %cst_185 {dimension_numbers = #tpu.dot_dimension_numbers<[1], [0], [0], [1], [0, 0, 1, 1], [], []>} : vector<16x16xf32>, vector<16x32xf32>, vector<16x32xf32> -> vector<16x32xf32>
    %328 = vector.broadcast %119 : vector<1x32xf32> to vector<16x32xf32>
    %329 = arith.mulf %306, %328 : vector<16x32xf32>
    %cst_186 = arith.constant dense<0.000000e+00> : vector<16x16xf32>
    %330 = tpu.matmul %329, %311, %cst_186 {dimension_numbers = #tpu.dot_dimension_numbers<[1], [1], [0], [0], [0, 0, 1, 0], [], []>} : vector<16x32xf32>, vector<16x32xf32>, vector<16x16xf32> -> vector<16x16xf32>
    %cst_187 = arith.constant 0.353553385 : f32
    %331 = vector.broadcast %cst_187 : f32 to vector<16x16xf32>
    %332 = arith.mulf %330, %331 : vector<16x16xf32>
    %333 = arith.addf %332, %104 : vector<16x16xf32>
    %334 = math.exp %333 : vector<16x16xf32>
    %cst_188 = arith.constant dense<0.000000e+00> : vector<16xf32>
    %335 = vector.multi_reduction <add>, %334, %cst_188 [1] : vector<16x16xf32> to vector<16xf32>
    %336 = vector.shape_cast %335 : vector<16xf32> to vector<16x1xf32>
    %337 = tpu.reciprocal %336 {approx = true} : vector<16x1xf32> -> vector<16x1xf32>
    %338 = vector.broadcast %337 : vector<16x1xf32> to vector<16x16xf32>
    %339 = arith.mulf %334, %338 : vector<16x16xf32>
    %c13_189 = arith.constant 13 : index
    %c0_190 = arith.constant 0 : index
    %c0_191 = arith.constant 0 : index
    %340 = vector.load %arg3[%c13_189, %c0_190, %c0_191] : memref<21x32x32xf32, #tpu.memory_space<vmem>>, vector<1x32x32xf32>
    %341 = vector.shape_cast %340 : vector<1x32x32xf32> to vector<32x32xf32>
    %cst_192 = arith.constant dense<0.000000e+00> : vector<16x32xf32>
    %342 = tpu.matmul %291, %341, %cst_192 {dimension_numbers = #tpu.dot_dimension_numbers<[1], [0], [0], [1], [0, 0, 1, 1], [], []>} : vector<16x32xf32>, vector<32x32xf32>, vector<16x32xf32> -> vector<16x32xf32>
    %cst_193 = arith.constant dense<0.000000e+00> : vector<16x32xf32>
    %343 = tpu.matmul %339, %342, %cst_193 {dimension_numbers = #tpu.dot_dimension_numbers<[1], [0], [0], [1], [0, 0, 1, 1], [], []>} : vector<16x16xf32>, vector<16x32xf32>, vector<16x32xf32> -> vector<16x32xf32>
    %344 = arith.addf %327, %343 : vector<16x32xf32>
    %345 = vector.broadcast %126 : vector<1x32xf32> to vector<16x32xf32>
    %346 = arith.mulf %306, %345 : vector<16x32xf32>
    %cst_194 = arith.constant dense<0.000000e+00> : vector<16x16xf32>
    %347 = tpu.matmul %346, %311, %cst_194 {dimension_numbers = #tpu.dot_dimension_numbers<[1], [1], [0], [0], [0, 0, 1, 0], [], []>} : vector<16x32xf32>, vector<16x32xf32>, vector<16x16xf32> -> vector<16x16xf32>
    %cst_195 = arith.constant 0.353553385 : f32
    %348 = vector.broadcast %cst_195 : f32 to vector<16x16xf32>
    %349 = arith.mulf %347, %348 : vector<16x16xf32>
    %350 = arith.addf %349, %104 : vector<16x16xf32>
    %351 = math.exp %350 : vector<16x16xf32>
    %cst_196 = arith.constant dense<0.000000e+00> : vector<16xf32>
    %352 = vector.multi_reduction <add>, %351, %cst_196 [1] : vector<16x16xf32> to vector<16xf32>
    %353 = vector.shape_cast %352 : vector<16xf32> to vector<16x1xf32>
    %354 = tpu.reciprocal %353 {approx = true} : vector<16x1xf32> -> vector<16x1xf32>
    %355 = vector.broadcast %354 : vector<16x1xf32> to vector<16x16xf32>
    %356 = arith.mulf %351, %355 : vector<16x16xf32>
    %c14_197 = arith.constant 14 : index
    %c0_198 = arith.constant 0 : index
    %c0_199 = arith.constant 0 : index
    %357 = vector.load %arg3[%c14_197, %c0_198, %c0_199] : memref<21x32x32xf32, #tpu.memory_space<vmem>>, vector<1x32x32xf32>
    %358 = vector.shape_cast %357 : vector<1x32x32xf32> to vector<32x32xf32>
    %cst_200 = arith.constant dense<0.000000e+00> : vector<16x32xf32>
    %359 = tpu.matmul %291, %358, %cst_200 {dimension_numbers = #tpu.dot_dimension_numbers<[1], [0], [0], [1], [0, 0, 1, 1], [], []>} : vector<16x32xf32>, vector<32x32xf32>, vector<16x32xf32> -> vector<16x32xf32>
    %cst_201 = arith.constant dense<0.000000e+00> : vector<16x32xf32>
    %360 = tpu.matmul %356, %359, %cst_201 {dimension_numbers = #tpu.dot_dimension_numbers<[1], [0], [0], [1], [0, 0, 1, 1], [], []>} : vector<16x16xf32>, vector<16x32xf32>, vector<16x32xf32> -> vector<16x32xf32>
    %361 = arith.addf %344, %360 : vector<16x32xf32>
    %362 = vector.broadcast %133 : vector<1x32xf32> to vector<16x32xf32>
    %363 = arith.mulf %306, %362 : vector<16x32xf32>
    %cst_202 = arith.constant dense<0.000000e+00> : vector<16x16xf32>
    %364 = tpu.matmul %363, %311, %cst_202 {dimension_numbers = #tpu.dot_dimension_numbers<[1], [1], [0], [0], [0, 0, 1, 0], [], []>} : vector<16x32xf32>, vector<16x32xf32>, vector<16x16xf32> -> vector<16x16xf32>
    %cst_203 = arith.constant 0.353553385 : f32
    %365 = vector.broadcast %cst_203 : f32 to vector<16x16xf32>
    %366 = arith.mulf %364, %365 : vector<16x16xf32>
    %367 = arith.addf %366, %104 : vector<16x16xf32>
    %368 = math.exp %367 : vector<16x16xf32>
    %cst_204 = arith.constant dense<0.000000e+00> : vector<16xf32>
    %369 = vector.multi_reduction <add>, %368, %cst_204 [1] : vector<16x16xf32> to vector<16xf32>
    %370 = vector.shape_cast %369 : vector<16xf32> to vector<16x1xf32>
    %371 = tpu.reciprocal %370 {approx = true} : vector<16x1xf32> -> vector<16x1xf32>
    %372 = vector.broadcast %371 : vector<16x1xf32> to vector<16x16xf32>
    %373 = arith.mulf %368, %372 : vector<16x16xf32>
    %c15_205 = arith.constant 15 : index
    %c0_206 = arith.constant 0 : index
    %c0_207 = arith.constant 0 : index
    %374 = vector.load %arg3[%c15_205, %c0_206, %c0_207] : memref<21x32x32xf32, #tpu.memory_space<vmem>>, vector<1x32x32xf32>
    %375 = vector.shape_cast %374 : vector<1x32x32xf32> to vector<32x32xf32>
    %cst_208 = arith.constant dense<0.000000e+00> : vector<16x32xf32>
    %376 = tpu.matmul %291, %375, %cst_208 {dimension_numbers = #tpu.dot_dimension_numbers<[1], [0], [0], [1], [0, 0, 1, 1], [], []>} : vector<16x32xf32>, vector<32x32xf32>, vector<16x32xf32> -> vector<16x32xf32>
    %cst_209 = arith.constant dense<0.000000e+00> : vector<16x32xf32>
    %377 = tpu.matmul %373, %376, %cst_209 {dimension_numbers = #tpu.dot_dimension_numbers<[1], [0], [0], [1], [0, 0, 1, 1], [], []>} : vector<16x16xf32>, vector<16x32xf32>, vector<16x32xf32> -> vector<16x32xf32>
    %378 = arith.addf %361, %377 : vector<16x32xf32>
    %379 = vector.broadcast %294 : vector<1x32xf32> to vector<16x32xf32>
    %380 = arith.addf %378, %379 : vector<16x32xf32>
    %381 = arith.addf %291, %380 : vector<16x32xf32>
    %cst_210 = arith.constant dense<0.000000e+00> : vector<16xf32>
    %382 = vector.multi_reduction <add>, %381, %cst_210 [1] : vector<16x32xf32> to vector<16xf32>
    %383 = vector.shape_cast %382 : vector<16xf32> to vector<16x1xf32>
    %cst_211 = arith.constant 3.200000e+01 : f32
    %384 = vector.broadcast %cst_211 : f32 to vector<16x1xf32>
    %385 = arith.divf %383, %384 : vector<16x1xf32>
    %386 = vector.broadcast %385 : vector<16x1xf32> to vector<16x32xf32>
    %387 = arith.subf %381, %386 : vector<16x32xf32>
    %388 = arith.mulf %387, %387 : vector<16x32xf32>
    %cst_212 = arith.constant dense<0.000000e+00> : vector<16xf32>
    %389 = vector.multi_reduction <add>, %388, %cst_212 [1] : vector<16x32xf32> to vector<16xf32>
    %390 = vector.shape_cast %389 : vector<16xf32> to vector<16x1xf32>
    %cst_213 = arith.constant 3.200000e+01 : f32
    %391 = vector.broadcast %cst_213 : f32 to vector<16x1xf32>
    %392 = arith.divf %390, %391 : vector<16x1xf32>
    %393 = vector.broadcast %385 : vector<16x1xf32> to vector<16x32xf32>
    %394 = arith.subf %381, %393 : vector<16x32xf32>
    %cst_214 = arith.constant 9.99999974E-6 : f32
    %395 = vector.broadcast %cst_214 : f32 to vector<16x1xf32>
    %396 = arith.addf %392, %395 : vector<16x1xf32>
    %397 = math.rsqrt %396 : vector<16x1xf32>
    %398 = vector.broadcast %397 : vector<16x1xf32> to vector<16x32xf32>
    %399 = arith.mulf %394, %398 : vector<16x32xf32>
    %400 = vector.broadcast %295 : vector<1x32xf32> to vector<16x32xf32>
    %401 = arith.mulf %399, %400 : vector<16x32xf32>
    %402 = vector.broadcast %296 : vector<1x32xf32> to vector<16x32xf32>
    %403 = arith.addf %401, %402 : vector<16x32xf32>
    %c16_215 = arith.constant 16 : index
    %c0_216 = arith.constant 0 : index
    %c0_217 = arith.constant 0 : index
    %404 = vector.load %arg3[%c16_215, %c0_216, %c0_217] : memref<21x32x32xf32, #tpu.memory_space<vmem>>, vector<1x32x32xf32>
    %405 = vector.shape_cast %404 : vector<1x32x32xf32> to vector<32x32xf32>
    %cst_218 = arith.constant dense<0.000000e+00> : vector<16x32xf32>
    %406 = tpu.matmul %403, %405, %cst_218 {dimension_numbers = #tpu.dot_dimension_numbers<[1], [0], [0], [1], [0, 0, 1, 1], [], []>} : vector<16x32xf32>, vector<32x32xf32>, vector<16x32xf32> -> vector<16x32xf32>
    %407 = vector.broadcast %300 : vector<1x32xf32> to vector<16x32xf32>
    %408 = arith.addf %406, %407 : vector<16x32xf32>
    %cst_219 = arith.constant 0.000000e+00 : f32
    %409 = vector.broadcast %cst_219 : f32 to vector<16x32xf32>
    %410 = arith.maximumf %408, %409 : vector<16x32xf32>
    %c17_220 = arith.constant 17 : index
    %c0_221 = arith.constant 0 : index
    %c0_222 = arith.constant 0 : index
    %411 = vector.load %arg3[%c17_220, %c0_221, %c0_222] : memref<21x32x32xf32, #tpu.memory_space<vmem>>, vector<1x32x32xf32>
    %412 = vector.shape_cast %411 : vector<1x32x32xf32> to vector<32x32xf32>
    %cst_223 = arith.constant dense<0.000000e+00> : vector<16x32xf32>
    %413 = tpu.matmul %403, %412, %cst_223 {dimension_numbers = #tpu.dot_dimension_numbers<[1], [0], [0], [1], [0, 0, 1, 1], [], []>} : vector<16x32xf32>, vector<32x32xf32>, vector<16x32xf32> -> vector<16x32xf32>
    %414 = vector.broadcast %301 : vector<1x32xf32> to vector<16x32xf32>
    %415 = arith.addf %413, %414 : vector<16x32xf32>
    %cst_224 = arith.constant 0.000000e+00 : f32
    %416 = vector.broadcast %cst_224 : f32 to vector<16x32xf32>
    %417 = arith.maximumf %415, %416 : vector<16x32xf32>
    %c18_225 = arith.constant 18 : index
    %c0_226 = arith.constant 0 : index
    %c0_227 = arith.constant 0 : index
    %418 = vector.load %arg3[%c18_225, %c0_226, %c0_227] : memref<21x32x32xf32, #tpu.memory_space<vmem>>, vector<1x32x32xf32>
    %419 = vector.shape_cast %418 : vector<1x32x32xf32> to vector<32x32xf32>
    %cst_228 = arith.constant dense<0.000000e+00> : vector<16x32xf32>
    %420 = tpu.matmul %410, %419, %cst_228 {dimension_numbers = #tpu.dot_dimension_numbers<[1], [0], [0], [1], [0, 0, 1, 1], [], []>} : vector<16x32xf32>, vector<32x32xf32>, vector<16x32xf32> -> vector<16x32xf32>
    %c19_229 = arith.constant 19 : index
    %c0_230 = arith.constant 0 : index
    %c0_231 = arith.constant 0 : index
    %421 = vector.load %arg3[%c19_229, %c0_230, %c0_231] : memref<21x32x32xf32, #tpu.memory_space<vmem>>, vector<1x32x32xf32>
    %422 = vector.shape_cast %421 : vector<1x32x32xf32> to vector<32x32xf32>
    %cst_232 = arith.constant dense<0.000000e+00> : vector<16x32xf32>
    %423 = tpu.matmul %417, %422, %cst_232 {dimension_numbers = #tpu.dot_dimension_numbers<[1], [0], [0], [1], [0, 0, 1, 1], [], []>} : vector<16x32xf32>, vector<32x32xf32>, vector<16x32xf32> -> vector<16x32xf32>
    %424 = arith.addf %420, %423 : vector<16x32xf32>
    %425 = vector.broadcast %299 : vector<1x32xf32> to vector<16x32xf32>
    %426 = arith.addf %424, %425 : vector<16x32xf32>
    %427 = arith.addf %403, %426 : vector<16x32xf32>
    %cst_233 = arith.constant dense<0.000000e+00> : vector<16xf32>
    %428 = vector.multi_reduction <add>, %427, %cst_233 [1] : vector<16x32xf32> to vector<16xf32>
    %429 = vector.shape_cast %428 : vector<16xf32> to vector<16x1xf32>
    %cst_234 = arith.constant 3.200000e+01 : f32
    %430 = vector.broadcast %cst_234 : f32 to vector<16x1xf32>
    %431 = arith.divf %429, %430 : vector<16x1xf32>
    %432 = vector.broadcast %431 : vector<16x1xf32> to vector<16x32xf32>
    %433 = arith.subf %427, %432 : vector<16x32xf32>
    %434 = arith.mulf %433, %433 : vector<16x32xf32>
    %cst_235 = arith.constant dense<0.000000e+00> : vector<16xf32>
    %435 = vector.multi_reduction <add>, %434, %cst_235 [1] : vector<16x32xf32> to vector<16xf32>
    %436 = vector.shape_cast %435 : vector<16xf32> to vector<16x1xf32>
    %cst_236 = arith.constant 3.200000e+01 : f32
    %437 = vector.broadcast %cst_236 : f32 to vector<16x1xf32>
    %438 = arith.divf %436, %437 : vector<16x1xf32>
    %439 = vector.broadcast %431 : vector<16x1xf32> to vector<16x32xf32>
    %440 = arith.subf %427, %439 : vector<16x32xf32>
    %cst_237 = arith.constant 9.99999974E-6 : f32
    %441 = vector.broadcast %cst_237 : f32 to vector<16x1xf32>
    %442 = arith.addf %438, %441 : vector<16x1xf32>
    %443 = math.rsqrt %442 : vector<16x1xf32>
    %444 = vector.broadcast %443 : vector<16x1xf32> to vector<16x32xf32>
    %445 = arith.mulf %440, %444 : vector<16x32xf32>
    %446 = vector.broadcast %297 : vector<1x32xf32> to vector<16x32xf32>
    %447 = arith.mulf %445, %446 : vector<16x32xf32>
    %448 = vector.broadcast %298 : vector<1x32xf32> to vector<16x32xf32>
    %449 = arith.addf %447, %448 : vector<16x32xf32>
    %c20 = arith.constant 20 : index
    %c0_238 = arith.constant 0 : index
    %c0_239 = arith.constant 0 : index
    %450 = vector.load %arg3[%c20, %c0_238, %c0_239] : memref<21x32x32xf32, #tpu.memory_space<vmem>>, vector<1x32x32xf32>
    %451 = vector.shape_cast %450 : vector<1x32x32xf32> to vector<32x32xf32>
    %c20_240 = arith.constant 20 : index
    %c0_241 = arith.constant 0 : index
    %452 = vector.load %arg4[%c20_240, %c0_241] : memref<21x32xf32, #tpu.memory_space<vmem>>, vector<1x32xf32>
    %cst_242 = arith.constant dense<0.000000e+00> : vector<16x32xf32>
    %453 = tpu.matmul %449, %451, %cst_242 {dimension_numbers = #tpu.dot_dimension_numbers<[1], [0], [0], [1], [0, 0, 1, 1], [], []>} : vector<16x32xf32>, vector<32x32xf32>, vector<16x32xf32> -> vector<16x32xf32>
    %454 = vector.broadcast %452 : vector<1x32xf32> to vector<16x32xf32>
    %455 = arith.addf %453, %454 : vector<16x32xf32>
    %456 = vector.extract_strided_slice %455 {offsets = [0, 0], sizes = [16, 16], strides = [1, 1]} : vector<16x32xf32> to vector<16x16xf32>
    %c0_243 = arith.constant 0 : index
    %c0_244 = arith.constant 0 : index
    %457 = vector.load %arg5[%c0_243, %c0_244] : memref<16x16xf32, #tpu.memory_space<vmem>>, vector<16x16xf32>
    tpu.vector_store %arg5[%c0_243, %c0_244], %456 {strides = array<i32>} : memref<16x16xf32, #tpu.memory_space<vmem>>, vector<16x16xf32>,
    return
  }
  func.func @transform_0(%arg0: i32, %arg1: memref<16xi32, #tpu.memory_space<smem>>) -> (i32, i32) {
    %c0_i32 = arith.constant 0 : i32
    %c0_i32_0 = arith.constant 0 : i32
    %c0_i32_1 = arith.constant 0 : i32
    return %c0_i32, %c0_i32_0 : i32, i32
  }
  func.func @transform_1(%arg0: i32, %arg1: memref<16xi32, #tpu.memory_space<smem>>) -> (i32, i32, i32) {
    %c0_i32 = arith.constant 0 : i32
    %c0_i32_0 = arith.constant 0 : i32
    %c0_i32_1 = arith.constant 0 : i32
    %c0_i32_2 = arith.constant 0 : i32
    return %c0_i32, %c0_i32_0, %c0_i32_1 : i32, i32, i32
  }
  func.func @transform_2(%arg0: i32, %arg1: memref<16xi32, #tpu.memory_space<smem>>) -> (i32, i32) {
    %c0_i32 = arith.constant 0 : i32
    %c0_i32_0 = arith.constant 0 : i32
    %c0_i32_1 = arith.constant 0 : i32
    return %c0_i32, %c0_i32_0 : i32, i32
  }
  func.func @transform_3(%arg0: i32, %arg1: memref<16xi32, #tpu.memory_space<smem>>) -> (i32, i32) {
    %c0_i32 = arith.constant 0 : i32
    %c0_i32_0 = arith.constant 0 : i32
    %c0_i32_1 = arith.constant 0 : i32
    return %c0_i32, %c0_i32_0 : i32, i32
  }
}

</mosaic_0001>

<llo_original>
// kernel: pose_transformer_forward.1
$region0: #{pose_transformer_forward.1}
  #allocation0 [shape = 'u32[]', space=smem, size = 0x4, offset = 0x4, fixed_abs, tag = 'smem constant byte address 0x4 - core index']
  #allocation1 [shape = 'u32[144,128]{1,0:T(1,128)}', space=vmem, size = 0x12000, scoped, tag = 'internal scratch']
  #allocation2 [shape = 'f32[16,32]{1,0:T(8,128)}', space=vmem, size = 0x2000, scoped, tag = 'scratch operand']
  #allocation3 [shape = 's32[1]{0}', space=sflag, size = 0x4, scoped, tag = 'scoped memory for pose_transformer_forward.1']
  #allocation4 [shape = 'u8[512]{0}', space=smem, size = 0x200, scoped, tag = 'prefetched SMEM operand 0']
  %s0 = inlined_call_operand.vmem [shape: s32[16], index: 0, kind: input, shape index: {}]
  %s1 = inlined_call_operand.vmem [shape: f32[72,32], index: 1, kind: input, shape index: {}]
  %s2 = inlined_call_operand.hbm [shape: f32[21,32,32], index: 2, kind: input, shape index: {}]
  %s3 = inlined_call_operand.vmem [shape: f32[21,32], index: 3, kind: input, shape index: {}]
  %s4 = inlined_call_operand.vmem [shape: f32[16,16], index: 4, kind: output, shape index: {}]
  %s5 = sld [smem:[#allocation0]]
  $region26: #{pose_transformer_forward.1} parent=0
    _
  %s7 = ssub.s32 1, %s5
  %s8 = scalar_select 0, %s7, %s5
  %s9 = sshll.u32 %s0, 4
  %s10 = int_to_ptr.vmem [resolvable:$true] %s9
  %12 = dma.vmem_to_smem %s10, 16, [#allocation4], [#allocation3]
  %13 = dma.done [#allocation3], 16
  %14 = sfence
  $region1: #{pose_transformer_forward.1} parent=0
    #allocation5 [shape = 'u8[344064]{0}', space=vmem, size = 0x54000, scoped, tag = 'input window, operand 2, single buffered']
    #allocation6 [shape = 's32[1]{0}', space=sflag, size = 0x4, scoped, tag = 'scoped memory for pose_transformer_forward.1']
    %15 = vsyncpa [#allocation6], 0
    // Predicated region
    $region2: #{pose_transformer_forward.1} parent=1 // pred_check
      _
    $region3: #{pose_transformer_forward.1} parent=1 // pred_check_branch
      %17 = sbr.rel (0) target = $region5
    $region4: #{pose_transformer_forward.1} parent=1 // pred_region
      _
    $region5: #{pose_transformer_forward.1} parent=1 // pred_fallthru
      _
    // Predicated region
    $region6: #{pose_transformer_forward.1} parent=1 // pred_check
      _
    $region7: #{pose_transformer_forward.1} parent=1 // pred_check_branch
      %19 = sbr.rel (0) target = $region9
    $region8: #{pose_transformer_forward.1} parent=1 // pred_region
      %s21 = ssub.s32 10752, 10752
      %22 = vsyncadd [#allocation6], %s21
      %s23 = sshll.u32 [#allocation5], 4
      %s24 = int_to_ptr.vmem [resolvable:$true] %s23
      %29 = dma.hbm_to_vmem [thread:$0]  %s2, 10752, %s24, [#allocation6], 128, 128, 8
    $region9: #{pose_transformer_forward.1} parent=1 // pred_fallthru
      _
    // Predicated region
    $region10: #{pose_transformer_forward.1} parent=1 // pred_check
      _
    $region11: #{pose_transformer_forward.1} parent=1 // pred_check_branch
      %31 = sbr.rel (0) target = $region13
    $region12: #{pose_transformer_forward.1} parent=1 // pred_region
      _
    $region13: #{pose_transformer_forward.1} parent=1 // pred_fallthru
      _
    // Predicated region
    $region14: #{pose_transformer_forward.1} parent=1 // pred_check
      _
    $region15: #{pose_transformer_forward.1} parent=1 // pred_check_branch
      %33 = sbr.rel (0) target = $region17
    $region16: #{pose_transformer_forward.1} parent=1 // pred_region
      %34 = dma.done [#allocation6], 10752
    $region17: #{pose_transformer_forward.1} parent=1 // pred_fallthru
      _
    %s35 = sld [smem:[#allocation4]]
    %s36 = scalar_lea.vmem %s1, %s35
    %v37 = vld [vmem:[%s36] sm:$0x1]
    %vm38 = vcmask 253952
    %39 = vst.msk [vmem:[#allocation2] sm:$0x1] %vm38, %v37
    %s40 = sld [smem:[#allocation4 + $0x1]]
    %s41 = scalar_lea.vmem %s1, %s40
    %v42 = vld [vmem:[%s41] sm:$0x1]
    %43 = vst.msk [vmem:[#allocation2 + $0x1] sm:$0x1] %vm38, %v42
    %s44 = sld [smem:[#allocation4 + $0x2]]
    %s45 = scalar_lea.vmem %s1, %s44
    %v46 = vld [vmem:[%s45] sm:$0x1]
    %47 = vst.msk [vmem:[#allocation2 + $0x2] sm:$0x1] %vm38, %v46
    %s48 = sld [smem:[#allocation4 + $0x3]]
    %s49 = scalar_lea.vmem %s1, %s48
    %v50 = vld [vmem:[%s49] sm:$0x1]
    %51 = vst.msk [vmem:[#allocation2 + $0x3] sm:$0x1] %vm38, %v50
    %s52 = sld [smem:[#allocation4 + $0x4]]
    %s53 = scalar_lea.vmem %s1, %s52
    %v54 = vld [vmem:[%s53] sm:$0x1]
    %55 = vst.msk [vmem:[#allocation2 + $0x4] sm:$0x1] %vm38, %v54
    %s56 = sld [smem:[#allocation4 + $0x5]]
    %s57 = scalar_lea.vmem %s1, %s56
    %v58 = vld [vmem:[%s57] sm:$0x1]
    %59 = vst.msk [vmem:[#allocation2 + $0x5] sm:$0x1] %vm38, %v58
    %s60 = sld [smem:[#allocation4 + $0x6]]
    %s61 = scalar_lea.vmem %s1, %s60
    %v62 = vld [vmem:[%s61] sm:$0x1]
    %63 = vst.msk [vmem:[#allocation2 + $0x6] sm:$0x1] %vm38, %v62
    %s64 = sld [smem:[#allocation4 + $0x7]]
    %s65 = scalar_lea.vmem %s1, %s64
    %v66 = vld [vmem:[%s65] sm:$0x1]
    %67 = vst.msk [vmem:[#allocation2 + $0x7] sm:$0x1] %vm38, %v66
    %s68 = sld [smem:[#allocation4 + $0x8]]
    %s69 = scalar_lea.vmem %s1, %s68
    %v70 = vld [vmem:[%s69] sm:$0x1]
    %71 = vst.msk [vmem:[#allocation2 + $0x8] sm:$0x1] %vm38, %v70
    %s72 = sld [smem:[#allocation4 + $0x9]]
    %s73 = scalar_lea.vmem %s1, %s72
    %v74 = vld [vmem:[%s73] sm:$0x1]
    %75 = vst.msk [vmem:[#allocation2 + $0x9] sm:$0x1] %vm38, %v74
    %s76 = sld [smem:[#allocation4 + $0xa]]
    %s77 = scalar_lea.vmem %s1, %s76
    %v78 = vld [vmem:[%s77] sm:$0x1]
    %79 = vst.msk [vmem:[#allocation2 + $0xa] sm:$0x1] %vm38, %v78
    %s80 = sld [smem:[#allocation4 + $0xb]]
    %s81 = scalar_lea.vmem %s1, %s80
    %v82 = vld [vmem:[%s81] sm:$0x1]
    %83 = vst.msk [vmem:[#allocation2 + $0xb] sm:$0x1] %vm38, %v82
    %s84 = sld [smem:[#allocation4 + $0xc]]
    %s85 = scalar_lea.vmem %s1, %s84
    %v86 = vld [vmem:[%s85] sm:$0x1]
    %87 = vst.msk [vmem:[#allocation2 + $0xc] sm:$0x1] %vm38, %v86
    %s88 = sld [smem:[#allocation4 + $0xd]]
    %s89 = scalar_lea.vmem %s1, %s88
    %v90 = vld [vmem:[%s89] sm:$0x1]
    %91 = vst.msk [vmem:[#allocation2 + $0xd] sm:$0x1] %vm38, %v90
    %s92 = sld [smem:[#allocation4 + $0xe]]
    %s93 = scalar_lea.vmem %s1, %s92
    %v94 = vld [vmem:[%s93] sm:$0x1]
    %95 = vst.msk [vmem:[#allocation2 + $0xe] sm:$0x1] %vm38, %v94
    %s96 = sld [smem:[#allocation4 + $0xf]]
    %s97 = scalar_lea.vmem %s1, %s96
    %v98 = vld [vmem:[%s97] sm:$0x1]
    %99 = vst.msk [vmem:[#allocation2 + $0xf] sm:$0x1] %vm38, %v98
    %v100 = vld [vmem:[#allocation2] sm:$0xff]
    %v101 = vld [vmem:[#allocation2 + $0x8] sm:$0xff]
    %v102 = vld [vmem:[%s1 + $0x38] sm:$0xff]
    %v103 = vld [vmem:[%s1 + $0x40] sm:$0xff]
    %v104 = vadd.f32 %v100, %v102
    %v105 = vadd.f32 %v101, %v103
    %v106 = vlaneseq
    %v107 = vshrl.u32 %v106, 7
    %v108 = vadd.s32 %v107, 8
    %v109 = vlaneseq
    %v110 = vand.u32 %v109, 127
    %vm111 = vcmp.lt.s32.totalorder %v107, 0
    %v112 = vsub.s32 0, %v107
    %v113 = vsel %vm111, %v112, %v107
    %v114 = vshrl.u32 %v113, 3
    %v115 = vand.u32 %v113, 7
    %v116 = vsub.s32 0, %v115
    %v117 = vsel %vm111, %v116, %v115
    %vm118 = vcmp.lt.s32.totalorder %v108, 0
    %v119 = vsub.s32 0, %v108
    %v120 = vsel %vm118, %v119, %v108
    %v121 = vshrl.u32 %v120, 3
    %v122 = vand.u32 %v120, 7
    %v123 = vsub.s32 0, %v122
    %v124 = vsel %vm118, %v123, %v122
    %vm125 = vcmp.ne.s32.totalorder %v117, 0
    %vm126 = vcmp.ne.s32.totalorder %v124, 0
    %vm127 = vcmp.lt.s32.totalorder %v117, 0
    %vm128 = vcmp.lt.s32.totalorder %v124, 0
    %vm129 = vmand %vm127, %vm125
    %vm130 = vmand %vm128, %vm126
    %v131 = vadd.s32 %v117, 8
    %v132 = vadd.s32 %v124, 8
    %v133 = vsel %vm129, %v131, %v117
    %v134 = vsel %vm130, %v132, %v124
    %vm135 = vcmp.lt.s32.totalorder %v110, 0
    %v136 = vsub.s32 0, %v110
    %v137 = vsel %vm135, %v136, %v110
    %v138 = vshrl.u32 %v137, 3
    %v139 = vand.u32 %v137, 7
    %v140 = vsub.s32 0, %v139
    %v141 = vsel %vm135, %v140, %v139
    %vm142 = vcmp.ne.s32.totalorder %v141, 0
    %vm143 = vcmp.lt.s32.totalorder %v141, 0
    %vm144 = vmand %vm143, %vm142
    %v145 = vadd.s32 %v141, 8
    %v146 = vsel %vm144, %v145, %v141
    %vm147 = vcmp.eq.s32.totalorder %v133, %v146
    %vm148 = vcmp.eq.s32.totalorder %v134, %v146
    %v149 = vsel %vm147, 0.0, -1e+09
    %v150 = vsel %vm148, 0.0, -1e+09
    %vm151 = vcmp.ge.s32.totalorder %v110, 0
    %vm152 = vcmp.lt.s32.totalorder %v110, 8
    %vm153 = vmand %vm151, %vm152
    %v154 = vsel %vm153, 1, 0
    %v155 = vcvt.s32.f32 %v154
    %vm156 = vcmp.ge.s32.totalorder %v110, 8
    %vm157 = vcmp.lt.s32.totalorder %v110, 16
    %vm158 = vmand %vm156, %vm157
    %v159 = vsel %vm158, 1, 0
    %v160 = vcvt.s32.f32 %v159
    %vm161 = vcmp.ge.s32.totalorder %v110, 16
    %vm162 = vcmp.lt.s32.totalorder %v110, 24
    %vm163 = vmand %vm161, %vm162
    %v164 = vsel %vm163, 1, 0
    %v165 = vcvt.s32.f32 %v164
    %vm166 = vcmp.ge.s32.totalorder %v110, 24
    %vm167 = vcmp.lt.s32.totalorder %v110, 32
    %vm168 = vmand %vm166, %vm167
    %v169 = vsel %vm168, 1, 0
    %v170 = vcvt.s32.f32 %v169
    %v171 = vld [vmem:[%s3] sm:$0x1]
    %v172 = vld [vmem:[%s3 + $0x1] sm:$0x1]
    %v173 = vld [vmem:[%s3 + $0x2] sm:$0x1]
    %v174 = vld [vmem:[%s3 + $0x3] sm:$0x1]
    %v175 = vld [vmem:[%s3 + $0x4] sm:$0x1]
    %v176 = vld [vmem:[%s3 + $0x5] sm:$0x1]
    %v177 = vld [vmem:[%s3 + $0x6] sm:$0x1]
    %v178 = vld [vmem:[%s3 + $0x7] sm:$0x1]
    %v179 = vld [vmem:[%s3 + $0x8] sm:$0x1]
    %v180 = vld [vmem:[%s3 + $0x9] sm:$0x1]
    %v181 = vld [vmem:[#allocation5] sm:$0xff]
    %v182 = vld [vmem:[#allocation5 + $0x8] sm:$0xff]
    %v183 = vld [vmem:[#allocation5 + $0x10] sm:$0xff]
    %v184 = vld [vmem:[#allocation5 + $0x18] sm:$0xff]
    %v185 = vlaneseq
    %v186 = vshrl.u32 %v185, 7
    %v187 = vsub.s32 0, %v186
    %v188 = vrot.slane %v171, %v187
    %vm189 = vcmask 261120
    %v191 = vsel %vm189, %v104, 0
    %v194 = vsel %vm189, %v105, 0
    %196 = vmatprep.subr.mxu0 0.0
    %197 = vmatpush1.msra.mxu0 %v181
    %198 = vmatprep.subr.mxu0 0.0
    %199 = vmatpush1.msra.mxu0 %v182
    %200 = vmatprep.subr.mxu0 0.0
    %201 = vmatpush1.msra.mxu0 %v183
    %202 = vmatprep.subr.mxu0 0.0
    %203 = vmatpush1.msra.mxu0 %v184
    %204 = vmatprep.subr.mxu0 0.0
    %205 = vmatpush1.msra.mxu0 0.0
    %206 = vmatprep.subr.mxu0 0.0
    %207 = vmatpush1.msra.mxu0 0.0
    %208 = vmatprep.subr.mxu0 0.0
    %209 = vmatpush1.msra.mxu0 0.0
    %210 = vmatprep.subr.mxu0 0.0
    %211 = vmatpush1.msra.mxu0 0.0
    %212 = vmatprep.subr.mxu0 0.0
    %213 = vmatpush1.msra.mxu0 0.0
    %214 = vmatprep.subr.mxu0 0.0
    %215 = vmatpush1.msra.mxu0 0.0
    %216 = vmatprep.subr.mxu0 0.0
    %217 = vmatpush1.msra.mxu0 0.0
    %218 = vmatprep.subr.mxu0 0.0
    %219 = vmatpush1.msra.mxu0 0.0
    %220 = vmatprep.subr.mxu0 0.0
    %221 = vmatpush1.msra.mxu0 0.0
    %222 = vmatprep.subr.mxu0 0.0
    %223 = vmatpush1.msra.mxu0 0.0
    %224 = vmatprep.subr.mxu0 0.0
    %225 = vmatpush1.msra.mxu0 0.0
    %226 = vmatprep.subr.mxu0 0.0
    %227 = vmatpush1.msra.mxu0 0.0
    %228 = vmatprep.subr.mxu0 0.0
    %229 = vmatpush1.msra.mxu0 0.0
    %230 = vmatprep.subr.mxu0 0.0
    %231 = vmatpush1.msra.mxu0 0.0
    %232 = vmatprep.subr.mxu0 0.0
    %233 = vmatpush1.msra.mxu0 0.0
    %234 = vmatprep.subr.mxu0 0.0
    %235 = vmatpush1.msra.mxu0 0.0
    %236 = vmatprep.subr.mxu0 0.0
    %237 = vmatpush1.msra.mxu0 0.0
    %238 = vmatprep.subr.mxu0 0.0
    %239 = vmatpush1.msra.mxu0 0.0
    %240 = vmatprep.subr.mxu0 0.0
    %241 = vmatpush1.msra.mxu0 0.0
    %242 = vmatprep.subr.mxu0 0.0
    %243 = vmatpush1.msra.mxu0 0.0
    %244 = vmatprep.subr.mxu0 0.0
    %245 = vmatpush1.msra.mxu0 0.0
    %246 = vmatprep.subr.mxu0 0.0
    %247 = vmatpush1.msra.mxu0 0.0
    %248 = vmatprep.subr.mxu0 0.0
    %249 = vmatpush1.msra.mxu0 0.0
    %250 = vmatprep.subr.mxu0 0.0
    %251 = vmatpush1.msra.mxu0 0.0
    %252 = vmatprep.subr.mxu0 0.0
    %253 = vmatpush1.msra.mxu0 0.0
    %254 = vmatprep.subr.mxu0 0.0
    %255 = vmatpush1.msra.mxu0 0.0
    %256 = vmatprep.subr.mxu0 0.0
    %257 = vmatpush1.msra.mxu0 0.0
    %258 = vmatprep.subr.mxu0 0.0
    %259 = vmatpush1.msra.mxu0 0.0
    %260 = vmatprep.mubr.f32.mxu0 0.0
    %261 = vmatmul.mubr.f32.gmra.mrb[0].mxu0 %v191
    %v262 = vpop.f32.mrb[0].mxu0
    %v263 = vadd.f32 %v188, %v262
    %v264 = vpop.f32.mrb[0].mxu0
    %265 = vmatprep.mubr.f32.mxu0 0.0
    %266 = vmatmul.mubr.f32.gmra.mrb[0].mxu0 %v194
    %v267 = vpop.f32.mrb[0].mxu0
    %v268 = vadd.f32 %v188, %v267
    %v269 = vpop.f32.mrb[0].mxu0
    %270 = vdwg.mxu0
    %s271 = scalar_lea.vmem [#allocation5], 32
    %v272 = vld [vmem:[%s271] sm:$0xff]
    %v273 = vld [vmem:[%s271 + $0x8] sm:$0xff]
    %v274 = vld [vmem:[%s271 + $0x10] sm:$0xff]
    %v275 = vld [vmem:[%s271 + $0x18] sm:$0xff]
    %v276 = vlaneseq
    %v277 = vshrl.u32 %v276, 7
    %v278 = vsub.s32 0, %v277
    %v279 = vrot.slane %v172, %v278
    %280 = vmatprep.subr.mxu0 0.0
    %281 = vmatpush1.msra.mxu0 %v272
    %282 = vmatprep.subr.mxu0 0.0
    %283 = vmatpush1.msra.mxu0 %v273
    %284 = vmatprep.subr.mxu0 0.0
    %285 = vmatpush1.msra.mxu0 %v274
    %286 = vmatprep.subr.mxu0 0.0
    %287 = vmatpush1.msra.mxu0 %v275
    %288 = vmatprep.subr.mxu0 0.0
    %289 = vmatpush1.msra.mxu0 0.0
    %290 = vmatprep.subr.mxu0 0.0
    %291 = vmatpush1.msra.mxu0 0.0
    %292 = vmatprep.subr.mxu0 0.0
    %293 = vmatpush1.msra.mxu0 0.0
    %294 = vmatprep.subr.mxu0 0.0
    %295 = vmatpush1.msra.mxu0 0.0
    %296 = vmatprep.subr.mxu0 0.0
    %297 = vmatpush1.msra.mxu0 0.0
    %298 = vmatprep.subr.mxu0 0.0
    %299 = vmatpush1.msra.mxu0 0.0
    %300 = vmatprep.subr.mxu0 0.0
    %301 = vmatpush1.msra.mxu0 0.0
    %302 = vmatprep.subr.mxu0 0.0
    %303 = vmatpush1.msra.mxu0 0.0
    %304 = vmatprep.subr.mxu0 0.0
    %305 = vmatpush1.msra.mxu0 0.0
    %306 = vmatprep.subr.mxu0 0.0
    %307 = vmatpush1.msra.mxu0 0.0
    %308 = vmatprep.subr.mxu0 0.0
    %309 = vmatpush1.msra.mxu0 0.0
    %310 = vmatprep.subr.mxu0 0.0
    %311 = vmatpush1.msra.mxu0 0.0
    %312 = vmatprep.subr.mxu0 0.0
    %313 = vmatpush1.msra.mxu0 0.0
    %314 = vmatprep.subr.mxu0 0.0
    %315 = vmatpush1.msra.mxu0 0.0
    %316 = vmatprep.subr.mxu0 0.0
    %317 = vmatpush1.msra.mxu0 0.0
    %318 = vmatprep.subr.mxu0 0.0
    %319 = vmatpush1.msra.mxu0 0.0
    %320 = vmatprep.subr.mxu0 0.0
    %321 = vmatpush1.msra.mxu0 0.0
    %322 = vmatprep.subr.mxu0 0.0
    %323 = vmatpush1.msra.mxu0 0.0
    %324 = vmatprep.subr.mxu0 0.0
    %325 = vmatpush1.msra.mxu0 0.0
    %326 = vmatprep.subr.mxu0 0.0
    %327 = vmatpush1.msra.mxu0 0.0
    %328 = vmatprep.subr.mxu0 0.0
    %329 = vmatpush1.msra.mxu0 0.0
    %330 = vmatprep.subr.mxu0 0.0
    %331 = vmatpush1.msra.mxu0 0.0
    %332 = vmatprep.subr.mxu0 0.0
    %333 = vmatpush1.msra.mxu0 0.0
    %334 = vmatprep.subr.mxu0 0.0
    %335 = vmatpush1.msra.mxu0 0.0
    %336 = vmatprep.subr.mxu0 0.0
    %337 = vmatpush1.msra.mxu0 0.0
    %338 = vmatprep.subr.mxu0 0.0
    %339 = vmatpush1.msra.mxu0 0.0
    %340 = vmatprep.subr.mxu0 0.0
    %341 = vmatpush1.msra.mxu0 0.0
    %342 = vmatprep.subr.mxu0 0.0
    %343 = vmatpush1.msra.mxu0 0.0
    %344 = vmatprep.mubr.f32.mxu0 0.0
    %345 = vmatmul.mubr.f32.gmra.mrb[0].mxu0 %v191
    %v346 = vpop.f32.mrb[0].mxu0
    %v347 = vadd.f32 %v279, %v346
    %v348 = vpop.f32.mrb[0].mxu0
    %349 = vmatprep.mubr.f32.mxu0 0.0
    %350 = vmatmul.mubr.f32.gmra.mrb[0].mxu0 %v194
    %v351 = vpop.f32.mrb[0].mxu0
    %v352 = vadd.f32 %v279, %v351
    %v353 = vpop.f32.mrb[0].mxu0
    %354 = vdwg.mxu0
    %v355 = vmul.f32 %v263, %v155
    %v356 = vmul.f32 %v268, %v155
    %v358 = vsel %vm189, %v355, 0
    %v361 = vsel %vm189, %v356, 0
    %v364 = vsel %vm189, %v347, 0
    %v367 = vsel %vm189, %v352, 0
    %369 = vmatprep.subr.mxu0 0.0
    %370 = vmatpush1.xpose.msra.mxu0 %v364
    %371 = vmatprep.subr.mxu0 0.0
    %372 = vmatpush1.xpose.msra.mxu0 %v367
    %373 = vmatprep.subr.mxu0 0.0
    %374 = vmatpush1.xpose.msra.mxu0 0.0
    %375 = vmatprep.subr.mxu0 0.0
    %376 = vmatpush1.xpose.msra.mxu0 0.0
    %377 = vmatprep.subr.mxu0 0.0
    %378 = vmatpush1.xpose.msra.mxu0 0.0
    %379 = vmatprep.subr.mxu0 0.0
    %380 = vmatpush1.xpose.msra.mxu0 0.0
    %381 = vmatprep.subr.mxu0 0.0
    %382 = vmatpush1.xpose.msra.mxu0 0.0
    %383 = vmatprep.subr.mxu0 0.0
    %384 = vmatpush1.xpose.msra.mxu0 0.0
    %385 = vmatprep.subr.mxu0 0.0
    %386 = vmatpush1.xpose.msra.mxu0 0.0
    %387 = vmatprep.subr.mxu0 0.0
    %388 = vmatpush1.xpose.msra.mxu0 0.0
    %389 = vmatprep.subr.mxu0 0.0
    %390 = vmatpush1.xpose.msra.mxu0 0.0
    %391 = vmatprep.subr.mxu0 0.0
    %392 = vmatpush1.xpose.msra.mxu0 0.0
    %393 = vmatprep.subr.mxu0 0.0
    %394 = vmatpush1.xpose.msra.mxu0 0.0
    %395 = vmatprep.subr.mxu0 0.0
    %396 = vmatpush1.xpose.msra.mxu0 0.0
    %397 = vmatprep.subr.mxu0 0.0
    %398 = vmatpush1.xpose.msra.mxu0 0.0
    %399 = vmatprep.subr.mxu0 0.0
    %400 = vmatpush1.xpose.msra.mxu0 0.0
    %401 = vmatprep.subr.mxu0 0.0
    %402 = vmatpush1.xpose.msra.mxu0 0.0
    %403 = vmatprep.subr.mxu0 0.0
    %404 = vmatpush1.xpose.msra.mxu0 0.0
    %405 = vmatprep.subr.mxu0 0.0
    %406 = vmatpush1.xpose.msra.mxu0 0.0
    %407 = vmatprep.subr.mxu0 0.0
    %408 = vmatpush1.xpose.msra.mxu0 0.0
    %409 = vmatprep.subr.mxu0 0.0
    %410 = vmatpush1.xpose.msra.mxu0 0.0
    %411 = vmatprep.subr.mxu0 0.0
    %412 = vmatpush1.xpose.msra.mxu0 0.0
    %413 = vmatprep.subr.mxu0 0.0
    %414 = vmatpush1.xpose.msra.mxu0 0.0
    %415 = vmatprep.subr.mxu0 0.0
    %416 = vmatpush1.xpose.msra.mxu0 0.0
    %417 = vmatprep.subr.mxu0 0.0
    %418 = vmatpush1.xpose.msra.mxu0 0.0
    %419 = vmatprep.subr.mxu0 0.0
    %420 = vmatpush1.xpose.msra.mxu0 0.0
    %421 = vmatprep.subr.mxu0 0.0
    %422 = vmatpush1.xpose.msra.mxu0 0.0
    %423 = vmatprep.subr.mxu0 0.0
    %424 = vmatpush1.xpose.msra.mxu0 0.0
    %425 = vmatprep.subr.mxu0 0.0
    %426 = vmatpush1.xpose.msra.mxu0 0.0
    %427 = vmatprep.subr.mxu0 0.0
    %428 = vmatpush1.xpose.msra.mxu0 0.0
    %429 = vmatprep.subr.mxu0 0.0
    %430 = vmatpush1.xpose.msra.mxu0 0.0
    %431 = vmatprep.subr.mxu0 0.0
    %432 = vmatpush1.xpose.msra.mxu0 0.0
    %433 = vmatprep.mubr.f32.mxu0 0.0
    %434 = vmatmul.mubr.f32.gmra.mrb[0].mxu0 %v358
    %v435 = vpop.f32.mrb[0].mxu0
    %v436 = vadd.f32 0.0, %v435
    %v437 = vpop.f32.mrb[0].mxu0
    %438 = vmatprep.mubr.f32.mxu0 0.0
    %439 = vmatmul.mubr.f32.gmra.mrb[0].mxu0 %v361
    %v440 = vpop.f32.mrb[0].mxu0
    %v441 = vadd.f32 0.0, %v440
    %v442 = vpop.f32.mrb[0].mxu0
    %443 = vdwg.mxu0
    %v444 = vmul.f32 %v436, 0.35355338
    %v445 = vmul.f32 %v441, 0.35355338
    %v446 = vadd.f32 %v444, %v149
    %v447 = vadd.f32 %v445, %v150
    %v448 = vmul.f32 %v446, 1.442695
    %v449 = vpow.pop %v448
    %v450 = vmul.f32 %v447, 1.442695
    %v451 = vpow.pop %v450
    %vm452 = vcmask 130048
    %v453 = vsel %vm452, %v449, 0.0
    %454 = vadd.xlane.f32.xlu0 %v453
    %v455 = vpop.xlane.xlu0 %454
    %v456 = vsel %vm452, %v451, 0.0
    %457 = vadd.xlane.f32.xlu0 %v456
    %v458 = vpop.xlane.xlu0 %457
    %v459 = vrcp.pop %v455
    %v460 = vrcp.pop %v458
    %v461 = vmul.f32 %v449, %v459
    %v462 = vmul.f32 %v451, %v460
    %s463 = scalar_lea.vmem [#allocation5], 64
    %v464 = vld [vmem:[%s463] sm:$0xff]
    %v465 = vld [vmem:[%s463 + $0x8] sm:$0xff]
    %v466 = vld [vmem:[%s463 + $0x10] sm:$0xff]
    %v467 = vld [vmem:[%s463 + $0x18] sm:$0xff]
    %468 = vmatprep.subr.mxu0 0.0
    %469 = vmatpush1.msra.mxu0 %v464
    %470 = vmatprep.subr.mxu0 0.0
    %471 = vmatpush1.msra.mxu0 %v465
    %472 = vmatprep.subr.mxu0 0.0
    %473 = vmatpush1.msra.mxu0 %v466
    %474 = vmatprep.subr.mxu0 0.0
    %475 = vmatpush1.msra.mxu0 %v467
    %476 = vmatprep.subr.mxu0 0.0
    %477 = vmatpush1.msra.mxu0 0.0
    %478 = vmatprep.subr.mxu0 0.0
    %479 = vmatpush1.msra.mxu0 0.0
    %480 = vmatprep.subr.mxu0 0.0
    %481 = vmatpush1.msra.mxu0 0.0
    %482 = vmatprep.subr.mxu0 0.0
    %483 = vmatpush1.msra.mxu0 0.0
    %484 = vmatprep.subr.mxu0 0.0
    %485 = vmatpush1.msra.mxu0 0.0
    %486 = vmatprep.subr.mxu0 0.0
    %487 = vmatpush1.msra.mxu0 0.0
    %488 = vmatprep.subr.mxu0 0.0
    %489 = vmatpush1.msra.mxu0 0.0
    %490 = vmatprep.subr.mxu0 0.0
    %491 = vmatpush1.msra.mxu0 0.0
    %492 = vmatprep.subr.mxu0 0.0
    %493 = vmatpush1.msra.mxu0 0.0
    %494 = vmatprep.subr.mxu0 0.0
    %495 = vmatpush1.msra.mxu0 0.0
    %496 = vmatprep.subr.mxu0 0.0
    %497 = vmatpush1.msra.mxu0 0.0
    %498 = vmatprep.subr.mxu0 0.0
    %499 = vmatpush1.msra.mxu0 0.0
    %500 = vmatprep.subr.mxu0 0.0
    %501 = vmatpush1.msra.mxu0 0.0
    %502 = vmatprep.subr.mxu0 0.0
    %503 = vmatpush1.msra.mxu0 0.0
    %504 = vmatprep.subr.mxu0 0.0
    %505 = vmatpush1.msra.mxu0 0.0
    %506 = vmatprep.subr.mxu0 0.0
    %507 = vmatpush1.msra.mxu0 0.0
    %508 = vmatprep.subr.mxu0 0.0
    %509 = vmatpush1.msra.mxu0 0.0
    %510 = vmatprep.subr.mxu0 0.0
    %511 = vmatpush1.msra.mxu0 0.0
    %512 = vmatprep.subr.mxu0 0.0
    %513 = vmatpush1.msra.mxu0 0.0
    %514 = vmatprep.subr.mxu0 0.0
    %515 = vmatpush1.msra.mxu0 0.0
    %516 = vmatprep.subr.mxu0 0.0
    %517 = vmatpush1.msra.mxu0 0.0
    %518 = vmatprep.subr.mxu0 0.0
    %519 = vmatpush1.msra.mxu0 0.0
    %520 = vmatprep.subr.mxu0 0.0
    %521 = vmatpush1.msra.mxu0 0.0
    %522 = vmatprep.subr.mxu0 0.0
    %523 = vmatpush1.msra.mxu0 0.0
    %524 = vmatprep.subr.mxu0 0.0
    %525 = vmatpush1.msra.mxu0 0.0
    %526 = vmatprep.subr.mxu0 0.0
    %527 = vmatpush1.msra.mxu0 0.0
    %528 = vmatprep.subr.mxu0 0.0
    %529 = vmatpush1.msra.mxu0 0.0
    %530 = vmatprep.subr.mxu0 0.0
    %531 = vmatpush1.msra.mxu0 0.0
    %532 = vmatprep.mubr.f32.mxu0 0.0
    %533 = vmatmul.mubr.f32.gmra.mrb[0].mxu0 %v191
    %v534 = vpop.f32.mrb[0].mxu0
    %v535 = vadd.f32 0.0, %v534
    %v536 = vpop.f32.mrb[0].mxu0
    %537 = vmatprep.mubr.f32.mxu0 0.0
    %538 = vmatmul.mubr.f32.gmra.mrb[0].mxu0 %v194
    %v539 = vpop.f32.mrb[0].mxu0
    %v540 = vadd.f32 0.0, %v539
    %v541 = vpop.f32.mrb[0].mxu0
    %542 = vdwg.mxu0
    %v543 = vmul.f32 %v263, %v160
    %v544 = vmul.f32 %v268, %v160
    %v546 = vsel %vm189, %v543, 0
    %v549 = vsel %vm189, %v544, 0
    %551 = vmatprep.subr.mxu0 0.0
    %552 = vmatpush1.xpose.msra.mxu0 %v364
    %553 = vmatprep.subr.mxu0 0.0
    %554 = vmatpush1.xpose.msra.mxu0 %v367
    %555 = vmatprep.subr.mxu0 0.0
    %556 = vmatpush1.xpose.msra.mxu0 0.0
    %557 = vmatprep.subr.mxu0 0.0
    %558 = vmatpush1.xpose.msra.mxu0 0.0
    %559 = vmatprep.subr.mxu0 0.0
    %560 = vmatpush1.xpose.msra.mxu0 0.0
    %561 = vmatprep.subr.mxu0 0.0
    %562 = vmatpush1.xpose.msra.mxu0 0.0
    %563 = vmatprep.subr.mxu0 0.0
    %564 = vmatpush1.xpose.msra.mxu0 0.0
    %565 = vmatprep.subr.mxu0 0.0
    %566 = vmatpush1.xpose.msra.mxu0 0.0
    %567 = vmatprep.subr.mxu0 0.0
    %568 = vmatpush1.xpose.msra.mxu0 0.0
    %569 = vmatprep.subr.mxu0 0.0
    %570 = vmatpush1.xpose.msra.mxu0 0.0
    %571 = vmatprep.subr.mxu0 0.0
    %572 = vmatpush1.xpose.msra.mxu0 0.0
    %573 = vmatprep.subr.mxu0 0.0
    %574 = vmatpush1.xpose.msra.mxu0 0.0
    %575 = vmatprep.subr.mxu0 0.0
    %576 = vmatpush1.xpose.msra.mxu0 0.0
    %577 = vmatprep.subr.mxu0 0.0
    %578 = vmatpush1.xpose.msra.mxu0 0.0
    %579 = vmatprep.subr.mxu0 0.0
    %580 = vmatpush1.xpose.msra.mxu0 0.0
    %581 = vmatprep.subr.mxu0 0.0
    %582 = vmatpush1.xpose.msra.mxu0 0.0
    %583 = vmatprep.subr.mxu0 0.0
    %584 = vmatpush1.xpose.msra.mxu0 0.0
    %585 = vmatprep.subr.mxu0 0.0
    %586 = vmatpush1.xpose.msra.mxu0 0.0
    %587 = vmatprep.subr.mxu0 0.0
    %588 = vmatpush1.xpose.msra.mxu0 0.0
    %589 = vmatprep.subr.mxu0 0.0
    %590 = vmatpush1.xpose.msra.mxu0 0.0
    %591 = vmatprep.subr.mxu0 0.0
    %592 = vmatpush1.xpose.msra.mxu0 0.0
    %593 = vmatprep.subr.mxu0 0.0
    %594 = vmatpush1.xpose.msra.mxu0 0.0
    %595 = vmatprep.subr.mxu0 0.0
    %596 = vmatpush1.xpose.msra.mxu0 0.0
    %597 = vmatprep.subr.mxu0 0.0
    %598 = vmatpush1.xpose.msra.mxu0 0.0
    %599 = vmatprep.subr.mxu0 0.0
    %600 = vmatpush1.xpose.msra.mxu0 0.0
    %601 = vmatprep.subr.mxu0 0.0
    %602 = vmatpush1.xpose.msra.mxu0 0.0
    %603 = vmatprep.subr.mxu0 0.0
    %604 = vmatpush1.xpose.msra.mxu0 0.0
    %605 = vmatprep.subr.mxu0 0.0
    %606 = vmatpush1.xpose.msra.mxu0 0.0
    %607 = vmatprep.subr.mxu0 0.0
    %608 = vmatpush1.xpose.msra.mxu0 0.0
    %609 = vmatprep.subr.mxu0 0.0
    %610 = vmatpush1.xpose.msra.mxu0 0.0
    %611 = vmatprep.subr.mxu0 0.0
    %612 = vmatpush1.xpose.msra.mxu0 0.0
    %613 = vmatprep.subr.mxu0 0.0
    %614 = vmatpush1.xpose.msra.mxu0 0.0
    %615 = vmatprep.mubr.f32.mxu0 0.0
    %616 = vmatmul.mubr.f32.gmra.mrb[0].mxu0 %v546
    %v617 = vpop.f32.mrb[0].mxu0
    %v618 = vadd.f32 0.0, %v617
    %v619 = vpop.f32.mrb[0].mxu0
    %620 = vmatprep.mubr.f32.mxu0 0.0
    %621 = vmatmul.mubr.f32.gmra.mrb[0].mxu0 %v549
    %v622 = vpop.f32.mrb[0].mxu0
    %v623 = vadd.f32 0.0, %v622
    %v624 = vpop.f32.mrb[0].mxu0
    %625 = vdwg.mxu0
    %v626 = vmul.f32 %v618, 0.35355338
    %v627 = vmul.f32 %v623, 0.35355338
    %v628 = vadd.f32 %v626, %v149
    %v629 = vadd.f32 %v627, %v150
    %v630 = vmul.f32 %v628, 1.442695
    %v631 = vpow.pop %v630
    %v632 = vmul.f32 %v629, 1.442695
    %v633 = vpow.pop %v632
    %v634 = vsel %vm452, %v631, 0.0
    %635 = vadd.xlane.f32.xlu0 %v634
    %v636 = vpop.xlane.xlu0 %635
    %v637 = vsel %vm452, %v633, 0.0
    %638 = vadd.xlane.f32.xlu0 %v637
    %v639 = vpop.xlane.xlu0 %638
    %v640 = vrcp.pop %v636
    %v641 = vrcp.pop %v639
    %v642 = vmul.f32 %v631, %v640
    %v643 = vmul.f32 %v633, %v641
    %s644 = scalar_lea.vmem [#allocation5], 96
    %v645 = vld [vmem:[%s644] sm:$0xff]
    %v646 = vld [vmem:[%s644 + $0x8] sm:$0xff]
    %v647 = vld [vmem:[%s644 + $0x10] sm:$0xff]
    %v648 = vld [vmem:[%s644 + $0x18] sm:$0xff]
    %649 = vmatprep.subr.mxu0 0.0
    %650 = vmatpush1.msra.mxu0 %v645
    %651 = vmatprep.subr.mxu0 0.0
    %652 = vmatpush1.msra.mxu0 %v646
    %653 = vmatprep.subr.mxu0 0.0
    %654 = vmatpush1.msra.mxu0 %v647
    %655 = vmatprep.subr.mxu0 0.0
    %656 = vmatpush1.msra.mxu0 %v648
    %657 = vmatprep.subr.mxu0 0.0
    %658 = vmatpush1.msra.mxu0 0.0
    %659 = vmatprep.subr.mxu0 0.0
    %660 = vmatpush1.msra.mxu0 0.0
    %661 = vmatprep.subr.mxu0 0.0
    %662 = vmatpush1.msra.mxu0 0.0
    %663 = vmatprep.subr.mxu0 0.0
    %664 = vmatpush1.msra.mxu0 0.0
    %665 = vmatprep.subr.mxu0 0.0
    %666 = vmatpush1.msra.mxu0 0.0
    %667 = vmatprep.subr.mxu0 0.0
    %668 = vmatpush1.msra.mxu0 0.0
    %669 = vmatprep.subr.mxu0 0.0
    %670 = vmatpush1.msra.mxu0 0.0
    %671 = vmatprep.subr.mxu0 0.0
    %672 = vmatpush1.msra.mxu0 0.0
    %673 = vmatprep.subr.mxu0 0.0
    %674 = vmatpush1.msra.mxu0 0.0
    %675 = vmatprep.subr.mxu0 0.0
    %676 = vmatpush1.msra.mxu0 0.0
    %677 = vmatprep.subr.mxu0 0.0
    %678 = vmatpush1.msra.mxu0 0.0
    %679 = vmatprep.subr.mxu0 0.0
    %680 = vmatpush1.msra.mxu0 0.0
    %681 = vmatprep.subr.mxu0 0.0
    %682 = vmatpush1.msra.mxu0 0.0
    %683 = vmatprep.subr.mxu0 0.0
    %684 = vmatpush1.msra.mxu0 0.0
    %685 = vmatprep.subr.mxu0 0.0
    %686 = vmatpush1.msra.mxu0 0.0
    %687 = vmatprep.subr.mxu0 0.0
    %688 = vmatpush1.msra.mxu0 0.0
    %689 = vmatprep.subr.mxu0 0.0
    %690 = vmatpush1.msra.mxu0 0.0
    %691 = vmatprep.subr.mxu0 0.0
    %692 = vmatpush1.msra.mxu0 0.0
    %693 = vmatprep.subr.mxu0 0.0
    %694 = vmatpush1.msra.mxu0 0.0
    %695 = vmatprep.subr.mxu0 0.0
    %696 = vmatpush1.msra.mxu0 0.0
    %697 = vmatprep.subr.mxu0 0.0
    %698 = vmatpush1.msra.mxu0 0.0
    %699 = vmatprep.subr.mxu0 0.0
    %700 = vmatpush1.msra.mxu0 0.0
    %701 = vmatprep.subr.mxu0 0.0
    %702 = vmatpush1.msra.mxu0 0.0
    %703 = vmatprep.subr.mxu0 0.0
    %704 = vmatpush1.msra.mxu0 0.0
    %705 = vmatprep.subr.mxu0 0.0
    %706 = vmatpush1.msra.mxu0 0.0
    %707 = vmatprep.subr.mxu0 0.0
    %708 = vmatpush1.msra.mxu0 0.0
    %709 = vmatprep.subr.mxu0 0.0
    %710 = vmatpush1.msra.mxu0 0.0
    %711 = vmatprep.subr.mxu0 0.0
    %712 = vmatpush1.msra.mxu0 0.0
    %713 = vmatprep.mubr.f32.mxu0 0.0
    %714 = vmatmul.mubr.f32.gmra.mrb[0].mxu0 %v191
    %v715 = vpop.f32.mrb[0].mxu0
    %v716 = vadd.f32 0.0, %v715
    %v717 = vpop.f32.mrb[0].mxu0
    %718 = vmatprep.mubr.f32.mxu0 0.0
    %719 = vmatmul.mubr.f32.gmra.mrb[0].mxu0 %v194
    %v720 = vpop.f32.mrb[0].mxu0
    %v721 = vadd.f32 0.0, %v720
    %v722 = vpop.f32.mrb[0].mxu0
    %723 = vdwg.mxu0
    %v725 = vsel %vm452, %v642, 0
    %v728 = vsel %vm452, %v643, 0
    %730 = vmatprep.subr.mxu0 0.0
    %731 = vmatpush1.msra.mxu0 %v716
    %732 = vmatprep.subr.mxu0 0.0
    %733 = vmatpush1.msra.mxu0 %v721
    %734 = vmatprep.subr.mxu0 0.0
    %735 = vmatpush1.msra.mxu0 0.0
    %736 = vmatprep.subr.mxu0 0.0
    %737 = vmatpush1.msra.mxu0 0.0
    %738 = vmatprep.subr.mxu0 0.0
    %739 = vmatpush1.msra.mxu0 0.0
    %740 = vmatprep.subr.mxu0 0.0
    %741 = vmatpush1.msra.mxu0 0.0
    %742 = vmatprep.subr.mxu0 0.0
    %743 = vmatpush1.msra.mxu0 0.0
    %744 = vmatprep.subr.mxu0 0.0
    %745 = vmatpush1.msra.mxu0 0.0
    %746 = vmatprep.subr.mxu0 0.0
    %747 = vmatpush1.msra.mxu0 0.0
    %748 = vmatprep.subr.mxu0 0.0
    %749 = vmatpush1.msra.mxu0 0.0
    %750 = vmatprep.subr.mxu0 0.0
    %751 = vmatpush1.msra.mxu0 0.0
    %752 = vmatprep.subr.mxu0 0.0
    %753 = vmatpush1.msra.mxu0 0.0
    %754 = vmatprep.subr.mxu0 0.0
    %755 = vmatpush1.msra.mxu0 0.0
    %756 = vmatprep.subr.mxu0 0.0
    %757 = vmatpush1.msra.mxu0 0.0
    %758 = vmatprep.subr.mxu0 0.0
    %759 = vmatpush1.msra.mxu0 0.0
    %760 = vmatprep.subr.mxu0 0.0
    %761 = vmatpush1.msra.mxu0 0.0
    %762 = vmatprep.subr.mxu0 0.0
    %763 = vmatpush1.msra.mxu0 0.0
    %764 = vmatprep.subr.mxu0 0.0
    %765 = vmatpush1.msra.mxu0 0.0
    %766 = vmatprep.subr.mxu0 0.0
    %767 = vmatpush1.msra.mxu0 0.0
    %768 = vmatprep.subr.mxu0 0.0
    %769 = vmatpush1.msra.mxu0 0.0
    %770 = vmatprep.subr.mxu0 0.0
    %771 = vmatpush1.msra.mxu0 0.0
    %772 = vmatprep.subr.mxu0 0.0
    %773 = vmatpush1.msra.mxu0 0.0
    %774 = vmatprep.subr.mxu0 0.0
    %775 = vmatpush1.msra.mxu0 0.0
    %776 = vmatprep.subr.mxu0 0.0
    %777 = vmatpush1.msra.mxu0 0.0
    %778 = vmatprep.subr.mxu0 0.0
    %779 = vmatpush1.msra.mxu0 0.0
    %780 = vmatprep.subr.mxu0 0.0
    %781 = vmatpush1.msra.mxu0 0.0
    %782 = vmatprep.subr.mxu0 0.0
    %783 = vmatpush1.msra.mxu0 0.0
    %784 = vmatprep.subr.mxu0 0.0
    %785 = vmatpush1.msra.mxu0 0.0
    %786 = vmatprep.subr.mxu0 0.0
    %787 = vmatpush1.msra.mxu0 0.0
    %788 = vmatprep.subr.mxu0 0.0
    %789 = vmatpush1.msra.mxu0 0.0
    %790 = vmatprep.subr.mxu0 0.0
    %791 = vmatpush1.msra.mxu0 0.0
    %792 = vmatprep.subr.mxu0 0.0
    %793 = vmatpush1.msra.mxu0 0.0
    %794 = vmatprep.mubr.f32.mxu0 0.0
    %795 = vmatmul.mubr.f32.gmra.mrb[0].mxu0 %v725
    %v796 = vpop.f32.mrb[0].mxu0
    %v797 = vadd.f32 0.0, %v796
    %v798 = vpop.f32.mrb[0].mxu0
    %799 = vmatprep.mubr.f32.mxu0 0.0
    %800 = vmatmul.mubr.f32.gmra.mrb[0].mxu0 %v728
    %v801 = vpop.f32.mrb[0].mxu0
    %v802 = vadd.f32 0.0, %v801
    %v803 = vpop.f32.mrb[0].mxu0
    %804 = vdwg.mxu0
    %v806 = vsel %vm452, %v461, 0
    %v809 = vsel %vm452, %v462, 0
    %811 = vmatprep.subr.mxu0 0.0
    %812 = vmatpush1.msra.mxu0 %v535
    %813 = vmatprep.subr.mxu0 0.0
    %814 = vmatpush1.msra.mxu0 %v540
    %815 = vmatprep.subr.mxu0 0.0
    %816 = vmatpush1.msra.mxu0 0.0
    %817 = vmatprep.subr.mxu0 0.0
    %818 = vmatpush1.msra.mxu0 0.0
    %819 = vmatprep.subr.mxu0 0.0
    %820 = vmatpush1.msra.mxu0 0.0
    %821 = vmatprep.subr.mxu0 0.0
    %822 = vmatpush1.msra.mxu0 0.0
    %823 = vmatprep.subr.mxu0 0.0
    %824 = vmatpush1.msra.mxu0 0.0
    %825 = vmatprep.subr.mxu0 0.0
    %826 = vmatpush1.msra.mxu0 0.0
    %827 = vmatprep.subr.mxu0 0.0
    %828 = vmatpush1.msra.mxu0 0.0
    %829 = vmatprep.subr.mxu0 0.0
    %830 = vmatpush1.msra.mxu0 0.0
    %831 = vmatprep.subr.mxu0 0.0
    %832 = vmatpush1.msra.mxu0 0.0
    %833 = vmatprep.subr.mxu0 0.0
    %834 = vmatpush1.msra.mxu0 0.0
    %835 = vmatprep.subr.mxu0 0.0
    %836 = vmatpush1.msra.mxu0 0.0
    %837 = vmatprep.subr.mxu0 0.0
    %838 = vmatpush1.msra.mxu0 0.0
    %839 = vmatprep.subr.mxu0 0.0
    %840 = vmatpush1.msra.mxu0 0.0
    %841 = vmatprep.subr.mxu0 0.0
    %842 = vmatpush1.msra.mxu0 0.0
    %843 = vmatprep.subr.mxu0 0.0
    %844 = vmatpush1.msra.mxu0 0.0
    %845 = vmatprep.subr.mxu0 0.0
    %846 = vmatpush1.msra.mxu0 0.0
    %847 = vmatprep.subr.mxu0 0.0
    %848 = vmatpush1.msra.mxu0 0.0
    %849 = vmatprep.subr.mxu0 0.0
    %850 = vmatpush1.msra.mxu0 0.0
    %851 = vmatprep.subr.mxu0 0.0
    %852 = vmatpush1.msra.mxu0 0.0
    %853 = vmatprep.subr.mxu0 0.0
    %854 = vmatpush1.msra.mxu0 0.0
    %855 = vmatprep.subr.mxu0 0.0
    %856 = vmatpush1.msra.mxu0 0.0
    %857 = vmatprep.subr.mxu0 0.0
    %858 = vmatpush1.msra.mxu0 0.0
    %859 = vmatprep.subr.mxu0 0.0
    %860 = vmatpush1.msra.mxu0 0.0
    %861 = vmatprep.subr.mxu0 0.0
    %862 = vmatpush1.msra.mxu0 0.0
    %863 = vmatprep.subr.mxu0 0.0
    %864 = vmatpush1.msra.mxu0 0.0
    %865 = vmatprep.subr.mxu0 0.0
    %866 = vmatpush1.msra.mxu0 0.0
    %867 = vmatprep.subr.mxu0 0.0
    %868 = vmatpush1.msra.mxu0 0.0
    %869 = vmatprep.subr.mxu0 0.0
    %870 = vmatpush1.msra.mxu0 0.0
    %871 = vmatprep.subr.mxu0 0.0
    %872 = vmatpush1.msra.mxu0 0.0
    %873 = vmatprep.subr.mxu0 0.0
    %874 = vmatpush1.msra.mxu0 0.0
    %875 = vmatprep.mubr.f32.mxu0 0.0
    %876 = vmatmul.mubr.f32.gmra.mrb[0].mxu0 %v806
    %v877 = vpop.f32.mrb[0].mxu0
    %v878 = vadd.f32 %v797, %v877
    %v879 = vpop.f32.mrb[0].mxu0
    %880 = vmatprep.mubr.f32.mxu0 0.0
    %881 = vmatmul.mubr.f32.gmra.mrb[0].mxu0 %v809
    %v882 = vpop.f32.mrb[0].mxu0
    %v883 = vadd.f32 %v802, %v882
    %v884 = vpop.f32.mrb[0].mxu0
    %885 = vdwg.mxu0
    %v886 = vmul.f32 %v263, %v165
    %v887 = vmul.f32 %v268, %v165
    %v889 = vsel %vm189, %v886, 0
    %v892 = vsel %vm189, %v887, 0
    %894 = vmatprep.subr.mxu0 0.0
    %895 = vmatpush1.xpose.msra.mxu0 %v364
    %896 = vmatprep.subr.mxu0 0.0
    %897 = vmatpush1.xpose.msra.mxu0 %v367
    %898 = vmatprep.subr.mxu0 0.0
    %899 = vmatpush1.xpose.msra.mxu0 0.0
    %900 = vmatprep.subr.mxu0 0.0
    %901 = vmatpush1.xpose.msra.mxu0 0.0
    %902 = vmatprep.subr.mxu0 0.0
    %903 = vmatpush1.xpose.msra.mxu0 0.0
    %904 = vmatprep.subr.mxu0 0.0
    %905 = vmatpush1.xpose.msra.mxu0 0.0
    %906 = vmatprep.subr.mxu0 0.0
    %907 = vmatpush1.xpose.msra.mxu0 0.0
    %908 = vmatprep.subr.mxu0 0.0
    %909 = vmatpush1.xpose.msra.mxu0 0.0
    %910 = vmatprep.subr.mxu0 0.0
    %911 = vmatpush1.xpose.msra.mxu0 0.0
    %912 = vmatprep.subr.mxu0 0.0
    %913 = vmatpush1.xpose.msra.mxu0 0.0
    %914 = vmatprep.subr.mxu0 0.0
    %915 = vmatpush1.xpose.msra.mxu0 0.0
    %916 = vmatprep.subr.mxu0 0.0
    %917 = vmatpush1.xpose.msra.mxu0 0.0
    %918 = vmatprep.subr.mxu0 0.0
    %919 = vmatpush1.xpose.msra.mxu0 0.0
    %920 = vmatprep.subr.mxu0 0.0
    %921 = vmatpush1.xpose.msra.mxu0 0.0
    %922 = vmatprep.subr.mxu0 0.0
    %923 = vmatpush1.xpose.msra.mxu0 0.0
    %924 = vmatprep.subr.mxu0 0.0
    %925 = vmatpush1.xpose.msra.mxu0 0.0
    %926 = vmatprep.subr.mxu0 0.0
    %927 = vmatpush1.xpose.msra.mxu0 0.0
    %928 = vmatprep.subr.mxu0 0.0
    %929 = vmatpush1.xpose.msra.mxu0 0.0
    %930 = vmatprep.subr.mxu0 0.0
    %931 = vmatpush1.xpose.msra.mxu0 0.0
    %932 = vmatprep.subr.mxu0 0.0
    %933 = vmatpush1.xpose.msra.mxu0 0.0
    %934 = vmatprep.subr.mxu0 0.0
    %935 = vmatpush1.xpose.msra.mxu0 0.0
    %936 = vmatprep.subr.mxu0 0.0
    %937 = vmatpush1.xpose.msra.mxu0 0.0
    %938 = vmatprep.subr.mxu0 0.0
    %939 = vmatpush1.xpose.msra.mxu0 0.0
    %940 = vmatprep.subr.mxu0 0.0
    %941 = vmatpush1.xpose.msra.mxu0 0.0
    %942 = vmatprep.subr.mxu0 0.0
    %943 = vmatpush1.xpose.msra.mxu0 0.0
    %944 = vmatprep.subr.mxu0 0.0
    %945 = vmatpush1.xpose.msra.mxu0 0.0
    %946 = vmatprep.subr.mxu0 0.0
    %947 = vmatpush1.xpose.msra.mxu0 0.0
    %948 = vmatprep.subr.mxu0 0.0
    %949 = vmatpush1.xpose.msra.mxu0 0.0
    %950 = vmatprep.subr.mxu0 0.0
    %951 = vmatpush1.xpose.msra.mxu0 0.0
    %952 = vmatprep.subr.mxu0 0.0
    %953 = vmatpush1.xpose.msra.mxu0 0.0
    %954 = vmatprep.subr.mxu0 0.0
    %955 = vmatpush1.xpose.msra.mxu0 0.0
    %956 = vmatprep.subr.mxu0 0.0
    %957 = vmatpush1.xpose.msra.mxu0 0.0
    %958 = vmatprep.mubr.f32.mxu0 0.0
    %959 = vmatmul.mubr.f32.gmra.mrb[0].mxu0 %v889
    %v960 = vpop.f32.mrb[0].mxu0
    %v961 = vadd.f32 0.0, %v960
    %v962 = vpop.f32.mrb[0].mxu0
    %963 = vmatprep.mubr.f32.mxu0 0.0
    %964 = vmatmul.mubr.f32.gmra.mrb[0].mxu0 %v892
    %v965 = vpop.f32.mrb[0].mxu0
    %v966 = vadd.f32 0.0, %v965
    %v967 = vpop.f32.mrb[0].mxu0
    %968 = vdwg.mxu0
    %v969 = vmul.f32 %v961, 0.35355338
    %v970 = vmul.f32 %v966, 0.35355338
    %v971 = vadd.f32 %v969, %v149
    %v972 = vadd.f32 %v970, %v150
    %v973 = vmul.f32 %v971, 1.442695
    %v974 = vpow.pop %v973
    %v975 = vmul.f32 %v972, 1.442695
    %v976 = vpow.pop %v975
    %v977 = vsel %vm452, %v974, 0.0
    %978 = vadd.xlane.f32.xlu0 %v977
    %v979 = vpop.xlane.xlu0 %978
    %v980 = vsel %vm452, %v976, 0.0
    %981 = vadd.xlane.f32.xlu0 %v980
    %v982 = vpop.xlane.xlu0 %981
    %v983 = vrcp.pop %v979
    %v984 = vrcp.pop %v982
    %v985 = vmul.f32 %v974, %v983
    %v986 = vmul.f32 %v976, %v984
    %s987 = scalar_lea.vmem [#allocation5], 128
    %v988 = vld [vmem:[%s987] sm:$0xff]
    %v989 = vld [vmem:[%s987 + $0x8] sm:$0xff]
    %v990 = vld [vmem:[%s987 + $0x10] sm:$0xff]
    %v991 = vld [vmem:[%s987 + $0x18] sm:$0xff]
    %992 = vmatprep.subr.mxu0 0.0
    %993 = vmatpush1.msra.mxu0 %v988
    %994 = vmatprep.subr.mxu0 0.0
    %995 = vmatpush1.msra.mxu0 %v989
    %996 = vmatprep.subr.mxu0 0.0
    %997 = vmatpush1.msra.mxu0 %v990
    %998 = vmatprep.subr.mxu0 0.0
    %999 = vmatpush1.msra.mxu0 %v991
    %1000 = vmatprep.subr.mxu0 0.0
    %1001 = vmatpush1.msra.mxu0 0.0
    %1002 = vmatprep.subr.mxu0 0.0
    %1003 = vmatpush1.msra.mxu0 0.0
    %1004 = vmatprep.subr.mxu0 0.0
    %1005 = vmatpush1.msra.mxu0 0.0
    %1006 = vmatprep.subr.mxu0 0.0
    %1007 = vmatpush1.msra.mxu0 0.0
    %1008 = vmatprep.subr.mxu0 0.0
    %1009 = vmatpush1.msra.mxu0 0.0
    %1010 = vmatprep.subr.mxu0 0.0
    %1011 = vmatpush1.msra.mxu0 0.0
    %1012 = vmatprep.subr.mxu0 0.0
    %1013 = vmatpush1.msra.mxu0 0.0
    %1014 = vmatprep.subr.mxu0 0.0
    %1015 = vmatpush1.msra.mxu0 0.0
    %1016 = vmatprep.subr.mxu0 0.0
    %1017 = vmatpush1.msra.mxu0 0.0
    %1018 = vmatprep.subr.mxu0 0.0
    %1019 = vmatpush1.msra.mxu0 0.0
    %1020 = vmatprep.subr.mxu0 0.0
    %1021 = vmatpush1.msra.mxu0 0.0
    %1022 = vmatprep.subr.mxu0 0.0
    %1023 = vmatpush1.msra.mxu0 0.0
    %1024 = vmatprep.subr.mxu0 0.0
    %1025 = vmatpush1.msra.mxu0 0.0
    %1026 = vmatprep.subr.mxu0 0.0
    %1027 = vmatpush1.msra.mxu0 0.0
    %1028 = vmatprep.subr.mxu0 0.0
    %1029 = vmatpush1.msra.mxu0 0.0
    %1030 = vmatprep.subr.mxu0 0.0
    %1031 = vmatpush1.msra.mxu0 0.0
    %1032 = vmatprep.subr.mxu0 0.0
    %1033 = vmatpush1.msra.mxu0 0.0
    %1034 = vmatprep.subr.mxu0 0.0
    %1035 = vmatpush1.msra.mxu0 0.0
    %1036 = vmatprep.subr.mxu0 0.0
    %1037 = vmatpush1.msra.mxu0 0.0
    %1038 = vmatprep.subr.mxu0 0.0
    %1039 = vmatpush1.msra.mxu0 0.0
    %1040 = vmatprep.subr.mxu0 0.0
    %1041 = vmatpush1.msra.mxu0 0.0
    %1042 = vmatprep.subr.mxu0 0.0
    %1043 = vmatpush1.msra.mxu0 0.0
    %1044 = vmatprep.subr.mxu0 0.0
    %1045 = vmatpush1.msra.mxu0 0.0
    %1046 = vmatprep.subr.mxu0 0.0
    %1047 = vmatpush1.msra.mxu0 0.0
    %1048 = vmatprep.subr.mxu0 0.0
    %1049 = vmatpush1.msra.mxu0 0.0
    %1050 = vmatprep.subr.mxu0 0.0
    %1051 = vmatpush1.msra.mxu0 0.0
    %1052 = vmatprep.subr.mxu0 0.0
    %1053 = vmatpush1.msra.mxu0 0.0
    %1054 = vmatprep.subr.mxu0 0.0
    %1055 = vmatpush1.msra.mxu0 0.0
    %1056 = vmatprep.mubr.f32.mxu0 0.0
    %1057 = vmatmul.mubr.f32.gmra.mrb[0].mxu0 %v191
    %v1058 = vpop.f32.mrb[0].mxu0
    %v1059 = vadd.f32 0.0, %v1058
    %v1060 = vpop.f32.mrb[0].mxu0
    %1061 = vmatprep.mubr.f32.mxu0 0.0
    %1062 = vmatmul.mubr.f32.gmra.mrb[0].mxu0 %v194
    %v1063 = vpop.f32.mrb[0].mxu0
    %v1064 = vadd.f32 0.0, %v1063
    %v1065 = vpop.f32.mrb[0].mxu0
    %1066 = vdwg.mxu0
    %v1068 = vsel %vm452, %v985, 0
    %v1071 = vsel %vm452, %v986, 0
    %1073 = vmatprep.subr.mxu0 0.0
    %1074 = vmatpush1.msra.mxu0 %v1059
    %1075 = vmatprep.subr.mxu0 0.0
    %1076 = vmatpush1.msra.mxu0 %v1064
    %1077 = vmatprep.subr.mxu0 0.0
    %1078 = vmatpush1.msra.mxu0 0.0
    %1079 = vmatprep.subr.mxu0 0.0
    %1080 = vmatpush1.msra.mxu0 0.0
    %1081 = vmatprep.subr.mxu0 0.0
    %1082 = vmatpush1.msra.mxu0 0.0
    %1083 = vmatprep.subr.mxu0 0.0
    %1084 = vmatpush1.msra.mxu0 0.0
    %1085 = vmatprep.subr.mxu0 0.0
    %1086 = vmatpush1.msra.mxu0 0.0
    %1087 = vmatprep.subr.mxu0 0.0
    %1088 = vmatpush1.msra.mxu0 0.0
    %1089 = vmatprep.subr.mxu0 0.0
    %1090 = vmatpush1.msra.mxu0 0.0
    %1091 = vmatprep.subr.mxu0 0.0
    %1092 = vmatpush1.msra.mxu0 0.0
    %1093 = vmatprep.subr.mxu0 0.0
    %1094 = vmatpush1.msra.mxu0 0.0
    %1095 = vmatprep.subr.mxu0 0.0
    %1096 = vmatpush1.msra.mxu0 0.0
    %1097 = vmatprep.subr.mxu0 0.0
    %1098 = vmatpush1.msra.mxu0 0.0
    %1099 = vmatprep.subr.mxu0 0.0
    %1100 = vmatpush1.msra.mxu0 0.0
    %1101 = vmatprep.subr.mxu0 0.0
    %1102 = vmatpush1.msra.mxu0 0.0
    %1103 = vmatprep.subr.mxu0 0.0
    %1104 = vmatpush1.msra.mxu0 0.0
    %1105 = vmatprep.subr.mxu0 0.0
    %1106 = vmatpush1.msra.mxu0 0.0
    %1107 = vmatprep.subr.mxu0 0.0
    %1108 = vmatpush1.msra.mxu0 0.0
    %1109 = vmatprep.subr.mxu0 0.0
    %1110 = vmatpush1.msra.mxu0 0.0
    %1111 = vmatprep.subr.mxu0 0.0
    %1112 = vmatpush1.msra.mxu0 0.0
    %1113 = vmatprep.subr.mxu0 0.0
    %1114 = vmatpush1.msra.mxu0 0.0
    %1115 = vmatprep.subr.mxu0 0.0
    %1116 = vmatpush1.msra.mxu0 0.0
    %1117 = vmatprep.subr.mxu0 0.0
    %1118 = vmatpush1.msra.mxu0 0.0
    %1119 = vmatprep.subr.mxu0 0.0
    %1120 = vmatpush1.msra.mxu0 0.0
    %1121 = vmatprep.subr.mxu0 0.0
    %1122 = vmatpush1.msra.mxu0 0.0
    %1123 = vmatprep.subr.mxu0 0.0
    %1124 = vmatpush1.msra.mxu0 0.0
    %1125 = vmatprep.subr.mxu0 0.0
    %1126 = vmatpush1.msra.mxu0 0.0
    %1127 = vmatprep.subr.mxu0 0.0
    %1128 = vmatpush1.msra.mxu0 0.0
    %1129 = vmatprep.subr.mxu0 0.0
    %1130 = vmatpush1.msra.mxu0 0.0
    %1131 = vmatprep.subr.mxu0 0.0
    %1132 = vmatpush1.msra.mxu0 0.0
    %1133 = vmatprep.subr.mxu0 0.0
    %1134 = vmatpush1.msra.mxu0 0.0
    %1135 = vmatprep.subr.mxu0 0.0
    %1136 = vmatpush1.msra.mxu0 0.0
    %1137 = vmatprep.mubr.f32.mxu0 0.0
    %1138 = vmatmul.mubr.f32.gmra.mrb[0].mxu0 %v1068
    %v1139 = vpop.f32.mrb[0].mxu0
    %v1140 = vadd.f32 0.0, %v1139
    %v1141 = vpop.f32.mrb[0].mxu0
    %1142 = vmatprep.mubr.f32.mxu0 0.0
    %1143 = vmatmul.mubr.f32.gmra.mrb[0].mxu0 %v1071
    %v1144 = vpop.f32.mrb[0].mxu0
    %v1145 = vadd.f32 0.0, %v1144
    %v1146 = vpop.f32.mrb[0].mxu0
    %1147 = vdwg.mxu0
    %v1148 = vadd.f32 %v878, %v1140
    %v1149 = vadd.f32 %v883, %v1145
    %v1150 = vmul.f32 %v263, %v170
    %v1151 = vmul.f32 %v268, %v170
    %v1153 = vsel %vm189, %v1150, 0
    %v1156 = vsel %vm189, %v1151, 0
    %1158 = vmatprep.subr.mxu0 0.0
    %1159 = vmatpush1.xpose.msra.mxu0 %v364
    %1160 = vmatprep.subr.mxu0 0.0
    %1161 = vmatpush1.xpose.msra.mxu0 %v367
    %1162 = vmatprep.subr.mxu0 0.0
    %1163 = vmatpush1.xpose.msra.mxu0 0.0
    %1164 = vmatprep.subr.mxu0 0.0
    %1165 = vmatpush1.xpose.msra.mxu0 0.0
    %1166 = vmatprep.subr.mxu0 0.0
    %1167 = vmatpush1.xpose.msra.mxu0 0.0
    %1168 = vmatprep.subr.mxu0 0.0
    %1169 = vmatpush1.xpose.msra.mxu0 0.0
    %1170 = vmatprep.subr.mxu0 0.0
    %1171 = vmatpush1.xpose.msra.mxu0 0.0
    %1172 = vmatprep.subr.mxu0 0.0
    %1173 = vmatpush1.xpose.msra.mxu0 0.0
    %1174 = vmatprep.subr.mxu0 0.0
    %1175 = vmatpush1.xpose.msra.mxu0 0.0
    %1176 = vmatprep.subr.mxu0 0.0
    %1177 = vmatpush1.xpose.msra.mxu0 0.0
    %1178 = vmatprep.subr.mxu0 0.0
    %1179 = vmatpush1.xpose.msra.mxu0 0.0
    %1180 = vmatprep.subr.mxu0 0.0
    %1181 = vmatpush1.xpose.msra.mxu0 0.0
    %1182 = vmatprep.subr.mxu0 0.0
    %1183 = vmatpush1.xpose.msra.mxu0 0.0
    %1184 = vmatprep.subr.mxu0 0.0
    %1185 = vmatpush1.xpose.msra.mxu0 0.0
    %1186 = vmatprep.subr.mxu0 0.0
    %1187 = vmatpush1.xpose.msra.mxu0 0.0
    %1188 = vmatprep.subr.mxu0 0.0
    %1189 = vmatpush1.xpose.msra.mxu0 0.0
    %1190 = vmatprep.subr.mxu0 0.0
    %1191 = vmatpush1.xpose.msra.mxu0 0.0
    %1192 = vmatprep.subr.mxu0 0.0
    %1193 = vmatpush1.xpose.msra.mxu0 0.0
    %1194 = vmatprep.subr.mxu0 0.0
    %1195 = vmatpush1.xpose.msra.mxu0 0.0
    %1196 = vmatprep.subr.mxu0 0.0
    %1197 = vmatpush1.xpose.msra.mxu0 0.0
    %1198 = vmatprep.subr.mxu0 0.0
    %1199 = vmatpush1.xpose.msra.mxu0 0.0
    %1200 = vmatprep.subr.mxu0 0.0
    %1201 = vmatpush1.xpose.msra.mxu0 0.0
    %1202 = vmatprep.subr.mxu0 0.0
    %1203 = vmatpush1.xpose.msra.mxu0 0.0
    %1204 = vmatprep.subr.mxu0 0.0
    %1205 = vmatpush1.xpose.msra.mxu0 0.0
    %1206 = vmatprep.subr.mxu0 0.0
    %1207 = vmatpush1.xpose.msra.mxu0 0.0
    %1208 = vmatprep.subr.mxu0 0.0
    %1209 = vmatpush1.xpose.msra.mxu0 0.0
    %1210 = vmatprep.subr.mxu0 0.0
    %1211 = vmatpush1.xpose.msra.mxu0 0.0
    %1212 = vmatprep.subr.mxu0 0.0
    %1213 = vmatpush1.xpose.msra.mxu0 0.0
    %1214 = vmatprep.subr.mxu0 0.0
    %1215 = vmatpush1.xpose.msra.mxu0 0.0
    %1216 = vmatprep.subr.mxu0 0.0
    %1217 = vmatpush1.xpose.msra.mxu0 0.0
    %1218 = vmatprep.subr.mxu0 0.0
    %1219 = vmatpush1.xpose.msra.mxu0 0.0
    %1220 = vmatprep.subr.mxu0 0.0
    %1221 = vmatpush1.xpose.msra.mxu0 0.0
    %1222 = vmatprep.mubr.f32.mxu0 0.0
    %1223 = vmatmul.mubr.f32.gmra.mrb[0].mxu0 %v1153
    %v1224 = vpop.f32.mrb[0].mxu0
    %v1225 = vadd.f32 0.0, %v1224
    %v1226 = vpop.f32.mrb[0].mxu0
    %1227 = vmatprep.mubr.f32.mxu0 0.0
    %1228 = vmatmul.mubr.f32.gmra.mrb[0].mxu0 %v1156
    %v1229 = vpop.f32.mrb[0].mxu0
    %v1230 = vadd.f32 0.0, %v1229
    %v1231 = vpop.f32.mrb[0].mxu0
    %1232 = vdwg.mxu0
    %v1233 = vmul.f32 %v1225, 0.35355338
    %v1234 = vmul.f32 %v1230, 0.35355338
    %v1235 = vadd.f32 %v1233, %v149
    %v1236 = vadd.f32 %v1234, %v150
    %v1237 = vmul.f32 %v1235, 1.442695
    %v1238 = vpow.pop %v1237
    %v1239 = vmul.f32 %v1236, 1.442695
    %v1240 = vpow.pop %v1239
    %v1241 = vsel %vm452, %v1238, 0.0
    %1242 = vadd.xlane.f32.xlu0 %v1241
    %v1243 = vpop.xlane.xlu0 %1242
    %v1244 = vsel %vm452, %v1240, 0.0
    %1245 = vadd.xlane.f32.xlu0 %v1244
    %v1246 = vpop.xlane.xlu0 %1245
    %v1247 = vrcp.pop %v1243
    %v1248 = vrcp.pop %v1246
    %v1249 = vmul.f32 %v1238, %v1247
    %v1250 = vmul.f32 %v1240, %v1248
    %s1251 = scalar_lea.vmem [#allocation5], 160
    %v1252 = vld [vmem:[%s1251] sm:$0xff]
    %v1253 = vld [vmem:[%s1251 + $0x8] sm:$0xff]
    %v1254 = vld [vmem:[%s1251 + $0x10] sm:$0xff]
    %v1255 = vld [vmem:[%s1251 + $0x18] sm:$0xff]
    %1256 = vmatprep.subr.mxu0 0.0
    %1257 = vmatpush1.msra.mxu0 %v1252
    %1258 = vmatprep.subr.mxu0 0.0
    %1259 = vmatpush1.msra.mxu0 %v1253
    %1260 = vmatprep.subr.mxu0 0.0
    %1261 = vmatpush1.msra.mxu0 %v1254
    %1262 = vmatprep.subr.mxu0 0.0
    %1263 = vmatpush1.msra.mxu0 %v1255
    %1264 = vmatprep.subr.mxu0 0.0
    %1265 = vmatpush1.msra.mxu0 0.0
    %1266 = vmatprep.subr.mxu0 0.0
    %1267 = vmatpush1.msra.mxu0 0.0
    %1268 = vmatprep.subr.mxu0 0.0
    %1269 = vmatpush1.msra.mxu0 0.0
    %1270 = vmatprep.subr.mxu0 0.0
    %1271 = vmatpush1.msra.mxu0 0.0
    %1272 = vmatprep.subr.mxu0 0.0
    %1273 = vmatpush1.msra.mxu0 0.0
    %1274 = vmatprep.subr.mxu0 0.0
    %1275 = vmatpush1.msra.mxu0 0.0
    %1276 = vmatprep.subr.mxu0 0.0
    %1277 = vmatpush1.msra.mxu0 0.0
    %1278 = vmatprep.subr.mxu0 0.0
    %1279 = vmatpush1.msra.mxu0 0.0
    %1280 = vmatprep.subr.mxu0 0.0
    %1281 = vmatpush1.msra.mxu0 0.0
    %1282 = vmatprep.subr.mxu0 0.0
    %1283 = vmatpush1.msra.mxu0 0.0
    %1284 = vmatprep.subr.mxu0 0.0
    %1285 = vmatpush1.msra.mxu0 0.0
    %1286 = vmatprep.subr.mxu0 0.0
    %1287 = vmatpush1.msra.mxu0 0.0
    %1288 = vmatprep.subr.mxu0 0.0
    %1289 = vmatpush1.msra.mxu0 0.0
    %1290 = vmatprep.subr.mxu0 0.0
    %1291 = vmatpush1.msra.mxu0 0.0
    %1292 = vmatprep.subr.mxu0 0.0
    %1293 = vmatpush1.msra.mxu0 0.0
    %1294 = vmatprep.subr.mxu0 0.0
    %1295 = vmatpush1.msra.mxu0 0.0
    %1296 = vmatprep.subr.mxu0 0.0
    %1297 = vmatpush1.msra.mxu0 0.0
    %1298 = vmatprep.subr.mxu0 0.0
    %1299 = vmatpush1.msra.mxu0 0.0
    %1300 = vmatprep.subr.mxu0 0.0
    %1301 = vmatpush1.msra.mxu0 0.0
    %1302 = vmatprep.subr.mxu0 0.0
    %1303 = vmatpush1.msra.mxu0 0.0
    %1304 = vmatprep.subr.mxu0 0.0
    %1305 = vmatpush1.msra.mxu0 0.0
    %1306 = vmatprep.subr.mxu0 0.0
    %1307 = vmatpush1.msra.mxu0 0.0
    %1308 = vmatprep.subr.mxu0 0.0
    %1309 = vmatpush1.msra.mxu0 0.0
    %1310 = vmatprep.subr.mxu0 0.0
    %1311 = vmatpush1.msra.mxu0 0.0
    %1312 = vmatprep.subr.mxu0 0.0
    %1313 = vmatpush1.msra.mxu0 0.0
    %1314 = vmatprep.subr.mxu0 0.0
    %1315 = vmatpush1.msra.mxu0 0.0
    %1316 = vmatprep.subr.mxu0 0.0
    %1317 = vmatpush1.msra.mxu0 0.0
    %1318 = vmatprep.subr.mxu0 0.0
    %1319 = vmatpush1.msra.mxu0 0.0
    %1320 = vmatprep.mubr.f32.mxu0 0.0
    %1321 = vmatmul.mubr.f32.gmra.mrb[0].mxu0 %v191
    %v1322 = vpop.f32.mrb[0].mxu0
    %v1323 = vadd.f32 0.0, %v1322
    %v1324 = vpop.f32.mrb[0].mxu0
    %1325 = vmatprep.mubr.f32.mxu0 0.0
    %1326 = vmatmul.mubr.f32.gmra.mrb[0].mxu0 %v194
    %v1327 = vpop.f32.mrb[0].mxu0
    %v1328 = vadd.f32 0.0, %v1327
    %v1329 = vpop.f32.mrb[0].mxu0
    %1330 = vdwg.mxu0
    %v1332 = vsel %vm452, %v1249, 0
    %v1335 = vsel %vm452, %v1250, 0
    %1337 = vmatprep.subr.mxu0 0.0
    %1338 = vmatpush1.msra.mxu0 %v1323
    %1339 = vmatprep.subr.mxu0 0.0
    %1340 = vmatpush1.msra.mxu0 %v1328
    %1341 = vmatprep.subr.mxu0 0.0
    %1342 = vmatpush1.msra.mxu0 0.0
    %1343 = vmatprep.subr.mxu0 0.0
    %1344 = vmatpush1.msra.mxu0 0.0
    %1345 = vmatprep.subr.mxu0 0.0
    %1346 = vmatpush1.msra.mxu0 0.0
    %1347 = vmatprep.subr.mxu0 0.0
    %1348 = vmatpush1.msra.mxu0 0.0
    %1349 = vmatprep.subr.mxu0 0.0
    %1350 = vmatpush1.msra.mxu0 0.0
    %1351 = vmatprep.subr.mxu0 0.0
    %1352 = vmatpush1.msra.mxu0 0.0
    %1353 = vmatprep.subr.mxu0 0.0
    %1354 = vmatpush1.msra.mxu0 0.0
    %1355 = vmatprep.subr.mxu0 0.0
    %1356 = vmatpush1.msra.mxu0 0.0
    %1357 = vmatprep.subr.mxu0 0.0
    %1358 = vmatpush1.msra.mxu0 0.0
    %1359 = vmatprep.subr.mxu0 0.0
    %1360 = vmatpush1.msra.mxu0 0.0
    %1361 = vmatprep.subr.mxu0 0.0
    %1362 = vmatpush1.msra.mxu0 0.0
    %1363 = vmatprep.subr.mxu0 0.0
    %1364 = vmatpush1.msra.mxu0 0.0
    %1365 = vmatprep.subr.mxu0 0.0
    %1366 = vmatpush1.msra.mxu0 0.0
    %1367 = vmatprep.subr.mxu0 0.0
    %1368 = vmatpush1.msra.mxu0 0.0
    %1369 = vmatprep.subr.mxu0 0.0
    %1370 = vmatpush1.msra.mxu0 0.0
    %1371 = vmatprep.subr.mxu0 0.0
    %1372 = vmatpush1.msra.mxu0 0.0
    %1373 = vmatprep.subr.mxu0 0.0
    %1374 = vmatpush1.msra.mxu0 0.0
    %1375 = vmatprep.subr.mxu0 0.0
    %1376 = vmatpush1.msra.mxu0 0.0
    %1377 = vmatprep.subr.mxu0 0.0
    %1378 = vmatpush1.msra.mxu0 0.0
    %1379 = vmatprep.subr.mxu0 0.0
    %1380 = vmatpush1.msra.mxu0 0.0
    %1381 = vmatprep.subr.mxu0 0.0
    %1382 = vmatpush1.msra.mxu0 0.0
    %1383 = vmatprep.subr.mxu0 0.0
    %1384 = vmatpush1.msra.mxu0 0.0
    %1385 = vmatprep.subr.mxu0 0.0
    %1386 = vmatpush1.msra.mxu0 0.0
    %1387 = vmatprep.subr.mxu0 0.0
    %1388 = vmatpush1.msra.mxu0 0.0
    %1389 = vmatprep.subr.mxu0 0.0
    %1390 = vmatpush1.msra.mxu0 0.0
    %1391 = vmatprep.subr.mxu0 0.0
    %1392 = vmatpush1.msra.mxu0 0.0
    %1393 = vmatprep.subr.mxu0 0.0
    %1394 = vmatpush1.msra.mxu0 0.0
    %1395 = vmatprep.subr.mxu0 0.0
    %1396 = vmatpush1.msra.mxu0 0.0
    %1397 = vmatprep.subr.mxu0 0.0
    %1398 = vmatpush1.msra.mxu0 0.0
    %1399 = vmatprep.subr.mxu0 0.0
    %1400 = vmatpush1.msra.mxu0 0.0
    %1401 = vmatprep.mubr.f32.mxu0 0.0
    %1402 = vmatmul.mubr.f32.gmra.mrb[0].mxu0 %v1332
    %v1403 = vpop.f32.mrb[0].mxu0
    %v1404 = vadd.f32 0.0, %v1403
    %v1405 = vpop.f32.mrb[0].mxu0
    %1406 = vmatprep.mubr.f32.mxu0 0.0
    %1407 = vmatmul.mubr.f32.gmra.mrb[0].mxu0 %v1335
    %v1408 = vpop.f32.mrb[0].mxu0
    %v1409 = vadd.f32 0.0, %v1408
    %v1410 = vpop.f32.mrb[0].mxu0
    %1411 = vdwg.mxu0
    %v1412 = vadd.f32 %v1148, %v1404
    %v1413 = vadd.f32 %v1149, %v1409
    %v1414 = vlaneseq
    %v1415 = vshrl.u32 %v1414, 7
    %v1416 = vsub.s32 0, %v1415
    %v1417 = vrot.slane %v173, %v1416
    %v1418 = vadd.f32 %v1412, %v1417
    %v1419 = vadd.f32 %v1413, %v1417
    %v1420 = vadd.f32 %v104, %v1418
    %v1421 = vadd.f32 %v105, %v1419
    %v1422 = vsel %vm189, %v1420, 0.0
    %1423 = vadd.xlane.f32.xlu0 %v1422
    %v1424 = vpop.xlane.xlu0 %1423
    %v1425 = vsel %vm189, %v1421, 0.0
    %1426 = vadd.xlane.f32.xlu0 %v1425
    %v1427 = vpop.xlane.xlu0 %1426
    %v1428 = vrcp.pop 32.0
    %v1429 = vmul.f32 %v1424, %v1428
    %v1430 = vmul.f32 %v1427, %v1428
    %v1431 = vsub.f32 %v1420, %v1429
    %v1432 = vsub.f32 %v1421, %v1430
    %v1433 = vmul.f32 %v1431, %v1431
    %v1434 = vmul.f32 %v1432, %v1432
    %v1435 = vsel %vm189, %v1433, 0.0
    %1436 = vadd.xlane.f32.xlu0 %v1435
    %v1437 = vpop.xlane.xlu0 %1436
    %v1438 = vsel %vm189, %v1434, 0.0
    %1439 = vadd.xlane.f32.xlu0 %v1438
    %v1440 = vpop.xlane.xlu0 %1439
    %v1441 = vmul.f32 %v1437, %v1428
    %v1442 = vmul.f32 %v1440, %v1428
    %v1443 = vadd.f32 %v1441, 1e-05
    %v1444 = vadd.f32 %v1442, 1e-05
    %v1445 = vrsqrt.pop %v1443
    %v1446 = vrsqrt.pop %v1444
    %v1447 = vmul.f32 %v1431, %v1445
    %v1448 = vmul.f32 %v1432, %v1446
    %v1449 = vlaneseq
    %v1450 = vshrl.u32 %v1449, 7
    %v1451 = vsub.s32 0, %v1450
    %v1452 = vrot.slane %v174, %v1451
    %v1453 = vmul.f32 %v1447, %v1452
    %v1454 = vmul.f32 %v1448, %v1452
    %v1455 = vlaneseq
    %v1456 = vshrl.u32 %v1455, 7
    %v1457 = vsub.s32 0, %v1456
    %v1458 = vrot.slane %v175, %v1457
    %v1459 = vadd.f32 %v1453, %v1458
    %v1460 = vadd.f32 %v1454, %v1458
    %s1461 = scalar_lea.vmem [#allocation5], 192
    %v1462 = vld [vmem:[%s1461] sm:$0xff]
    %v1463 = vld [vmem:[%s1461 + $0x8] sm:$0xff]
    %v1464 = vld [vmem:[%s1461 + $0x10] sm:$0xff]
    %v1465 = vld [vmem:[%s1461 + $0x18] sm:$0xff]
    %v1466 = vlaneseq
    %v1467 = vshrl.u32 %v1466, 7
    %v1468 = vsub.s32 0, %v1467
    %v1469 = vrot.slane %v179, %v1468
    %v1471 = vsel %vm189, %v1459, 0
    %v1474 = vsel %vm189, %v1460, 0
    %1476 = vmatprep.subr.mxu0 0.0
    %1477 = vmatpush1.msra.mxu0 %v1462
    %1478 = vmatprep.subr.mxu0 0.0
    %1479 = vmatpush1.msra.mxu0 %v1463
    %1480 = vmatprep.subr.mxu0 0.0
    %1481 = vmatpush1.msra.mxu0 %v1464
    %1482 = vmatprep.subr.mxu0 0.0
    %1483 = vmatpush1.msra.mxu0 %v1465
    %1484 = vmatprep.subr.mxu0 0.0
    %1485 = vmatpush1.msra.mxu0 0.0
    %1486 = vmatprep.subr.mxu0 0.0
    %1487 = vmatpush1.msra.mxu0 0.0
    %1488 = vmatprep.subr.mxu0 0.0
    %1489 = vmatpush1.msra.mxu0 0.0
    %1490 = vmatprep.subr.mxu0 0.0
    %1491 = vmatpush1.msra.mxu0 0.0
    %1492 = vmatprep.subr.mxu0 0.0
    %1493 = vmatpush1.msra.mxu0 0.0
    %1494 = vmatprep.subr.mxu0 0.0
    %1495 = vmatpush1.msra.mxu0 0.0
    %1496 = vmatprep.subr.mxu0 0.0
    %1497 = vmatpush1.msra.mxu0 0.0
    %1498 = vmatprep.subr.mxu0 0.0
    %1499 = vmatpush1.msra.mxu0 0.0
    %1500 = vmatprep.subr.mxu0 0.0
    %1501 = vmatpush1.msra.mxu0 0.0
    %1502 = vmatprep.subr.mxu0 0.0
    %1503 = vmatpush1.msra.mxu0 0.0
    %1504 = vmatprep.subr.mxu0 0.0
    %1505 = vmatpush1.msra.mxu0 0.0
    %1506 = vmatprep.subr.mxu0 0.0
    %1507 = vmatpush1.msra.mxu0 0.0
    %1508 = vmatprep.subr.mxu0 0.0
    %1509 = vmatpush1.msra.mxu0 0.0
    %1510 = vmatprep.subr.mxu0 0.0
    %1511 = vmatpush1.msra.mxu0 0.0
    %1512 = vmatprep.subr.mxu0 0.0
    %1513 = vmatpush1.msra.mxu0 0.0
    %1514 = vmatprep.subr.mxu0 0.0
    %1515 = vmatpush1.msra.mxu0 0.0
    %1516 = vmatprep.subr.mxu0 0.0
    %1517 = vmatpush1.msra.mxu0 0.0
    %1518 = vmatprep.subr.mxu0 0.0
    %1519 = vmatpush1.msra.mxu0 0.0
    %1520 = vmatprep.subr.mxu0 0.0
    %1521 = vmatpush1.msra.mxu0 0.0
    %1522 = vmatprep.subr.mxu0 0.0
    %1523 = vmatpush1.msra.mxu0 0.0
    %1524 = vmatprep.subr.mxu0 0.0
    %1525 = vmatpush1.msra.mxu0 0.0
    %1526 = vmatprep.subr.mxu0 0.0
    %1527 = vmatpush1.msra.mxu0 0.0
    %1528 = vmatprep.subr.mxu0 0.0
    %1529 = vmatpush1.msra.mxu0 0.0
    %1530 = vmatprep.subr.mxu0 0.0
    %1531 = vmatpush1.msra.mxu0 0.0
    %1532 = vmatprep.subr.mxu0 0.0
    %1533 = vmatpush1.msra.mxu0 0.0
    %1534 = vmatprep.subr.mxu0 0.0
    %1535 = vmatpush1.msra.mxu0 0.0
    %1536 = vmatprep.subr.mxu0 0.0
    %1537 = vmatpush1.msra.mxu0 0.0
    %1538 = vmatprep.subr.mxu0 0.0
    %1539 = vmatpush1.msra.mxu0 0.0
    %1540 = vmatprep.mubr.f32.mxu0 0.0
    %1541 = vmatmul.mubr.f32.gmra.mrb[0].mxu0 %v1471
    %v1542 = vpop.f32.mrb[0].mxu0
    %v1543 = vadd.f32 %v1469, %v1542
    %v1544 = vpop.f32.mrb[0].mxu0
    %1545 = vmatprep.mubr.f32.mxu0 0.0
    %1546 = vmatmul.mubr.f32.gmra.mrb[0].mxu0 %v1474
    %v1547 = vpop.f32.mrb[0].mxu0
    %v1548 = vadd.f32 %v1469, %v1547
    %v1549 = vpop.f32.mrb[0].mxu0
    %1550 = vdwg.mxu0
    %v1551 = vmax.f32 %v1543, 0.0
    %v1552 = vmax.f32 %v1548, 0.0
    %s1553 = scalar_lea.vmem [#allocation5], 224
    %v1554 = vld [vmem:[%s1553] sm:$0xff]
    %v1555 = vld [vmem:[%s1553 + $0x8] sm:$0xff]
    %v1556 = vld [vmem:[%s1553 + $0x10] sm:$0xff]
    %v1557 = vld [vmem:[%s1553 + $0x18] sm:$0xff]
    %v1558 = vlaneseq
    %v1559 = vshrl.u32 %v1558, 7
    %v1560 = vsub.s32 0, %v1559
    %v1561 = vrot.slane %v180, %v1560
    %1562 = vmatprep.subr.mxu0 0.0
    %1563 = vmatpush1.msra.mxu0 %v1554
    %1564 = vmatprep.subr.mxu0 0.0
    %1565 = vmatpush1.msra.mxu0 %v1555
    %1566 = vmatprep.subr.mxu0 0.0
    %1567 = vmatpush1.msra.mxu0 %v1556
    %1568 = vmatprep.subr.mxu0 0.0
    %1569 = vmatpush1.msra.mxu0 %v1557
    %1570 = vmatprep.subr.mxu0 0.0
    %1571 = vmatpush1.msra.mxu0 0.0
    %1572 = vmatprep.subr.mxu0 0.0
    %1573 = vmatpush1.msra.mxu0 0.0
    %1574 = vmatprep.subr.mxu0 0.0
    %1575 = vmatpush1.msra.mxu0 0.0
    %1576 = vmatprep.subr.mxu0 0.0
    %1577 = vmatpush1.msra.mxu0 0.0
    %1578 = vmatprep.subr.mxu0 0.0
    %1579 = vmatpush1.msra.mxu0 0.0
    %1580 = vmatprep.subr.mxu0 0.0
    %1581 = vmatpush1.msra.mxu0 0.0
    %1582 = vmatprep.subr.mxu0 0.0
    %1583 = vmatpush1.msra.mxu0 0.0
    %1584 = vmatprep.subr.mxu0 0.0
    %1585 = vmatpush1.msra.mxu0 0.0
    %1586 = vmatprep.subr.mxu0 0.0
    %1587 = vmatpush1.msra.mxu0 0.0
    %1588 = vmatprep.subr.mxu0 0.0
    %1589 = vmatpush1.msra.mxu0 0.0
    %1590 = vmatprep.subr.mxu0 0.0
    %1591 = vmatpush1.msra.mxu0 0.0
    %1592 = vmatprep.subr.mxu0 0.0
    %1593 = vmatpush1.msra.mxu0 0.0
    %1594 = vmatprep.subr.mxu0 0.0
    %1595 = vmatpush1.msra.mxu0 0.0
    %1596 = vmatprep.subr.mxu0 0.0
    %1597 = vmatpush1.msra.mxu0 0.0
    %1598 = vmatprep.subr.mxu0 0.0
    %1599 = vmatpush1.msra.mxu0 0.0
    %1600 = vmatprep.subr.mxu0 0.0
    %1601 = vmatpush1.msra.mxu0 0.0
    %1602 = vmatprep.subr.mxu0 0.0
    %1603 = vmatpush1.msra.mxu0 0.0
    %1604 = vmatprep.subr.mxu0 0.0
    %1605 = vmatpush1.msra.mxu0 0.0
    %1606 = vmatprep.subr.mxu0 0.0
    %1607 = vmatpush1.msra.mxu0 0.0
    %1608 = vmatprep.subr.mxu0 0.0
    %1609 = vmatpush1.msra.mxu0 0.0
    %1610 = vmatprep.subr.mxu0 0.0
    %1611 = vmatpush1.msra.mxu0 0.0
    %1612 = vmatprep.subr.mxu0 0.0
    %1613 = vmatpush1.msra.mxu0 0.0
    %1614 = vmatprep.subr.mxu0 0.0
    %1615 = vmatpush1.msra.mxu0 0.0
    %1616 = vmatprep.subr.mxu0 0.0
    %1617 = vmatpush1.msra.mxu0 0.0
    %1618 = vmatprep.subr.mxu0 0.0
    %1619 = vmatpush1.msra.mxu0 0.0
    %1620 = vmatprep.subr.mxu0 0.0
    %1621 = vmatpush1.msra.mxu0 0.0
    %1622 = vmatprep.subr.mxu0 0.0
    %1623 = vmatpush1.msra.mxu0 0.0
    %1624 = vmatprep.subr.mxu0 0.0
    %1625 = vmatpush1.msra.mxu0 0.0
    %1626 = vmatprep.mubr.f32.mxu0 0.0
    %1627 = vmatmul.mubr.f32.gmra.mrb[0].mxu0 %v1471
    %v1628 = vpop.f32.mrb[0].mxu0
    %v1629 = vadd.f32 %v1561, %v1628
    %v1630 = vpop.f32.mrb[0].mxu0
    %1631 = vmatprep.mubr.f32.mxu0 0.0
    %1632 = vmatmul.mubr.f32.gmra.mrb[0].mxu0 %v1474
    %v1633 = vpop.f32.mrb[0].mxu0
    %v1634 = vadd.f32 %v1561, %v1633
    %v1635 = vpop.f32.mrb[0].mxu0
    %1636 = vdwg.mxu0
    %v1637 = vmax.f32 %v1629, 0.0
    %v1638 = vmax.f32 %v1634, 0.0
    %s1639 = scalar_lea.vmem [#allocation5], 256
    %v1640 = vld [vmem:[%s1639] sm:$0xff]
    %v1641 = vld [vmem:[%s1639 + $0x8] sm:$0xff]
    %v1642 = vld [vmem:[%s1639 + $0x10] sm:$0xff]
    %v1643 = vld [vmem:[%s1639 + $0x18] sm:$0xff]
    %s1644 = scalar_lea.vmem [#allocation5], 288
    %v1645 = vld [vmem:[%s1644] sm:$0xff]
    %v1646 = vld [vmem:[%s1644 + $0x8] sm:$0xff]
    %v1647 = vld [vmem:[%s1644 + $0x10] sm:$0xff]
    %v1648 = vld [vmem:[%s1644 + $0x18] sm:$0xff]
    %v1650 = vsel %vm189, %v1637, 0
    %v1653 = vsel %vm189, %v1638, 0
    %1655 = vmatprep.subr.mxu0 0.0
    %1656 = vmatpush1.msra.mxu0 %v1645
    %1657 = vmatprep.subr.mxu0 0.0
    %1658 = vmatpush1.msra.mxu0 %v1646
    %1659 = vmatprep.subr.mxu0 0.0
    %1660 = vmatpush1.msra.mxu0 %v1647
    %1661 = vmatprep.subr.mxu0 0.0
    %1662 = vmatpush1.msra.mxu0 %v1648
    %1663 = vmatprep.subr.mxu0 0.0
    %1664 = vmatpush1.msra.mxu0 0.0
    %1665 = vmatprep.subr.mxu0 0.0
    %1666 = vmatpush1.msra.mxu0 0.0
    %1667 = vmatprep.subr.mxu0 0.0
    %1668 = vmatpush1.msra.mxu0 0.0
    %1669 = vmatprep.subr.mxu0 0.0
    %1670 = vmatpush1.msra.mxu0 0.0
    %1671 = vmatprep.subr.mxu0 0.0
    %1672 = vmatpush1.msra.mxu0 0.0
    %1673 = vmatprep.subr.mxu0 0.0
    %1674 = vmatpush1.msra.mxu0 0.0
    %1675 = vmatprep.subr.mxu0 0.0
    %1676 = vmatpush1.msra.mxu0 0.0
    %1677 = vmatprep.subr.mxu0 0.0
    %1678 = vmatpush1.msra.mxu0 0.0
    %1679 = vmatprep.subr.mxu0 0.0
    %1680 = vmatpush1.msra.mxu0 0.0
    %1681 = vmatprep.subr.mxu0 0.0
    %1682 = vmatpush1.msra.mxu0 0.0
    %1683 = vmatprep.subr.mxu0 0.0
    %1684 = vmatpush1.msra.mxu0 0.0
    %1685 = vmatprep.subr.mxu0 0.0
    %1686 = vmatpush1.msra.mxu0 0.0
    %1687 = vmatprep.subr.mxu0 0.0
    %1688 = vmatpush1.msra.mxu0 0.0
    %1689 = vmatprep.subr.mxu0 0.0
    %1690 = vmatpush1.msra.mxu0 0.0
    %1691 = vmatprep.subr.mxu0 0.0
    %1692 = vmatpush1.msra.mxu0 0.0
    %1693 = vmatprep.subr.mxu0 0.0
    %1694 = vmatpush1.msra.mxu0 0.0
    %1695 = vmatprep.subr.mxu0 0.0
    %1696 = vmatpush1.msra.mxu0 0.0
    %1697 = vmatprep.subr.mxu0 0.0
    %1698 = vmatpush1.msra.mxu0 0.0
    %1699 = vmatprep.subr.mxu0 0.0
    %1700 = vmatpush1.msra.mxu0 0.0
    %1701 = vmatprep.subr.mxu0 0.0
    %1702 = vmatpush1.msra.mxu0 0.0
    %1703 = vmatprep.subr.mxu0 0.0
    %1704 = vmatpush1.msra.mxu0 0.0
    %1705 = vmatprep.subr.mxu0 0.0
    %1706 = vmatpush1.msra.mxu0 0.0
    %1707 = vmatprep.subr.mxu0 0.0
    %1708 = vmatpush1.msra.mxu0 0.0
    %1709 = vmatprep.subr.mxu0 0.0
    %1710 = vmatpush1.msra.mxu0 0.0
    %1711 = vmatprep.subr.mxu0 0.0
    %1712 = vmatpush1.msra.mxu0 0.0
    %1713 = vmatprep.subr.mxu0 0.0
    %1714 = vmatpush1.msra.mxu0 0.0
    %1715 = vmatprep.subr.mxu0 0.0
    %1716 = vmatpush1.msra.mxu0 0.0
    %1717 = vmatprep.subr.mxu0 0.0
    %1718 = vmatpush1.msra.mxu0 0.0
    %1719 = vmatprep.mubr.f32.mxu0 0.0
    %1720 = vmatmul.mubr.f32.gmra.mrb[0].mxu0 %v1650
    %v1721 = vpop.f32.mrb[0].mxu0
    %v1722 = vadd.f32 0.0, %v1721
    %v1723 = vpop.f32.mrb[0].mxu0
    %1724 = vmatprep.mubr.f32.mxu0 0.0
    %1725 = vmatmul.mubr.f32.gmra.mrb[0].mxu0 %v1653
    %v1726 = vpop.f32.mrb[0].mxu0
    %v1727 = vadd.f32 0.0, %v1726
    %v1728 = vpop.f32.mrb[0].mxu0
    %1729 = vdwg.mxu0
    %v1731 = vsel %vm189, %v1551, 0
    %v1734 = vsel %vm189, %v1552, 0
    %1736 = vmatprep.subr.mxu0 0.0
    %1737 = vmatpush1.msra.mxu0 %v1640
    %1738 = vmatprep.subr.mxu0 0.0
    %1739 = vmatpush1.msra.mxu0 %v1641
    %1740 = vmatprep.subr.mxu0 0.0
    %1741 = vmatpush1.msra.mxu0 %v1642
    %1742 = vmatprep.subr.mxu0 0.0
    %1743 = vmatpush1.msra.mxu0 %v1643
    %1744 = vmatprep.subr.mxu0 0.0
    %1745 = vmatpush1.msra.mxu0 0.0
    %1746 = vmatprep.subr.mxu0 0.0
    %1747 = vmatpush1.msra.mxu0 0.0
    %1748 = vmatprep.subr.mxu0 0.0
    %1749 = vmatpush1.msra.mxu0 0.0
    %1750 = vmatprep.subr.mxu0 0.0
    %1751 = vmatpush1.msra.mxu0 0.0
    %1752 = vmatprep.subr.mxu0 0.0
    %1753 = vmatpush1.msra.mxu0 0.0
    %1754 = vmatprep.subr.mxu0 0.0
    %1755 = vmatpush1.msra.mxu0 0.0
    %1756 = vmatprep.subr.mxu0 0.0
    %1757 = vmatpush1.msra.mxu0 0.0
    %1758 = vmatprep.subr.mxu0 0.0
    %1759 = vmatpush1.msra.mxu0 0.0
    %1760 = vmatprep.subr.mxu0 0.0
    %1761 = vmatpush1.msra.mxu0 0.0
    %1762 = vmatprep.subr.mxu0 0.0
    %1763 = vmatpush1.msra.mxu0 0.0
    %1764 = vmatprep.subr.mxu0 0.0
    %1765 = vmatpush1.msra.mxu0 0.0
    %1766 = vmatprep.subr.mxu0 0.0
    %1767 = vmatpush1.msra.mxu0 0.0
    %1768 = vmatprep.subr.mxu0 0.0
    %1769 = vmatpush1.msra.mxu0 0.0
    %1770 = vmatprep.subr.mxu0 0.0
    %1771 = vmatpush1.msra.mxu0 0.0
    %1772 = vmatprep.subr.mxu0 0.0
    %1773 = vmatpush1.msra.mxu0 0.0
    %1774 = vmatprep.subr.mxu0 0.0
    %1775 = vmatpush1.msra.mxu0 0.0
    %1776 = vmatprep.subr.mxu0 0.0
    %1777 = vmatpush1.msra.mxu0 0.0
    %1778 = vmatprep.subr.mxu0 0.0
    %1779 = vmatpush1.msra.mxu0 0.0
    %1780 = vmatprep.subr.mxu0 0.0
    %1781 = vmatpush1.msra.mxu0 0.0
    %1782 = vmatprep.subr.mxu0 0.0
    %1783 = vmatpush1.msra.mxu0 0.0
    %1784 = vmatprep.subr.mxu0 0.0
    %1785 = vmatpush1.msra.mxu0 0.0
    %1786 = vmatprep.subr.mxu0 0.0
    %1787 = vmatpush1.msra.mxu0 0.0
    %1788 = vmatprep.subr.mxu0 0.0
    %1789 = vmatpush1.msra.mxu0 0.0
    %1790 = vmatprep.subr.mxu0 0.0
    %1791 = vmatpush1.msra.mxu0 0.0
    %1792 = vmatprep.subr.mxu0 0.0
    %1793 = vmatpush1.msra.mxu0 0.0
    %1794 = vmatprep.subr.mxu0 0.0
    %1795 = vmatpush1.msra.mxu0 0.0
    %1796 = vmatprep.subr.mxu0 0.0
    %1797 = vmatpush1.msra.mxu0 0.0
    %1798 = vmatprep.subr.mxu0 0.0
    %1799 = vmatpush1.msra.mxu0 0.0
    %1800 = vmatprep.mubr.f32.mxu0 0.0
    %1801 = vmatmul.mubr.f32.gmra.mrb[0].mxu0 %v1731
    %v1802 = vpop.f32.mrb[0].mxu0
    %v1803 = vadd.f32 %v1722, %v1802
    %v1804 = vpop.f32.mrb[0].mxu0
    %1805 = vmatprep.mubr.f32.mxu0 0.0
    %1806 = vmatmul.mubr.f32.gmra.mrb[0].mxu0 %v1734
    %v1807 = vpop.f32.mrb[0].mxu0
    %v1808 = vadd.f32 %v1727, %v1807
    %v1809 = vpop.f32.mrb[0].mxu0
    %1810 = vdwg.mxu0
    %v1811 = vlaneseq
    %v1812 = vshrl.u32 %v1811, 7
    %v1813 = vsub.s32 0, %v1812
    %v1814 = vrot.slane %v178, %v1813
    %v1815 = vadd.f32 %v1803, %v1814
    %v1816 = vadd.f32 %v1808, %v1814
    %v1817 = vadd.f32 %v1459, %v1815
    %v1818 = vadd.f32 %v1460, %v1816
    %v1819 = vsel %vm189, %v1817, 0.0
    %1820 = vadd.xlane.f32.xlu0 %v1819
    %v1821 = vpop.xlane.xlu0 %1820
    %v1822 = vsel %vm189, %v1818, 0.0
    %1823 = vadd.xlane.f32.xlu0 %v1822
    %v1824 = vpop.xlane.xlu0 %1823
    %v1825 = vmul.f32 %v1821, %v1428
    %v1826 = vmul.f32 %v1824, %v1428
    %v1827 = vsub.f32 %v1817, %v1825
    %v1828 = vsub.f32 %v1818, %v1826
    %v1829 = vmul.f32 %v1827, %v1827
    %v1830 = vmul.f32 %v1828, %v1828
    %v1831 = vsel %vm189, %v1829, 0.0
    %1832 = vadd.xlane.f32.xlu0 %v1831
    %v1833 = vpop.xlane.xlu0 %1832
    %v1834 = vsel %vm189, %v1830, 0.0
    %1835 = vadd.xlane.f32.xlu0 %v1834
    %v1836 = vpop.xlane.xlu0 %1835
    %v1837 = vmul.f32 %v1833, %v1428
    %v1838 = vmul.f32 %v1836, %v1428
    %v1839 = vadd.f32 %v1837, 1e-05
    %v1840 = vadd.f32 %v1838, 1e-05
    %v1841 = vrsqrt.pop %v1839
    %v1842 = vrsqrt.pop %v1840
    %v1843 = vmul.f32 %v1827, %v1841
    %v1844 = vmul.f32 %v1828, %v1842
    %v1845 = vlaneseq
    %v1846 = vshrl.u32 %v1845, 7
    %v1847 = vsub.s32 0, %v1846
    %v1848 = vrot.slane %v176, %v1847
    %v1849 = vmul.f32 %v1843, %v1848
    %v1850 = vmul.f32 %v1844, %v1848
    %v1851 = vlaneseq
    %v1852 = vshrl.u32 %v1851, 7
    %v1853 = vsub.s32 0, %v1852
    %v1854 = vrot.slane %v177, %v1853
    %v1855 = vadd.f32 %v1849, %v1854
    %v1856 = vadd.f32 %v1850, %v1854
    %v1857 = vld [vmem:[%s3 + $0xa] sm:$0x1]
    %v1858 = vld [vmem:[%s3 + $0xb] sm:$0x1]
    %v1859 = vld [vmem:[%s3 + $0xc] sm:$0x1]
    %v1860 = vld [vmem:[%s3 + $0xd] sm:$0x1]
    %v1861 = vld [vmem:[%s3 + $0xe] sm:$0x1]
    %v1862 = vld [vmem:[%s3 + $0xf] sm:$0x1]
    %v1863 = vld [vmem:[%s3 + $0x10] sm:$0x1]
    %v1864 = vld [vmem:[%s3 + $0x11] sm:$0x1]
    %v1865 = vld [vmem:[%s3 + $0x12] sm:$0x1]
    %v1866 = vld [vmem:[%s3 + $0x13] sm:$0x1]
    %s1867 = scalar_lea.vmem [#allocation5], 320
    %v1868 = vld [vmem:[%s1867] sm:$0xff]
    %v1869 = vld [vmem:[%s1867 + $0x8] sm:$0xff]
    %v1870 = vld [vmem:[%s1867 + $0x10] sm:$0xff]
    %v1871 = vld [vmem:[%s1867 + $0x18] sm:$0xff]
    %v1872 = vlaneseq
    %v1873 = vshrl.u32 %v1872, 7
    %v1874 = vsub.s32 0, %v1873
    %v1875 = vrot.slane %v1857, %v1874
    %v1877 = vsel %vm189, %v1855, 0
    %v1880 = vsel %vm189, %v1856, 0
    %1882 = vmatprep.subr.mxu0 0.0
    %1883 = vmatpush1.msra.mxu0 %v1868
    %1884 = vmatprep.subr.mxu0 0.0
    %1885 = vmatpush1.msra.mxu0 %v1869
    %1886 = vmatprep.subr.mxu0 0.0
    %1887 = vmatpush1.msra.mxu0 %v1870
    %1888 = vmatprep.subr.mxu0 0.0
    %1889 = vmatpush1.msra.mxu0 %v1871
    %1890 = vmatprep.subr.mxu0 0.0
    %1891 = vmatpush1.msra.mxu0 0.0
    %1892 = vmatprep.subr.mxu0 0.0
    %1893 = vmatpush1.msra.mxu0 0.0
    %1894 = vmatprep.subr.mxu0 0.0
    %1895 = vmatpush1.msra.mxu0 0.0
    %1896 = vmatprep.subr.mxu0 0.0
    %1897 = vmatpush1.msra.mxu0 0.0
    %1898 = vmatprep.subr.mxu0 0.0
    %1899 = vmatpush1.msra.mxu0 0.0
    %1900 = vmatprep.subr.mxu0 0.0
    %1901 = vmatpush1.msra.mxu0 0.0
    %1902 = vmatprep.subr.mxu0 0.0
    %1903 = vmatpush1.msra.mxu0 0.0
    %1904 = vmatprep.subr.mxu0 0.0
    %1905 = vmatpush1.msra.mxu0 0.0
    %1906 = vmatprep.subr.mxu0 0.0
    %1907 = vmatpush1.msra.mxu0 0.0
    %1908 = vmatprep.subr.mxu0 0.0
    %1909 = vmatpush1.msra.mxu0 0.0
    %1910 = vmatprep.subr.mxu0 0.0
    %1911 = vmatpush1.msra.mxu0 0.0
    %1912 = vmatprep.subr.mxu0 0.0
    %1913 = vmatpush1.msra.mxu0 0.0
    %1914 = vmatprep.subr.mxu0 0.0
    %1915 = vmatpush1.msra.mxu0 0.0
    %1916 = vmatprep.subr.mxu0 0.0
    %1917 = vmatpush1.msra.mxu0 0.0
    %1918 = vmatprep.subr.mxu0 0.0
    %1919 = vmatpush1.msra.mxu0 0.0
    %1920 = vmatprep.subr.mxu0 0.0
    %1921 = vmatpush1.msra.mxu0 0.0
    %1922 = vmatprep.subr.mxu0 0.0
    %1923 = vmatpush1.msra.mxu0 0.0
    %1924 = vmatprep.subr.mxu0 0.0
    %1925 = vmatpush1.msra.mxu0 0.0
    %1926 = vmatprep.subr.mxu0 0.0
    %1927 = vmatpush1.msra.mxu0 0.0
    %1928 = vmatprep.subr.mxu0 0.0
    %1929 = vmatpush1.msra.mxu0 0.0
    %1930 = vmatprep.subr.mxu0 0.0
    %1931 = vmatpush1.msra.mxu0 0.0
    %1932 = vmatprep.subr.mxu0 0.0
    %1933 = vmatpush1.msra.mxu0 0.0
    %1934 = vmatprep.subr.mxu0 0.0
    %1935 = vmatpush1.msra.mxu0 0.0
    %1936 = vmatprep.subr.mxu0 0.0
    %1937 = vmatpush1.msra.mxu0 0.0
    %1938 = vmatprep.subr.mxu0 0.0
    %1939 = vmatpush1.msra.mxu0 0.0
    %1940 = vmatprep.subr.mxu0 0.0
    %1941 = vmatpush1.msra.mxu0 0.0
    %1942 = vmatprep.subr.mxu0 0.0
    %1943 = vmatpush1.msra.mxu0 0.0
    %1944 = vmatprep.subr.mxu0 0.0
    %1945 = vmatpush1.msra.mxu0 0.0
    %1946 = vmatprep.mubr.f32.mxu0 0.0
    %1947 = vmatmul.mubr.f32.gmra.mrb[0].mxu0 %v1877
    %v1948 = vpop.f32.mrb[0].mxu0
    %v1949 = vadd.f32 %v1875, %v1948
    %v1950 = vpop.f32.mrb[0].mxu0
    %1951 = vmatprep.mubr.f32.mxu0 0.0
    %1952 = vmatmul.mubr.f32.gmra.mrb[0].mxu0 %v1880
    %v1953 = vpop.f32.mrb[0].mxu0
    %v1954 = vadd.f32 %v1875, %v1953
    %v1955 = vpop.f32.mrb[0].mxu0
    %1956 = vdwg.mxu0
    %s1957 = scalar_lea.vmem [#allocation5], 352
    %v1958 = vld [vmem:[%s1957] sm:$0xff]
    %v1959 = vld [vmem:[%s1957 + $0x8] sm:$0xff]
    %v1960 = vld [vmem:[%s1957 + $0x10] sm:$0xff]
    %v1961 = vld [vmem:[%s1957 + $0x18] sm:$0xff]
    %v1962 = vlaneseq
    %v1963 = vshrl.u32 %v1962, 7
    %v1964 = vsub.s32 0, %v1963
    %v1965 = vrot.slane %v1858, %v1964
    %1966 = vmatprep.subr.mxu0 0.0
    %1967 = vmatpush1.msra.mxu0 %v1958
    %1968 = vmatprep.subr.mxu0 0.0
    %1969 = vmatpush1.msra.mxu0 %v1959
    %1970 = vmatprep.subr.mxu0 0.0
    %1971 = vmatpush1.msra.mxu0 %v1960
    %1972 = vmatprep.subr.mxu0 0.0
    %1973 = vmatpush1.msra.mxu0 %v1961
    %1974 = vmatprep.subr.mxu0 0.0
    %1975 = vmatpush1.msra.mxu0 0.0
    %1976 = vmatprep.subr.mxu0 0.0
    %1977 = vmatpush1.msra.mxu0 0.0
    %1978 = vmatprep.subr.mxu0 0.0
    %1979 = vmatpush1.msra.mxu0 0.0
    %1980 = vmatprep.subr.mxu0 0.0
    %1981 = vmatpush1.msra.mxu0 0.0
    %1982 = vmatprep.subr.mxu0 0.0
    %1983 = vmatpush1.msra.mxu0 0.0
    %1984 = vmatprep.subr.mxu0 0.0
    %1985 = vmatpush1.msra.mxu0 0.0
    %1986 = vmatprep.subr.mxu0 0.0
    %1987 = vmatpush1.msra.mxu0 0.0
    %1988 = vmatprep.subr.mxu0 0.0
    %1989 = vmatpush1.msra.mxu0 0.0
    %1990 = vmatprep.subr.mxu0 0.0
    %1991 = vmatpush1.msra.mxu0 0.0
    %1992 = vmatprep.subr.mxu0 0.0
    %1993 = vmatpush1.msra.mxu0 0.0
    %1994 = vmatprep.subr.mxu0 0.0
    %1995 = vmatpush1.msra.mxu0 0.0
    %1996 = vmatprep.subr.mxu0 0.0
    %1997 = vmatpush1.msra.mxu0 0.0
    %1998 = vmatprep.subr.mxu0 0.0
    %1999 = vmatpush1.msra.mxu0 0.0
    %2000 = vmatprep.subr.mxu0 0.0
    %2001 = vmatpush1.msra.mxu0 0.0
    %2002 = vmatprep.subr.mxu0 0.0
    %2003 = vmatpush1.msra.mxu0 0.0
    %2004 = vmatprep.subr.mxu0 0.0
    %2005 = vmatpush1.msra.mxu0 0.0
    %2006 = vmatprep.subr.mxu0 0.0
    %2007 = vmatpush1.msra.mxu0 0.0
    %2008 = vmatprep.subr.mxu0 0.0
    %2009 = vmatpush1.msra.mxu0 0.0
    %2010 = vmatprep.subr.mxu0 0.0
    %2011 = vmatpush1.msra.mxu0 0.0
    %2012 = vmatprep.subr.mxu0 0.0
    %2013 = vmatpush1.msra.mxu0 0.0
    %2014 = vmatprep.subr.mxu0 0.0
    %2015 = vmatpush1.msra.mxu0 0.0
    %2016 = vmatprep.subr.mxu0 0.0
    %2017 = vmatpush1.msra.mxu0 0.0
    %2018 = vmatprep.subr.mxu0 0.0
    %2019 = vmatpush1.msra.mxu0 0.0
    %2020 = vmatprep.subr.mxu0 0.0
    %2021 = vmatpush1.msra.mxu0 0.0
    %2022 = vmatprep.subr.mxu0 0.0
    %2023 = vmatpush1.msra.mxu0 0.0
    %2024 = vmatprep.subr.mxu0 0.0
    %2025 = vmatpush1.msra.mxu0 0.0
    %2026 = vmatprep.subr.mxu0 0.0
    %2027 = vmatpush1.msra.mxu0 0.0
    %2028 = vmatprep.subr.mxu0 0.0
    %2029 = vmatpush1.msra.mxu0 0.0
    %2030 = vmatprep.mubr.f32.mxu0 0.0
    %2031 = vmatmul.mubr.f32.gmra.mrb[0].mxu0 %v1877
    %v2032 = vpop.f32.mrb[0].mxu0
    %v2033 = vadd.f32 %v1965, %v2032
    %v2034 = vpop.f32.mrb[0].mxu0
    %2035 = vmatprep.mubr.f32.mxu0 0.0
    %2036 = vmatmul.mubr.f32.gmra.mrb[0].mxu0 %v1880
    %v2037 = vpop.f32.mrb[0].mxu0
    %v2038 = vadd.f32 %v1965, %v2037
    %v2039 = vpop.f32.mrb[0].mxu0
    %2040 = vdwg.mxu0
    %v2041 = vmul.f32 %v1949, %v155
    %v2042 = vmul.f32 %v1954, %v155
    %v2044 = vsel %vm189, %v2041, 0
    %v2047 = vsel %vm189, %v2042, 0
    %v2050 = vsel %vm189, %v2033, 0
    %v2053 = vsel %vm189, %v2038, 0
    %2055 = vmatprep.subr.mxu0 0.0
    %2056 = vmatpush1.xpose.msra.mxu0 %v2050
    %2057 = vmatprep.subr.mxu0 0.0
    %2058 = vmatpush1.xpose.msra.mxu0 %v2053
    %2059 = vmatprep.subr.mxu0 0.0
    %2060 = vmatpush1.xpose.msra.mxu0 0.0
    %2061 = vmatprep.subr.mxu0 0.0
    %2062 = vmatpush1.xpose.msra.mxu0 0.0
    %2063 = vmatprep.subr.mxu0 0.0
    %2064 = vmatpush1.xpose.msra.mxu0 0.0
    %2065 = vmatprep.subr.mxu0 0.0
    %2066 = vmatpush1.xpose.msra.mxu0 0.0
    %2067 = vmatprep.subr.mxu0 0.0
    %2068 = vmatpush1.xpose.msra.mxu0 0.0
    %2069 = vmatprep.subr.mxu0 0.0
    %2070 = vmatpush1.xpose.msra.mxu0 0.0
    %2071 = vmatprep.subr.mxu0 0.0
    %2072 = vmatpush1.xpose.msra.mxu0 0.0
    %2073 = vmatprep.subr.mxu0 0.0
    %2074 = vmatpush1.xpose.msra.mxu0 0.0
    %2075 = vmatprep.subr.mxu0 0.0
    %2076 = vmatpush1.xpose.msra.mxu0 0.0
    %2077 = vmatprep.subr.mxu0 0.0
    %2078 = vmatpush1.xpose.msra.mxu0 0.0
    %2079 = vmatprep.subr.mxu0 0.0
    %2080 = vmatpush1.xpose.msra.mxu0 0.0
    %2081 = vmatprep.subr.mxu0 0.0
    %2082 = vmatpush1.xpose.msra.mxu0 0.0
    %2083 = vmatprep.subr.mxu0 0.0
    %2084 = vmatpush1.xpose.msra.mxu0 0.0
    %2085 = vmatprep.subr.mxu0 0.0
    %2086 = vmatpush1.xpose.msra.mxu0 0.0
    %2087 = vmatprep.subr.mxu0 0.0
    %2088 = vmatpush1.xpose.msra.mxu0 0.0
    %2089 = vmatprep.subr.mxu0 0.0
    %2090 = vmatpush1.xpose.msra.mxu0 0.0
    %2091 = vmatprep.subr.mxu0 0.0
    %2092 = vmatpush1.xpose.msra.mxu0 0.0
    %2093 = vmatprep.subr.mxu0 0.0
    %2094 = vmatpush1.xpose.msra.mxu0 0.0
    %2095 = vmatprep.subr.mxu0 0.0
    %2096 = vmatpush1.xpose.msra.mxu0 0.0
    %2097 = vmatprep.subr.mxu0 0.0
    %2098 = vmatpush1.xpose.msra.mxu0 0.0
    %2099 = vmatprep.subr.mxu0 0.0
    %2100 = vmatpush1.xpose.msra.mxu0 0.0
    %2101 = vmatprep.subr.mxu0 0.0
    %2102 = vmatpush1.xpose.msra.mxu0 0.0
    %2103 = vmatprep.subr.mxu0 0.0
    %2104 = vmatpush1.xpose.msra.mxu0 0.0
    %2105 = vmatprep.subr.mxu0 0.0
    %2106 = vmatpush1.xpose.msra.mxu0 0.0
    %2107 = vmatprep.subr.mxu0 0.0
    %2108 = vmatpush1.xpose.msra.mxu0 0.0
    %2109 = vmatprep.subr.mxu0 0.0
    %2110 = vmatpush1.xpose.msra.mxu0 0.0
    %2111 = vmatprep.subr.mxu0 0.0
    %2112 = vmatpush1.xpose.msra.mxu0 0.0
    %2113 = vmatprep.subr.mxu0 0.0
    %2114 = vmatpush1.xpose.msra.mxu0 0.0
    %2115 = vmatprep.subr.mxu0 0.0
    %2116 = vmatpush1.xpose.msra.mxu0 0.0
    %2117 = vmatprep.subr.mxu0 0.0
    %2118 = vmatpush1.xpose.msra.mxu0 0.0
    %2119 = vmatprep.mubr.f32.mxu0 0.0
    %2120 = vmatmul.mubr.f32.gmra.mrb[0].mxu0 %v2044
    %v2121 = vpop.f32.mrb[0].mxu0
    %v2122 = vadd.f32 0.0, %v2121
    %v2123 = vpop.f32.mrb[0].mxu0
    %2124 = vmatprep.mubr.f32.mxu0 0.0
    %2125 = vmatmul.mubr.f32.gmra.mrb[0].mxu0 %v2047
    %v2126 = vpop.f32.mrb[0].mxu0
    %v2127 = vadd.f32 0.0, %v2126
    %v2128 = vpop.f32.mrb[0].mxu0
    %2129 = vdwg.mxu0
    %v2130 = vmul.f32 %v2122, 0.35355338
    %v2131 = vmul.f32 %v2127, 0.35355338
    %v2132 = vadd.f32 %v2130, %v149
    %v2133 = vadd.f32 %v2131, %v150
    %v2134 = vmul.f32 %v2132, 1.442695
    %v2135 = vpow.pop %v2134
    %v2136 = vmul.f32 %v2133, 1.442695
    %v2137 = vpow.pop %v2136
    %v2138 = vsel %vm452, %v2135, 0.0
    %2139 = vadd.xlane.f32.xlu0 %v2138
    %v2140 = vpop.xlane.xlu0 %2139
    %v2141 = vsel %vm452, %v2137, 0.0
    %2142 = vadd.xlane.f32.xlu0 %v2141
    %v2143 = vpop.xlane.xlu0 %2142
    %v2144 = vrcp.pop %v2140
    %v2145 = vrcp.pop %v2143
    %v2146 = vmul.f32 %v2135, %v2144
    %v2147 = vmul.f32 %v2137, %v2145
    %s2148 = scalar_lea.vmem [#allocation5], 384
    %v2149 = vld [vmem:[%s2148] sm:$0xff]
    %v2150 = vld [vmem:[%s2148 + $0x8] sm:$0xff]
    %v2151 = vld [vmem:[%s2148 + $0x10] sm:$0xff]
    %v2152 = vld [vmem:[%s2148 + $0x18] sm:$0xff]
    %2153 = vmatprep.subr.mxu0 0.0
    %2154 = vmatpush1.msra.mxu0 %v2149
    %2155 = vmatprep.subr.mxu0 0.0
    %2156 = vmatpush1.msra.mxu0 %v2150
    %2157 = vmatprep.subr.mxu0 0.0
    %2158 = vmatpush1.msra.mxu0 %v2151
    %2159 = vmatprep.subr.mxu0 0.0
    %2160 = vmatpush1.msra.mxu0 %v2152
    %2161 = vmatprep.subr.mxu0 0.0
    %2162 = vmatpush1.msra.mxu0 0.0
    %2163 = vmatprep.subr.mxu0 0.0
    %2164 = vmatpush1.msra.mxu0 0.0
    %2165 = vmatprep.subr.mxu0 0.0
    %2166 = vmatpush1.msra.mxu0 0.0
    %2167 = vmatprep.subr.mxu0 0.0
    %2168 = vmatpush1.msra.mxu0 0.0
    %2169 = vmatprep.subr.mxu0 0.0
    %2170 = vmatpush1.msra.mxu0 0.0
    %2171 = vmatprep.subr.mxu0 0.0
    %2172 = vmatpush1.msra.mxu0 0.0
    %2173 = vmatprep.subr.mxu0 0.0
    %2174 = vmatpush1.msra.mxu0 0.0
    %2175 = vmatprep.subr.mxu0 0.0
    %2176 = vmatpush1.msra.mxu0 0.0
    %2177 = vmatprep.subr.mxu0 0.0
    %2178 = vmatpush1.msra.mxu0 0.0
    %2179 = vmatprep.subr.mxu0 0.0
    %2180 = vmatpush1.msra.mxu0 0.0
    %2181 = vmatprep.subr.mxu0 0.0
    %2182 = vmatpush1.msra.mxu0 0.0
    %2183 = vmatprep.subr.mxu0 0.0
    %2184 = vmatpush1.msra.mxu0 0.0
    %2185 = vmatprep.subr.mxu0 0.0
    %2186 = vmatpush1.msra.mxu0 0.0
    %2187 = vmatprep.subr.mxu0 0.0
    %2188 = vmatpush1.msra.mxu0 0.0
    %2189 = vmatprep.subr.mxu0 0.0
    %2190 = vmatpush1.msra.mxu0 0.0
    %2191 = vmatprep.subr.mxu0 0.0
    %2192 = vmatpush1.msra.mxu0 0.0
    %2193 = vmatprep.subr.mxu0 0.0
    %2194 = vmatpush1.msra.mxu0 0.0
    %2195 = vmatprep.subr.mxu0 0.0
    %2196 = vmatpush1.msra.mxu0 0.0
    %2197 = vmatprep.subr.mxu0 0.0
    %2198 = vmatpush1.msra.mxu0 0.0
    %2199 = vmatprep.subr.mxu0 0.0
    %2200 = vmatpush1.msra.mxu0 0.0
    %2201 = vmatprep.subr.mxu0 0.0
    %2202 = vmatpush1.msra.mxu0 0.0
    %2203 = vmatprep.subr.mxu0 0.0
    %2204 = vmatpush1.msra.mxu0 0.0
    %2205 = vmatprep.subr.mxu0 0.0
    %2206 = vmatpush1.msra.mxu0 0.0
    %2207 = vmatprep.subr.mxu0 0.0
    %2208 = vmatpush1.msra.mxu0 0.0
    %2209 = vmatprep.subr.mxu0 0.0
    %2210 = vmatpush1.msra.mxu0 0.0
    %2211 = vmatprep.subr.mxu0 0.0
    %2212 = vmatpush1.msra.mxu0 0.0
    %2213 = vmatprep.subr.mxu0 0.0
    %2214 = vmatpush1.msra.mxu0 0.0
    %2215 = vmatprep.subr.mxu0 0.0
    %2216 = vmatpush1.msra.mxu0 0.0
    %2217 = vmatprep.mubr.f32.mxu0 0.0
    %2218 = vmatmul.mubr.f32.gmra.mrb[0].mxu0 %v1877
    %v2219 = vpop.f32.mrb[0].mxu0
    %v2220 = vadd.f32 0.0, %v2219
    %v2221 = vpop.f32.mrb[0].mxu0
    %2222 = vmatprep.mubr.f32.mxu0 0.0
    %2223 = vmatmul.mubr.f32.gmra.mrb[0].mxu0 %v1880
    %v2224 = vpop.f32.mrb[0].mxu0
    %v2225 = vadd.f32 0.0, %v2224
    %v2226 = vpop.f32.mrb[0].mxu0
    %2227 = vdwg.mxu0
    %v2228 = vmul.f32 %v1949, %v160
    %v2229 = vmul.f32 %v1954, %v160
    %v2231 = vsel %vm189, %v2228, 0
    %v2234 = vsel %vm189, %v2229, 0
    %2236 = vmatprep.subr.mxu0 0.0
    %2237 = vmatpush1.xpose.msra.mxu0 %v2050
    %2238 = vmatprep.subr.mxu0 0.0
    %2239 = vmatpush1.xpose.msra.mxu0 %v2053
    %2240 = vmatprep.subr.mxu0 0.0
    %2241 = vmatpush1.xpose.msra.mxu0 0.0
    %2242 = vmatprep.subr.mxu0 0.0
    %2243 = vmatpush1.xpose.msra.mxu0 0.0
    %2244 = vmatprep.subr.mxu0 0.0
    %2245 = vmatpush1.xpose.msra.mxu0 0.0
    %2246 = vmatprep.subr.mxu0 0.0
    %2247 = vmatpush1.xpose.msra.mxu0 0.0
    %2248 = vmatprep.subr.mxu0 0.0
    %2249 = vmatpush1.xpose.msra.mxu0 0.0
    %2250 = vmatprep.subr.mxu0 0.0
    %2251 = vmatpush1.xpose.msra.mxu0 0.0
    %2252 = vmatprep.subr.mxu0 0.0
    %2253 = vmatpush1.xpose.msra.mxu0 0.0
    %2254 = vmatprep.subr.mxu0 0.0
    %2255 = vmatpush1.xpose.msra.mxu0 0.0
    %2256 = vmatprep.subr.mxu0 0.0
    %2257 = vmatpush1.xpose.msra.mxu0 0.0
    %2258 = vmatprep.subr.mxu0 0.0
    %2259 = vmatpush1.xpose.msra.mxu0 0.0
    %2260 = vmatprep.subr.mxu0 0.0
    %2261 = vmatpush1.xpose.msra.mxu0 0.0
    %2262 = vmatprep.subr.mxu0 0.0
    %2263 = vmatpush1.xpose.msra.mxu0 0.0
    %2264 = vmatprep.subr.mxu0 0.0
    %2265 = vmatpush1.xpose.msra.mxu0 0.0
    %2266 = vmatprep.subr.mxu0 0.0
    %2267 = vmatpush1.xpose.msra.mxu0 0.0
    %2268 = vmatprep.subr.mxu0 0.0
    %2269 = vmatpush1.xpose.msra.mxu0 0.0
    %2270 = vmatprep.subr.mxu0 0.0
    %2271 = vmatpush1.xpose.msra.mxu0 0.0
    %2272 = vmatprep.subr.mxu0 0.0
    %2273 = vmatpush1.xpose.msra.mxu0 0.0
    %2274 = vmatprep.subr.mxu0 0.0
    %2275 = vmatpush1.xpose.msra.mxu0 0.0
    %2276 = vmatprep.subr.mxu0 0.0
    %2277 = vmatpush1.xpose.msra.mxu0 0.0
    %2278 = vmatprep.subr.mxu0 0.0
    %2279 = vmatpush1.xpose.msra.mxu0 0.0
    %2280 = vmatprep.subr.mxu0 0.0
    %2281 = vmatpush1.xpose.msra.mxu0 0.0
    %2282 = vmatprep.subr.mxu0 0.0
    %2283 = vmatpush1.xpose.msra.mxu0 0.0
    %2284 = vmatprep.subr.mxu0 0.0
    %2285 = vmatpush1.xpose.msra.mxu0 0.0
    %2286 = vmatprep.subr.mxu0 0.0
    %2287 = vmatpush1.xpose.msra.mxu0 0.0
    %2288 = vmatprep.subr.mxu0 0.0
    %2289 = vmatpush1.xpose.msra.mxu0 0.0
    %2290 = vmatprep.subr.mxu0 0.0
    %2291 = vmatpush1.xpose.msra.mxu0 0.0
    %2292 = vmatprep.subr.mxu0 0.0
    %2293 = vmatpush1.xpose.msra.mxu0 0.0
    %2294 = vmatprep.subr.mxu0 0.0
    %2295 = vmatpush1.xpose.msra.mxu0 0.0
    %2296 = vmatprep.subr.mxu0 0.0
    %2297 = vmatpush1.xpose.msra.mxu0 0.0
    %2298 = vmatprep.subr.mxu0 0.0
    %2299 = vmatpush1.xpose.msra.mxu0 0.0
    %2300 = vmatprep.mubr.f32.mxu0 0.0
    %2301 = vmatmul.mubr.f32.gmra.mrb[0].mxu0 %v2231
    %v2302 = vpop.f32.mrb[0].mxu0
    %v2303 = vadd.f32 0.0, %v2302
    %v2304 = vpop.f32.mrb[0].mxu0
    %2305 = vmatprep.mubr.f32.mxu0 0.0
    %2306 = vmatmul.mubr.f32.gmra.mrb[0].mxu0 %v2234
    %v2307 = vpop.f32.mrb[0].mxu0
    %v2308 = vadd.f32 0.0, %v2307
    %v2309 = vpop.f32.mrb[0].mxu0
    %2310 = vdwg.mxu0
    %v2311 = vmul.f32 %v2303, 0.35355338
    %v2312 = vmul.f32 %v2308, 0.35355338
    %v2313 = vadd.f32 %v2311, %v149
    %v2314 = vadd.f32 %v2312, %v150
    %v2315 = vmul.f32 %v2313, 1.442695
    %v2316 = vpow.pop %v2315
    %v2317 = vmul.f32 %v2314, 1.442695
    %v2318 = vpow.pop %v2317
    %v2319 = vsel %vm452, %v2316, 0.0
    %2320 = vadd.xlane.f32.xlu0 %v2319
    %v2321 = vpop.xlane.xlu0 %2320
    %v2322 = vsel %vm452, %v2318, 0.0
    %2323 = vadd.xlane.f32.xlu0 %v2322
    %v2324 = vpop.xlane.xlu0 %2323
    %v2325 = vrcp.pop %v2321
    %v2326 = vrcp.pop %v2324
    %v2327 = vmul.f32 %v2316, %v2325
    %v2328 = vmul.f32 %v2318, %v2326
    %s2329 = scalar_lea.vmem [#allocation5], 416
    %v2330 = vld [vmem:[%s2329] sm:$0xff]
    %v2331 = vld [vmem:[%s2329 + $0x8] sm:$0xff]
    %v2332 = vld [vmem:[%s2329 + $0x10] sm:$0xff]
    %v2333 = vld [vmem:[%s2329 + $0x18] sm:$0xff]
    %2334 = vmatprep.subr.mxu0 0.0
    %2335 = vmatpush1.msra.mxu0 %v2330
    %2336 = vmatprep.subr.mxu0 0.0
    %2337 = vmatpush1.msra.mxu0 %v2331
    %2338 = vmatprep.subr.mxu0 0.0
    %2339 = vmatpush1.msra.mxu0 %v2332
    %2340 = vmatprep.subr.mxu0 0.0
    %2341 = vmatpush1.msra.mxu0 %v2333
    %2342 = vmatprep.subr.mxu0 0.0
    %2343 = vmatpush1.msra.mxu0 0.0
    %2344 = vmatprep.subr.mxu0 0.0
    %2345 = vmatpush1.msra.mxu0 0.0
    %2346 = vmatprep.subr.mxu0 0.0
    %2347 = vmatpush1.msra.mxu0 0.0
    %2348 = vmatprep.subr.mxu0 0.0
    %2349 = vmatpush1.msra.mxu0 0.0
    %2350 = vmatprep.subr.mxu0 0.0
    %2351 = vmatpush1.msra.mxu0 0.0
    %2352 = vmatprep.subr.mxu0 0.0
    %2353 = vmatpush1.msra.mxu0 0.0
    %2354 = vmatprep.subr.mxu0 0.0
    %2355 = vmatpush1.msra.mxu0 0.0
    %2356 = vmatprep.subr.mxu0 0.0
    %2357 = vmatpush1.msra.mxu0 0.0
    %2358 = vmatprep.subr.mxu0 0.0
    %2359 = vmatpush1.msra.mxu0 0.0
    %2360 = vmatprep.subr.mxu0 0.0
    %2361 = vmatpush1.msra.mxu0 0.0
    %2362 = vmatprep.subr.mxu0 0.0
    %2363 = vmatpush1.msra.mxu0 0.0
    %2364 = vmatprep.subr.mxu0 0.0
    %2365 = vmatpush1.msra.mxu0 0.0
    %2366 = vmatprep.subr.mxu0 0.0
    %2367 = vmatpush1.msra.mxu0 0.0
    %2368 = vmatprep.subr.mxu0 0.0
    %2369 = vmatpush1.msra.mxu0 0.0
    %2370 = vmatprep.subr.mxu0 0.0
    %2371 = vmatpush1.msra.mxu0 0.0
    %2372 = vmatprep.subr.mxu0 0.0
    %2373 = vmatpush1.msra.mxu0 0.0
    %2374 = vmatprep.subr.mxu0 0.0
    %2375 = vmatpush1.msra.mxu0 0.0
    %2376 = vmatprep.subr.mxu0 0.0
    %2377 = vmatpush1.msra.mxu0 0.0
    %2378 = vmatprep.subr.mxu0 0.0
    %2379 = vmatpush1.msra.mxu0 0.0
    %2380 = vmatprep.subr.mxu0 0.0
    %2381 = vmatpush1.msra.mxu0 0.0
    %2382 = vmatprep.subr.mxu0 0.0
    %2383 = vmatpush1.msra.mxu0 0.0
    %2384 = vmatprep.subr.mxu0 0.0
    %2385 = vmatpush1.msra.mxu0 0.0
    %2386 = vmatprep.subr.mxu0 0.0
    %2387 = vmatpush1.msra.mxu0 0.0
    %2388 = vmatprep.subr.mxu0 0.0
    %2389 = vmatpush1.msra.mxu0 0.0
    %2390 = vmatprep.subr.mxu0 0.0
    %2391 = vmatpush1.msra.mxu0 0.0
    %2392 = vmatprep.subr.mxu0 0.0
    %2393 = vmatpush1.msra.mxu0 0.0
    %2394 = vmatprep.subr.mxu0 0.0
    %2395 = vmatpush1.msra.mxu0 0.0
    %2396 = vmatprep.subr.mxu0 0.0
    %2397 = vmatpush1.msra.mxu0 0.0
    %2398 = vmatprep.mubr.f32.mxu0 0.0
    %2399 = vmatmul.mubr.f32.gmra.mrb[0].mxu0 %v1877
    %v2400 = vpop.f32.mrb[0].mxu0
    %v2401 = vadd.f32 0.0, %v2400
    %v2402 = vpop.f32.mrb[0].mxu0
    %2403 = vmatprep.mubr.f32.mxu0 0.0
    %2404 = vmatmul.mubr.f32.gmra.mrb[0].mxu0 %v1880
    %v2405 = vpop.f32.mrb[0].mxu0
    %v2406 = vadd.f32 0.0, %v2405
    %v2407 = vpop.f32.mrb[0].mxu0
    %2408 = vdwg.mxu0
    %v2410 = vsel %vm452, %v2327, 0
    %v2413 = vsel %vm452, %v2328, 0
    %2415 = vmatprep.subr.mxu0 0.0
    %2416 = vmatpush1.msra.mxu0 %v2401
    %2417 = vmatprep.subr.mxu0 0.0
    %2418 = vmatpush1.msra.mxu0 %v2406
    %2419 = vmatprep.subr.mxu0 0.0
    %2420 = vmatpush1.msra.mxu0 0.0
    %2421 = vmatprep.subr.mxu0 0.0
    %2422 = vmatpush1.msra.mxu0 0.0
    %2423 = vmatprep.subr.mxu0 0.0
    %2424 = vmatpush1.msra.mxu0 0.0
    %2425 = vmatprep.subr.mxu0 0.0
    %2426 = vmatpush1.msra.mxu0 0.0
    %2427 = vmatprep.subr.mxu0 0.0
    %2428 = vmatpush1.msra.mxu0 0.0
    %2429 = vmatprep.subr.mxu0 0.0
    %2430 = vmatpush1.msra.mxu0 0.0
    %2431 = vmatprep.subr.mxu0 0.0
    %2432 = vmatpush1.msra.mxu0 0.0
    %2433 = vmatprep.subr.mxu0 0.0
    %2434 = vmatpush1.msra.mxu0 0.0
    %2435 = vmatprep.subr.mxu0 0.0
    %2436 = vmatpush1.msra.mxu0 0.0
    %2437 = vmatprep.subr.mxu0 0.0
    %2438 = vmatpush1.msra.mxu0 0.0
    %2439 = vmatprep.subr.mxu0 0.0
    %2440 = vmatpush1.msra.mxu0 0.0
    %2441 = vmatprep.subr.mxu0 0.0
    %2442 = vmatpush1.msra.mxu0 0.0
    %2443 = vmatprep.subr.mxu0 0.0
    %2444 = vmatpush1.msra.mxu0 0.0
    %2445 = vmatprep.subr.mxu0 0.0
    %2446 = vmatpush1.msra.mxu0 0.0
    %2447 = vmatprep.subr.mxu0 0.0
    %2448 = vmatpush1.msra.mxu0 0.0
    %2449 = vmatprep.subr.mxu0 0.0
    %2450 = vmatpush1.msra.mxu0 0.0
    %2451 = vmatprep.subr.mxu0 0.0
    %2452 = vmatpush1.msra.mxu0 0.0
    %2453 = vmatprep.subr.mxu0 0.0
    %2454 = vmatpush1.msra.mxu0 0.0
    %2455 = vmatprep.subr.mxu0 0.0
    %2456 = vmatpush1.msra.mxu0 0.0
    %2457 = vmatprep.subr.mxu0 0.0
    %2458 = vmatpush1.msra.mxu0 0.0
    %2459 = vmatprep.subr.mxu0 0.0
    %2460 = vmatpush1.msra.mxu0 0.0
    %2461 = vmatprep.subr.mxu0 0.0
    %2462 = vmatpush1.msra.mxu0 0.0
    %2463 = vmatprep.subr.mxu0 0.0
    %2464 = vmatpush1.msra.mxu0 0.0
    %2465 = vmatprep.subr.mxu0 0.0
    %2466 = vmatpush1.msra.mxu0 0.0
    %2467 = vmatprep.subr.mxu0 0.0
    %2468 = vmatpush1.msra.mxu0 0.0
    %2469 = vmatprep.subr.mxu0 0.0
    %2470 = vmatpush1.msra.mxu0 0.0
    %2471 = vmatprep.subr.mxu0 0.0
    %2472 = vmatpush1.msra.mxu0 0.0
    %2473 = vmatprep.subr.mxu0 0.0
    %2474 = vmatpush1.msra.mxu0 0.0
    %2475 = vmatprep.subr.mxu0 0.0
    %2476 = vmatpush1.msra.mxu0 0.0
    %2477 = vmatprep.subr.mxu0 0.0
    %2478 = vmatpush1.msra.mxu0 0.0
    %2479 = vmatprep.mubr.f32.mxu0 0.0
    %2480 = vmatmul.mubr.f32.gmra.mrb[0].mxu0 %v2410
    %v2481 = vpop.f32.mrb[0].mxu0
    %v2482 = vadd.f32 0.0, %v2481
    %v2483 = vpop.f32.mrb[0].mxu0
    %2484 = vmatprep.mubr.f32.mxu0 0.0
    %2485 = vmatmul.mubr.f32.gmra.mrb[0].mxu0 %v2413
    %v2486 = vpop.f32.mrb[0].mxu0
    %v2487 = vadd.f32 0.0, %v2486
    %v2488 = vpop.f32.mrb[0].mxu0
    %2489 = vdwg.mxu0
    %v2491 = vsel %vm452, %v2146, 0
    %v2494 = vsel %vm452, %v2147, 0
    %2496 = vmatprep.subr.mxu0 0.0
    %2497 = vmatpush1.msra.mxu0 %v2220
    %2498 = vmatprep.subr.mxu0 0.0
    %2499 = vmatpush1.msra.mxu0 %v2225
    %2500 = vmatprep.subr.mxu0 0.0
    %2501 = vmatpush1.msra.mxu0 0.0
    %2502 = vmatprep.subr.mxu0 0.0
    %2503 = vmatpush1.msra.mxu0 0.0
    %2504 = vmatprep.subr.mxu0 0.0
    %2505 = vmatpush1.msra.mxu0 0.0
    %2506 = vmatprep.subr.mxu0 0.0
    %2507 = vmatpush1.msra.mxu0 0.0
    %2508 = vmatprep.subr.mxu0 0.0
    %2509 = vmatpush1.msra.mxu0 0.0
    %2510 = vmatprep.subr.mxu0 0.0
    %2511 = vmatpush1.msra.mxu0 0.0
    %2512 = vmatprep.subr.mxu0 0.0
    %2513 = vmatpush1.msra.mxu0 0.0
    %2514 = vmatprep.subr.mxu0 0.0
    %2515 = vmatpush1.msra.mxu0 0.0
    %2516 = vmatprep.subr.mxu0 0.0
    %2517 = vmatpush1.msra.mxu0 0.0
    %2518 = vmatprep.subr.mxu0 0.0
    %2519 = vmatpush1.msra.mxu0 0.0
    %2520 = vmatprep.subr.mxu0 0.0
    %2521 = vmatpush1.msra.mxu0 0.0
    %2522 = vmatprep.subr.mxu0 0.0
    %2523 = vmatpush1.msra.mxu0 0.0
    %2524 = vmatprep.subr.mxu0 0.0
    %2525 = vmatpush1.msra.mxu0 0.0
    %2526 = vmatprep.subr.mxu0 0.0
    %2527 = vmatpush1.msra.mxu0 0.0
    %2528 = vmatprep.subr.mxu0 0.0
    %2529 = vmatpush1.msra.mxu0 0.0
    %2530 = vmatprep.subr.mxu0 0.0
    %2531 = vmatpush1.msra.mxu0 0.0
    %2532 = vmatprep.subr.mxu0 0.0
    %2533 = vmatpush1.msra.mxu0 0.0
    %2534 = vmatprep.subr.mxu0 0.0
    %2535 = vmatpush1.msra.mxu0 0.0
    %2536 = vmatprep.subr.mxu0 0.0
    %2537 = vmatpush1.msra.mxu0 0.0
    %2538 = vmatprep.subr.mxu0 0.0
    %2539 = vmatpush1.msra.mxu0 0.0
    %2540 = vmatprep.subr.mxu0 0.0
    %2541 = vmatpush1.msra.mxu0 0.0
    %2542 = vmatprep.subr.mxu0 0.0
    %2543 = vmatpush1.msra.mxu0 0.0
    %2544 = vmatprep.subr.mxu0 0.0
    %2545 = vmatpush1.msra.mxu0 0.0
    %2546 = vmatprep.subr.mxu0 0.0
    %2547 = vmatpush1.msra.mxu0 0.0
    %2548 = vmatprep.subr.mxu0 0.0
    %2549 = vmatpush1.msra.mxu0 0.0
    %2550 = vmatprep.subr.mxu0 0.0
    %2551 = vmatpush1.msra.mxu0 0.0
    %2552 = vmatprep.subr.mxu0 0.0
    %2553 = vmatpush1.msra.mxu0 0.0
    %2554 = vmatprep.subr.mxu0 0.0
    %2555 = vmatpush1.msra.mxu0 0.0
    %2556 = vmatprep.subr.mxu0 0.0
    %2557 = vmatpush1.msra.mxu0 0.0
    %2558 = vmatprep.subr.mxu0 0.0
    %2559 = vmatpush1.msra.mxu0 0.0
    %2560 = vmatprep.mubr.f32.mxu0 0.0
    %2561 = vmatmul.mubr.f32.gmra.mrb[0].mxu0 %v2491
    %v2562 = vpop.f32.mrb[0].mxu0
    %v2563 = vadd.f32 %v2482, %v2562
    %v2564 = vpop.f32.mrb[0].mxu0
    %2565 = vmatprep.mubr.f32.mxu0 0.0
    %2566 = vmatmul.mubr.f32.gmra.mrb[0].mxu0 %v2494
    %v2567 = vpop.f32.mrb[0].mxu0
    %v2568 = vadd.f32 %v2487, %v2567
    %v2569 = vpop.f32.mrb[0].mxu0
    %2570 = vdwg.mxu0
    %v2571 = vmul.f32 %v1949, %v165
    %v2572 = vmul.f32 %v1954, %v165
    %v2574 = vsel %vm189, %v2571, 0
    %v2577 = vsel %vm189, %v2572, 0
    %2579 = vmatprep.subr.mxu0 0.0
    %2580 = vmatpush1.xpose.msra.mxu0 %v2050
    %2581 = vmatprep.subr.mxu0 0.0
    %2582 = vmatpush1.xpose.msra.mxu0 %v2053
    %2583 = vmatprep.subr.mxu0 0.0
    %2584 = vmatpush1.xpose.msra.mxu0 0.0
    %2585 = vmatprep.subr.mxu0 0.0
    %2586 = vmatpush1.xpose.msra.mxu0 0.0
    %2587 = vmatprep.subr.mxu0 0.0
    %2588 = vmatpush1.xpose.msra.mxu0 0.0
    %2589 = vmatprep.subr.mxu0 0.0
    %2590 = vmatpush1.xpose.msra.mxu0 0.0
    %2591 = vmatprep.subr.mxu0 0.0
    %2592 = vmatpush1.xpose.msra.mxu0 0.0
    %2593 = vmatprep.subr.mxu0 0.0
    %2594 = vmatpush1.xpose.msra.mxu0 0.0
    %2595 = vmatprep.subr.mxu0 0.0
    %2596 = vmatpush1.xpose.msra.mxu0 0.0
    %2597 = vmatprep.subr.mxu0 0.0
    %2598 = vmatpush1.xpose.msra.mxu0 0.0
    %2599 = vmatprep.subr.mxu0 0.0
    %2600 = vmatpush1.xpose.msra.mxu0 0.0
    %2601 = vmatprep.subr.mxu0 0.0
    %2602 = vmatpush1.xpose.msra.mxu0 0.0
    %2603 = vmatprep.subr.mxu0 0.0
    %2604 = vmatpush1.xpose.msra.mxu0 0.0
    %2605 = vmatprep.subr.mxu0 0.0
    %2606 = vmatpush1.xpose.msra.mxu0 0.0
    %2607 = vmatprep.subr.mxu0 0.0
    %2608 = vmatpush1.xpose.msra.mxu0 0.0
    %2609 = vmatprep.subr.mxu0 0.0
    %2610 = vmatpush1.xpose.msra.mxu0 0.0
    %2611 = vmatprep.subr.mxu0 0.0
    %2612 = vmatpush1.xpose.msra.mxu0 0.0
    %2613 = vmatprep.subr.mxu0 0.0
    %2614 = vmatpush1.xpose.msra.mxu0 0.0
    %2615 = vmatprep.subr.mxu0 0.0
    %2616 = vmatpush1.xpose.msra.mxu0 0.0
    %2617 = vmatprep.subr.mxu0 0.0
    %2618 = vmatpush1.xpose.msra.mxu0 0.0
    %2619 = vmatprep.subr.mxu0 0.0
    %2620 = vmatpush1.xpose.msra.mxu0 0.0
    %2621 = vmatprep.subr.mxu0 0.0
    %2622 = vmatpush1.xpose.msra.mxu0 0.0
    %2623 = vmatprep.subr.mxu0 0.0
    %2624 = vmatpush1.xpose.msra.mxu0 0.0
    %2625 = vmatprep.subr.mxu0 0.0
    %2626 = vmatpush1.xpose.msra.mxu0 0.0
    %2627 = vmatprep.subr.mxu0 0.0
    %2628 = vmatpush1.xpose.msra.mxu0 0.0
    %2629 = vmatprep.subr.mxu0 0.0
    %2630 = vmatpush1.xpose.msra.mxu0 0.0
    %2631 = vmatprep.subr.mxu0 0.0
    %2632 = vmatpush1.xpose.msra.mxu0 0.0
    %2633 = vmatprep.subr.mxu0 0.0
    %2634 = vmatpush1.xpose.msra.mxu0 0.0
    %2635 = vmatprep.subr.mxu0 0.0
    %2636 = vmatpush1.xpose.msra.mxu0 0.0
    %2637 = vmatprep.subr.mxu0 0.0
    %2638 = vmatpush1.xpose.msra.mxu0 0.0
    %2639 = vmatprep.subr.mxu0 0.0
    %2640 = vmatpush1.xpose.msra.mxu0 0.0
    %2641 = vmatprep.subr.mxu0 0.0
    %2642 = vmatpush1.xpose.msra.mxu0 0.0
    %2643 = vmatprep.mubr.f32.mxu0 0.0
    %2644 = vmatmul.mubr.f32.gmra.mrb[0].mxu0 %v2574
    %v2645 = vpop.f32.mrb[0].mxu0
    %v2646 = vadd.f32 0.0, %v2645
    %v2647 = vpop.f32.mrb[0].mxu0
    %2648 = vmatprep.mubr.f32.mxu0 0.0
    %2649 = vmatmul.mubr.f32.gmra.mrb[0].mxu0 %v2577
    %v2650 = vpop.f32.mrb[0].mxu0
    %v2651 = vadd.f32 0.0, %v2650
    %v2652 = vpop.f32.mrb[0].mxu0
    %2653 = vdwg.mxu0
    %v2654 = vmul.f32 %v2646, 0.35355338
    %v2655 = vmul.f32 %v2651, 0.35355338
    %v2656 = vadd.f32 %v2654, %v149
    %v2657 = vadd.f32 %v2655, %v150
    %v2658 = vmul.f32 %v2656, 1.442695
    %v2659 = vpow.pop %v2658
    %v2660 = vmul.f32 %v2657, 1.442695
    %v2661 = vpow.pop %v2660
    %v2662 = vsel %vm452, %v2659, 0.0
    %2663 = vadd.xlane.f32.xlu0 %v2662
    %v2664 = vpop.xlane.xlu0 %2663
    %v2665 = vsel %vm452, %v2661, 0.0
    %2666 = vadd.xlane.f32.xlu0 %v2665
    %v2667 = vpop.xlane.xlu0 %2666
    %v2668 = vrcp.pop %v2664
    %v2669 = vrcp.pop %v2667
    %v2670 = vmul.f32 %v2659, %v2668
    %v2671 = vmul.f32 %v2661, %v2669
    %s2672 = scalar_lea.vmem [#allocation5], 448
    %v2673 = vld [vmem:[%s2672] sm:$0xff]
    %v2674 = vld [vmem:[%s2672 + $0x8] sm:$0xff]
    %v2675 = vld [vmem:[%s2672 + $0x10] sm:$0xff]
    %v2676 = vld [vmem:[%s2672 + $0x18] sm:$0xff]
    %2677 = vmatprep.subr.mxu0 0.0
    %2678 = vmatpush1.msra.mxu0 %v2673
    %2679 = vmatprep.subr.mxu0 0.0
    %2680 = vmatpush1.msra.mxu0 %v2674
    %2681 = vmatprep.subr.mxu0 0.0
    %2682 = vmatpush1.msra.mxu0 %v2675
    %2683 = vmatprep.subr.mxu0 0.0
    %2684 = vmatpush1.msra.mxu0 %v2676
    %2685 = vmatprep.subr.mxu0 0.0
    %2686 = vmatpush1.msra.mxu0 0.0
    %2687 = vmatprep.subr.mxu0 0.0
    %2688 = vmatpush1.msra.mxu0 0.0
    %2689 = vmatprep.subr.mxu0 0.0
    %2690 = vmatpush1.msra.mxu0 0.0
    %2691 = vmatprep.subr.mxu0 0.0
    %2692 = vmatpush1.msra.mxu0 0.0
    %2693 = vmatprep.subr.mxu0 0.0
    %2694 = vmatpush1.msra.mxu0 0.0
    %2695 = vmatprep.subr.mxu0 0.0
    %2696 = vmatpush1.msra.mxu0 0.0
    %2697 = vmatprep.subr.mxu0 0.0
    %2698 = vmatpush1.msra.mxu0 0.0
    %2699 = vmatprep.subr.mxu0 0.0
    %2700 = vmatpush1.msra.mxu0 0.0
    %2701 = vmatprep.subr.mxu0 0.0
    %2702 = vmatpush1.msra.mxu0 0.0
    %2703 = vmatprep.subr.mxu0 0.0
    %2704 = vmatpush1.msra.mxu0 0.0
    %2705 = vmatprep.subr.mxu0 0.0
    %2706 = vmatpush1.msra.mxu0 0.0
    %2707 = vmatprep.subr.mxu0 0.0
    %2708 = vmatpush1.msra.mxu0 0.0
    %2709 = vmatprep.subr.mxu0 0.0
    %2710 = vmatpush1.msra.mxu0 0.0
    %2711 = vmatprep.subr.mxu0 0.0
    %2712 = vmatpush1.msra.mxu0 0.0
    %2713 = vmatprep.subr.mxu0 0.0
    %2714 = vmatpush1.msra.mxu0 0.0
    %2715 = vmatprep.subr.mxu0 0.0
    %2716 = vmatpush1.msra.mxu0 0.0
    %2717 = vmatprep.subr.mxu0 0.0
    %2718 = vmatpush1.msra.mxu0 0.0
    %2719 = vmatprep.subr.mxu0 0.0
    %2720 = vmatpush1.msra.mxu0 0.0
    %2721 = vmatprep.subr.mxu0 0.0
    %2722 = vmatpush1.msra.mxu0 0.0
    %2723 = vmatprep.subr.mxu0 0.0
    %2724 = vmatpush1.msra.mxu0 0.0
    %2725 = vmatprep.subr.mxu0 0.0
    %2726 = vmatpush1.msra.mxu0 0.0
    %2727 = vmatprep.subr.mxu0 0.0
    %2728 = vmatpush1.msra.mxu0 0.0
    %2729 = vmatprep.subr.mxu0 0.0
    %2730 = vmatpush1.msra.mxu0 0.0
    %2731 = vmatprep.subr.mxu0 0.0
    %2732 = vmatpush1.msra.mxu0 0.0
    %2733 = vmatprep.subr.mxu0 0.0
    %2734 = vmatpush1.msra.mxu0 0.0
    %2735 = vmatprep.subr.mxu0 0.0
    %2736 = vmatpush1.msra.mxu0 0.0
    %2737 = vmatprep.subr.mxu0 0.0
    %2738 = vmatpush1.msra.mxu0 0.0
    %2739 = vmatprep.subr.mxu0 0.0
    %2740 = vmatpush1.msra.mxu0 0.0
    %2741 = vmatprep.mubr.f32.mxu0 0.0
    %2742 = vmatmul.mubr.f32.gmra.mrb[0].mxu0 %v1877
    %v2743 = vpop.f32.mrb[0].mxu0
    %v2744 = vadd.f32 0.0, %v2743
    %v2745 = vpop.f32.mrb[0].mxu0
    %2746 = vmatprep.mubr.f32.mxu0 0.0
    %2747 = vmatmul.mubr.f32.gmra.mrb[0].mxu0 %v1880
    %v2748 = vpop.f32.mrb[0].mxu0
    %v2749 = vadd.f32 0.0, %v2748
    %v2750 = vpop.f32.mrb[0].mxu0
    %2751 = vdwg.mxu0
    %v2753 = vsel %vm452, %v2670, 0
    %v2756 = vsel %vm452, %v2671, 0
    %2758 = vmatprep.subr.mxu0 0.0
    %2759 = vmatpush1.msra.mxu0 %v2744
    %2760 = vmatprep.subr.mxu0 0.0
    %2761 = vmatpush1.msra.mxu0 %v2749
    %2762 = vmatprep.subr.mxu0 0.0
    %2763 = vmatpush1.msra.mxu0 0.0
    %2764 = vmatprep.subr.mxu0 0.0
    %2765 = vmatpush1.msra.mxu0 0.0
    %2766 = vmatprep.subr.mxu0 0.0
    %2767 = vmatpush1.msra.mxu0 0.0
    %2768 = vmatprep.subr.mxu0 0.0
    %2769 = vmatpush1.msra.mxu0 0.0
    %2770 = vmatprep.subr.mxu0 0.0
    %2771 = vmatpush1.msra.mxu0 0.0
    %2772 = vmatprep.subr.mxu0 0.0
    %2773 = vmatpush1.msra.mxu0 0.0
    %2774 = vmatprep.subr.mxu0 0.0
    %2775 = vmatpush1.msra.mxu0 0.0
    %2776 = vmatprep.subr.mxu0 0.0
    %2777 = vmatpush1.msra.mxu0 0.0
    %2778 = vmatprep.subr.mxu0 0.0
    %2779 = vmatpush1.msra.mxu0 0.0
    %2780 = vmatprep.subr.mxu0 0.0
    %2781 = vmatpush1.msra.mxu0 0.0
    %2782 = vmatprep.subr.mxu0 0.0
    %2783 = vmatpush1.msra.mxu0 0.0
    %2784 = vmatprep.subr.mxu0 0.0
    %2785 = vmatpush1.msra.mxu0 0.0
    %2786 = vmatprep.subr.mxu0 0.0
    %2787 = vmatpush1.msra.mxu0 0.0
    %2788 = vmatprep.subr.mxu0 0.0
    %2789 = vmatpush1.msra.mxu0 0.0
    %2790 = vmatprep.subr.mxu0 0.0
    %2791 = vmatpush1.msra.mxu0 0.0
    %2792 = vmatprep.subr.mxu0 0.0
    %2793 = vmatpush1.msra.mxu0 0.0
    %2794 = vmatprep.subr.mxu0 0.0
    %2795 = vmatpush1.msra.mxu0 0.0
    %2796 = vmatprep.subr.mxu0 0.0
    %2797 = vmatpush1.msra.mxu0 0.0
    %2798 = vmatprep.subr.mxu0 0.0
    %2799 = vmatpush1.msra.mxu0 0.0
    %2800 = vmatprep.subr.mxu0 0.0
    %2801 = vmatpush1.msra.mxu0 0.0
    %2802 = vmatprep.subr.mxu0 0.0
    %2803 = vmatpush1.msra.mxu0 0.0
    %2804 = vmatprep.subr.mxu0 0.0
    %2805 = vmatpush1.msra.mxu0 0.0
    %2806 = vmatprep.subr.mxu0 0.0
    %2807 = vmatpush1.msra.mxu0 0.0
    %2808 = vmatprep.subr.mxu0 0.0
    %2809 = vmatpush1.msra.mxu0 0.0
    %2810 = vmatprep.subr.mxu0 0.0
    %2811 = vmatpush1.msra.mxu0 0.0
    %2812 = vmatprep.subr.mxu0 0.0
    %2813 = vmatpush1.msra.mxu0 0.0
    %2814 = vmatprep.subr.mxu0 0.0
    %2815 = vmatpush1.msra.mxu0 0.0
    %2816 = vmatprep.subr.mxu0 0.0
    %2817 = vmatpush1.msra.mxu0 0.0
    %2818 = vmatprep.subr.mxu0 0.0
    %2819 = vmatpush1.msra.mxu0 0.0
    %2820 = vmatprep.subr.mxu0 0.0
    %2821 = vmatpush1.msra.mxu0 0.0
    %2822 = vmatprep.mubr.f32.mxu0 0.0
    %2823 = vmatmul.mubr.f32.gmra.mrb[0].mxu0 %v2753
    %v2824 = vpop.f32.mrb[0].mxu0
    %v2825 = vadd.f32 0.0, %v2824
    %v2826 = vpop.f32.mrb[0].mxu0
    %2827 = vmatprep.mubr.f32.mxu0 0.0
    %2828 = vmatmul.mubr.f32.gmra.mrb[0].mxu0 %v2756
    %v2829 = vpop.f32.mrb[0].mxu0
    %v2830 = vadd.f32 0.0, %v2829
    %v2831 = vpop.f32.mrb[0].mxu0
    %2832 = vdwg.mxu0
    %v2833 = vadd.f32 %v2563, %v2825
    %v2834 = vadd.f32 %v2568, %v2830
    %v2835 = vmul.f32 %v1949, %v170
    %v2836 = vmul.f32 %v1954, %v170
    %v2838 = vsel %vm189, %v2835, 0
    %v2841 = vsel %vm189, %v2836, 0
    %2843 = vmatprep.subr.mxu0 0.0
    %2844 = vmatpush1.xpose.msra.mxu0 %v2050
    %2845 = vmatprep.subr.mxu0 0.0
    %2846 = vmatpush1.xpose.msra.mxu0 %v2053
    %2847 = vmatprep.subr.mxu0 0.0
    %2848 = vmatpush1.xpose.msra.mxu0 0.0
    %2849 = vmatprep.subr.mxu0 0.0
    %2850 = vmatpush1.xpose.msra.mxu0 0.0
    %2851 = vmatprep.subr.mxu0 0.0
    %2852 = vmatpush1.xpose.msra.mxu0 0.0
    %2853 = vmatprep.subr.mxu0 0.0
    %2854 = vmatpush1.xpose.msra.mxu0 0.0
    %2855 = vmatprep.subr.mxu0 0.0
    %2856 = vmatpush1.xpose.msra.mxu0 0.0
    %2857 = vmatprep.subr.mxu0 0.0
    %2858 = vmatpush1.xpose.msra.mxu0 0.0
    %2859 = vmatprep.subr.mxu0 0.0
    %2860 = vmatpush1.xpose.msra.mxu0 0.0
    %2861 = vmatprep.subr.mxu0 0.0
    %2862 = vmatpush1.xpose.msra.mxu0 0.0
    %2863 = vmatprep.subr.mxu0 0.0
    %2864 = vmatpush1.xpose.msra.mxu0 0.0
    %2865 = vmatprep.subr.mxu0 0.0
    %2866 = vmatpush1.xpose.msra.mxu0 0.0
    %2867 = vmatprep.subr.mxu0 0.0
    %2868 = vmatpush1.xpose.msra.mxu0 0.0
    %2869 = vmatprep.subr.mxu0 0.0
    %2870 = vmatpush1.xpose.msra.mxu0 0.0
    %2871 = vmatprep.subr.mxu0 0.0
    %2872 = vmatpush1.xpose.msra.mxu0 0.0
    %2873 = vmatprep.subr.mxu0 0.0
    %2874 = vmatpush1.xpose.msra.mxu0 0.0
    %2875 = vmatprep.subr.mxu0 0.0
    %2876 = vmatpush1.xpose.msra.mxu0 0.0
    %2877 = vmatprep.subr.mxu0 0.0
    %2878 = vmatpush1.xpose.msra.mxu0 0.0
    %2879 = vmatprep.subr.mxu0 0.0
    %2880 = vmatpush1.xpose.msra.mxu0 0.0
    %2881 = vmatprep.subr.mxu0 0.0
    %2882 = vmatpush1.xpose.msra.mxu0 0.0
    %2883 = vmatprep.subr.mxu0 0.0
    %2884 = vmatpush1.xpose.msra.mxu0 0.0
    %2885 = vmatprep.subr.mxu0 0.0
    %2886 = vmatpush1.xpose.msra.mxu0 0.0
    %2887 = vmatprep.subr.mxu0 0.0
    %2888 = vmatpush1.xpose.msra.mxu0 0.0
    %2889 = vmatprep.subr.mxu0 0.0
    %2890 = vmatpush1.xpose.msra.mxu0 0.0
    %2891 = vmatprep.subr.mxu0 0.0
    %2892 = vmatpush1.xpose.msra.mxu0 0.0
    %2893 = vmatprep.subr.mxu0 0.0
    %2894 = vmatpush1.xpose.msra.mxu0 0.0
    %2895 = vmatprep.subr.mxu0 0.0
    %2896 = vmatpush1.xpose.msra.mxu0 0.0
    %2897 = vmatprep.subr.mxu0 0.0
    %2898 = vmatpush1.xpose.msra.mxu0 0.0
    %2899 = vmatprep.subr.mxu0 0.0
    %2900 = vmatpush1.xpose.msra.mxu0 0.0
    %2901 = vmatprep.subr.mxu0 0.0
    %2902 = vmatpush1.xpose.msra.mxu0 0.0
    %2903 = vmatprep.subr.mxu0 0.0
    %2904 = vmatpush1.xpose.msra.mxu0 0.0
    %2905 = vmatprep.subr.mxu0 0.0
    %2906 = vmatpush1.xpose.msra.mxu0 0.0
    %2907 = vmatprep.mubr.f32.mxu0 0.0
    %2908 = vmatmul.mubr.f32.gmra.mrb[0].mxu0 %v2838
    %v2909 = vpop.f32.mrb[0].mxu0
    %v2910 = vadd.f32 0.0, %v2909
    %v2911 = vpop.f32.mrb[0].mxu0
    %2912 = vmatprep.mubr.f32.mxu0 0.0
    %2913 = vmatmul.mubr.f32.gmra.mrb[0].mxu0 %v2841
    %v2914 = vpop.f32.mrb[0].mxu0
    %v2915 = vadd.f32 0.0, %v2914
    %v2916 = vpop.f32.mrb[0].mxu0
    %2917 = vdwg.mxu0
    %v2918 = vmul.f32 %v2910, 0.35355338
    %v2919 = vmul.f32 %v2915, 0.35355338
    %v2920 = vadd.f32 %v2918, %v149
    %v2921 = vadd.f32 %v2919, %v150
    %v2922 = vmul.f32 %v2920, 1.442695
    %v2923 = vpow.pop %v2922
    %v2924 = vmul.f32 %v2921, 1.442695
    %v2925 = vpow.pop %v2924
    %v2926 = vsel %vm452, %v2923, 0.0
    %2927 = vadd.xlane.f32.xlu0 %v2926
    %v2928 = vpop.xlane.xlu0 %2927
    %v2929 = vsel %vm452, %v2925, 0.0
    %2930 = vadd.xlane.f32.xlu0 %v2929
    %v2931 = vpop.xlane.xlu0 %2930
    %v2932 = vrcp.pop %v2928
    %v2933 = vrcp.pop %v2931
    %v2934 = vmul.f32 %v2923, %v2932
    %v2935 = vmul.f32 %v2925, %v2933
    %s2936 = scalar_lea.vmem [#allocation5], 480
    %v2937 = vld [vmem:[%s2936] sm:$0xff]
    %v2938 = vld [vmem:[%s2936 + $0x8] sm:$0xff]
    %v2939 = vld [vmem:[%s2936 + $0x10] sm:$0xff]
    %v2940 = vld [vmem:[%s2936 + $0x18] sm:$0xff]
    %2941 = vmatprep.subr.mxu0 0.0
    %2942 = vmatpush1.msra.mxu0 %v2937
    %2943 = vmatprep.subr.mxu0 0.0
    %2944 = vmatpush1.msra.mxu0 %v2938
    %2945 = vmatprep.subr.mxu0 0.0
    %2946 = vmatpush1.msra.mxu0 %v2939
    %2947 = vmatprep.subr.mxu0 0.0
    %2948 = vmatpush1.msra.mxu0 %v2940
    %2949 = vmatprep.subr.mxu0 0.0
    %2950 = vmatpush1.msra.mxu0 0.0
    %2951 = vmatprep.subr.mxu0 0.0
    %2952 = vmatpush1.msra.mxu0 0.0
    %2953 = vmatprep.subr.mxu0 0.0
    %2954 = vmatpush1.msra.mxu0 0.0
    %2955 = vmatprep.subr.mxu0 0.0
    %2956 = vmatpush1.msra.mxu0 0.0
    %2957 = vmatprep.subr.mxu0 0.0
    %2958 = vmatpush1.msra.mxu0 0.0
    %2959 = vmatprep.subr.mxu0 0.0
    %2960 = vmatpush1.msra.mxu0 0.0
    %2961 = vmatprep.subr.mxu0 0.0
    %2962 = vmatpush1.msra.mxu0 0.0
    %2963 = vmatprep.subr.mxu0 0.0
    %2964 = vmatpush1.msra.mxu0 0.0
    %2965 = vmatprep.subr.mxu0 0.0
    %2966 = vmatpush1.msra.mxu0 0.0
    %2967 = vmatprep.subr.mxu0 0.0
    %2968 = vmatpush1.msra.mxu0 0.0
    %2969 = vmatprep.subr.mxu0 0.0
    %2970 = vmatpush1.msra.mxu0 0.0
    %2971 = vmatprep.subr.mxu0 0.0
    %2972 = vmatpush1.msra.mxu0 0.0
    %2973 = vmatprep.subr.mxu0 0.0
    %2974 = vmatpush1.msra.mxu0 0.0
    %2975 = vmatprep.subr.mxu0 0.0
    %2976 = vmatpush1.msra.mxu0 0.0
    %2977 = vmatprep.subr.mxu0 0.0
    %2978 = vmatpush1.msra.mxu0 0.0
    %2979 = vmatprep.subr.mxu0 0.0
    %2980 = vmatpush1.msra.mxu0 0.0
    %2981 = vmatprep.subr.mxu0 0.0
    %2982 = vmatpush1.msra.mxu0 0.0
    %2983 = vmatprep.subr.mxu0 0.0
    %2984 = vmatpush1.msra.mxu0 0.0
    %2985 = vmatprep.subr.mxu0 0.0
    %2986 = vmatpush1.msra.mxu0 0.0
    %2987 = vmatprep.subr.mxu0 0.0
    %2988 = vmatpush1.msra.mxu0 0.0
    %2989 = vmatprep.subr.mxu0 0.0
    %2990 = vmatpush1.msra.mxu0 0.0
    %2991 = vmatprep.subr.mxu0 0.0
    %2992 = vmatpush1.msra.mxu0 0.0
    %2993 = vmatprep.subr.mxu0 0.0
    %2994 = vmatpush1.msra.mxu0 0.0
    %2995 = vmatprep.subr.mxu0 0.0
    %2996 = vmatpush1.msra.mxu0 0.0
    %2997 = vmatprep.subr.mxu0 0.0
    %2998 = vmatpush1.msra.mxu0 0.0
    %2999 = vmatprep.subr.mxu0 0.0
    %3000 = vmatpush1.msra.mxu0 0.0
    %3001 = vmatprep.subr.mxu0 0.0
    %3002 = vmatpush1.msra.mxu0 0.0
    %3003 = vmatprep.subr.mxu0 0.0
    %3004 = vmatpush1.msra.mxu0 0.0
    %3005 = vmatprep.mubr.f32.mxu0 0.0
    %3006 = vmatmul.mubr.f32.gmra.mrb[0].mxu0 %v1877
    %v3007 = vpop.f32.mrb[0].mxu0
    %v3008 = vadd.f32 0.0, %v3007
    %v3009 = vpop.f32.mrb[0].mxu0
    %3010 = vmatprep.mubr.f32.mxu0 0.0
    %3011 = vmatmul.mubr.f32.gmra.mrb[0].mxu0 %v1880
    %v3012 = vpop.f32.mrb[0].mxu0
    %v3013 = vadd.f32 0.0, %v3012
    %v3014 = vpop.f32.mrb[0].mxu0
    %3015 = vdwg.mxu0
    %v3017 = vsel %vm452, %v2934, 0
    %v3020 = vsel %vm452, %v2935, 0
    %3022 = vmatprep.subr.mxu0 0.0
    %3023 = vmatpush1.msra.mxu0 %v3008
    %3024 = vmatprep.subr.mxu0 0.0
    %3025 = vmatpush1.msra.mxu0 %v3013
    %3026 = vmatprep.subr.mxu0 0.0
    %3027 = vmatpush1.msra.mxu0 0.0
    %3028 = vmatprep.subr.mxu0 0.0
    %3029 = vmatpush1.msra.mxu0 0.0
    %3030 = vmatprep.subr.mxu0 0.0
    %3031 = vmatpush1.msra.mxu0 0.0
    %3032 = vmatprep.subr.mxu0 0.0
    %3033 = vmatpush1.msra.mxu0 0.0
    %3034 = vmatprep.subr.mxu0 0.0
    %3035 = vmatpush1.msra.mxu0 0.0
    %3036 = vmatprep.subr.mxu0 0.0
    %3037 = vmatpush1.msra.mxu0 0.0
    %3038 = vmatprep.subr.mxu0 0.0
    %3039 = vmatpush1.msra.mxu0 0.0
    %3040 = vmatprep.subr.mxu0 0.0
    %3041 = vmatpush1.msra.mxu0 0.0
    %3042 = vmatprep.subr.mxu0 0.0
    %3043 = vmatpush1.msra.mxu0 0.0
    %3044 = vmatprep.subr.mxu0 0.0
    %3045 = vmatpush1.msra.mxu0 0.0
    %3046 = vmatprep.subr.mxu0 0.0
    %3047 = vmatpush1.msra.mxu0 0.0
    %3048 = vmatprep.subr.mxu0 0.0
    %3049 = vmatpush1.msra.mxu0 0.0
    %3050 = vmatprep.subr.mxu0 0.0
    %3051 = vmatpush1.msra.mxu0 0.0
    %3052 = vmatprep.subr.mxu0 0.0
    %3053 = vmatpush1.msra.mxu0 0.0
    %3054 = vmatprep.subr.mxu0 0.0
    %3055 = vmatpush1.msra.mxu0 0.0
    %3056 = vmatprep.subr.mxu0 0.0
    %3057 = vmatpush1.msra.mxu0 0.0
    %3058 = vmatprep.subr.mxu0 0.0
    %3059 = vmatpush1.msra.mxu0 0.0
    %3060 = vmatprep.subr.mxu0 0.0
    %3061 = vmatpush1.msra.mxu0 0.0
    %3062 = vmatprep.subr.mxu0 0.0
    %3063 = vmatpush1.msra.mxu0 0.0
    %3064 = vmatprep.subr.mxu0 0.0
    %3065 = vmatpush1.msra.mxu0 0.0
    %3066 = vmatprep.subr.mxu0 0.0
    %3067 = vmatpush1.msra.mxu0 0.0
    %3068 = vmatprep.subr.mxu0 0.0
    %3069 = vmatpush1.msra.mxu0 0.0
    %3070 = vmatprep.subr.mxu0 0.0
    %3071 = vmatpush1.msra.mxu0 0.0
    %3072 = vmatprep.subr.mxu0 0.0
    %3073 = vmatpush1.msra.mxu0 0.0
    %3074 = vmatprep.subr.mxu0 0.0
    %3075 = vmatpush1.msra.mxu0 0.0
    %3076 = vmatprep.subr.mxu0 0.0
    %3077 = vmatpush1.msra.mxu0 0.0
    %3078 = vmatprep.subr.mxu0 0.0
    %3079 = vmatpush1.msra.mxu0 0.0
    %3080 = vmatprep.subr.mxu0 0.0
    %3081 = vmatpush1.msra.mxu0 0.0
    %3082 = vmatprep.subr.mxu0 0.0
    %3083 = vmatpush1.msra.mxu0 0.0
    %3084 = vmatprep.subr.mxu0 0.0
    %3085 = vmatpush1.msra.mxu0 0.0
    %3086 = vmatprep.mubr.f32.mxu0 0.0
    %3087 = vmatmul.mubr.f32.gmra.mrb[0].mxu0 %v3017
    %v3088 = vpop.f32.mrb[0].mxu0
    %v3089 = vadd.f32 0.0, %v3088
    %v3090 = vpop.f32.mrb[0].mxu0
    %3091 = vmatprep.mubr.f32.mxu0 0.0
    %3092 = vmatmul.mubr.f32.gmra.mrb[0].mxu0 %v3020
    %v3093 = vpop.f32.mrb[0].mxu0
    %v3094 = vadd.f32 0.0, %v3093
    %v3095 = vpop.f32.mrb[0].mxu0
    %3096 = vdwg.mxu0
    %v3097 = vadd.f32 %v2833, %v3089
    %v3098 = vadd.f32 %v2834, %v3094
    %v3099 = vlaneseq
    %v3100 = vshrl.u32 %v3099, 7
    %v3101 = vsub.s32 0, %v3100
    %v3102 = vrot.slane %v1859, %v3101
    %v3103 = vadd.f32 %v3097, %v3102
    %v3104 = vadd.f32 %v3098, %v3102
    %v3105 = vadd.f32 %v1855, %v3103
    %v3106 = vadd.f32 %v1856, %v3104
    %v3107 = vsel %vm189, %v3105, 0.0
    %3108 = vadd.xlane.f32.xlu0 %v3107
    %v3109 = vpop.xlane.xlu0 %3108
    %v3110 = vsel %vm189, %v3106, 0.0
    %3111 = vadd.xlane.f32.xlu0 %v3110
    %v3112 = vpop.xlane.xlu0 %3111
    %v3113 = vmul.f32 %v3109, %v1428
    %v3114 = vmul.f32 %v3112, %v1428
    %v3115 = vsub.f32 %v3105, %v3113
    %v3116 = vsub.f32 %v3106, %v3114
    %v3117 = vmul.f32 %v3115, %v3115
    %v3118 = vmul.f32 %v3116, %v3116
    %v3119 = vsel %vm189, %v3117, 0.0
    %3120 = vadd.xlane.f32.xlu0 %v3119
    %v3121 = vpop.xlane.xlu0 %3120
    %v3122 = vsel %vm189, %v3118, 0.0
    %3123 = vadd.xlane.f32.xlu0 %v3122
    %v3124 = vpop.xlane.xlu0 %3123
    %v3125 = vmul.f32 %v3121, %v1428
    %v3126 = vmul.f32 %v3124, %v1428
    %v3127 = vadd.f32 %v3125, 1e-05
    %v3128 = vadd.f32 %v3126, 1e-05
    %v3129 = vrsqrt.pop %v3127
    %v3130 = vrsqrt.pop %v3128
    %v3131 = vmul.f32 %v3115, %v3129
    %v3132 = vmul.f32 %v3116, %v3130
    %v3133 = vlaneseq
    %v3134 = vshrl.u32 %v3133, 7
    %v3135 = vsub.s32 0, %v3134
    %v3136 = vrot.slane %v1860, %v3135
    %v3137 = vmul.f32 %v3131, %v3136
    %v3138 = vmul.f32 %v3132, %v3136
    %v3139 = vlaneseq
    %v3140 = vshrl.u32 %v3139, 7
    %v3141 = vsub.s32 0, %v3140
    %v3142 = vrot.slane %v1861, %v3141
    %v3143 = vadd.f32 %v3137, %v3142
    %v3144 = vadd.f32 %v3138, %v3142
    %s3145 = scalar_lea.vmem [#allocation5], 512
    %v3146 = vld [vmem:[%s3145] sm:$0xff]
    %v3147 = vld [vmem:[%s3145 + $0x8] sm:$0xff]
    %v3148 = vld [vmem:[%s3145 + $0x10] sm:$0xff]
    %v3149 = vld [vmem:[%s3145 + $0x18] sm:$0xff]
    %v3150 = vlaneseq
    %v3151 = vshrl.u32 %v3150, 7
    %v3152 = vsub.s32 0, %v3151
    %v3153 = vrot.slane %v1865, %v3152
    %v3155 = vsel %vm189, %v3143, 0
    %v3158 = vsel %vm189, %v3144, 0
    %3160 = vmatprep.subr.mxu0 0.0
    %3161 = vmatpush1.msra.mxu0 %v3146
    %3162 = vmatprep.subr.mxu0 0.0
    %3163 = vmatpush1.msra.mxu0 %v3147
    %3164 = vmatprep.subr.mxu0 0.0
    %3165 = vmatpush1.msra.mxu0 %v3148
    %3166 = vmatprep.subr.mxu0 0.0
    %3167 = vmatpush1.msra.mxu0 %v3149
    %3168 = vmatprep.subr.mxu0 0.0
    %3169 = vmatpush1.msra.mxu0 0.0
    %3170 = vmatprep.subr.mxu0 0.0
    %3171 = vmatpush1.msra.mxu0 0.0
    %3172 = vmatprep.subr.mxu0 0.0
    %3173 = vmatpush1.msra.mxu0 0.0
    %3174 = vmatprep.subr.mxu0 0.0
    %3175 = vmatpush1.msra.mxu0 0.0
    %3176 = vmatprep.subr.mxu0 0.0
    %3177 = vmatpush1.msra.mxu0 0.0
    %3178 = vmatprep.subr.mxu0 0.0
    %3179 = vmatpush1.msra.mxu0 0.0
    %3180 = vmatprep.subr.mxu0 0.0
    %3181 = vmatpush1.msra.mxu0 0.0
    %3182 = vmatprep.subr.mxu0 0.0
    %3183 = vmatpush1.msra.mxu0 0.0
    %3184 = vmatprep.subr.mxu0 0.0
    %3185 = vmatpush1.msra.mxu0 0.0
    %3186 = vmatprep.subr.mxu0 0.0
    %3187 = vmatpush1.msra.mxu0 0.0
    %3188 = vmatprep.subr.mxu0 0.0
    %3189 = vmatpush1.msra.mxu0 0.0
    %3190 = vmatprep.subr.mxu0 0.0
    %3191 = vmatpush1.msra.mxu0 0.0
    %3192 = vmatprep.subr.mxu0 0.0
    %3193 = vmatpush1.msra.mxu0 0.0
    %3194 = vmatprep.subr.mxu0 0.0
    %3195 = vmatpush1.msra.mxu0 0.0
    %3196 = vmatprep.subr.mxu0 0.0
    %3197 = vmatpush1.msra.mxu0 0.0
    %3198 = vmatprep.subr.mxu0 0.0
    %3199 = vmatpush1.msra.mxu0 0.0
    %3200 = vmatprep.subr.mxu0 0.0
    %3201 = vmatpush1.msra.mxu0 0.0
    %3202 = vmatprep.subr.mxu0 0.0
    %3203 = vmatpush1.msra.mxu0 0.0
    %3204 = vmatprep.subr.mxu0 0.0
    %3205 = vmatpush1.msra.mxu0 0.0
    %3206 = vmatprep.subr.mxu0 0.0
    %3207 = vmatpush1.msra.mxu0 0.0
    %3208 = vmatprep.subr.mxu0 0.0
    %3209 = vmatpush1.msra.mxu0 0.0
    %3210 = vmatprep.subr.mxu0 0.0
    %3211 = vmatpush1.msra.mxu0 0.0
    %3212 = vmatprep.subr.mxu0 0.0
    %3213 = vmatpush1.msra.mxu0 0.0
    %3214 = vmatprep.subr.mxu0 0.0
    %3215 = vmatpush1.msra.mxu0 0.0
    %3216 = vmatprep.subr.mxu0 0.0
    %3217 = vmatpush1.msra.mxu0 0.0
    %3218 = vmatprep.subr.mxu0 0.0
    %3219 = vmatpush1.msra.mxu0 0.0
    %3220 = vmatprep.subr.mxu0 0.0
    %3221 = vmatpush1.msra.mxu0 0.0
    %3222 = vmatprep.subr.mxu0 0.0
    %3223 = vmatpush1.msra.mxu0 0.0
    %3224 = vmatprep.mubr.f32.mxu0 0.0
    %3225 = vmatmul.mubr.f32.gmra.mrb[0].mxu0 %v3155
    %v3226 = vpop.f32.mrb[0].mxu0
    %v3227 = vadd.f32 %v3153, %v3226
    %v3228 = vpop.f32.mrb[0].mxu0
    %3229 = vmatprep.mubr.f32.mxu0 0.0
    %3230 = vmatmul.mubr.f32.gmra.mrb[0].mxu0 %v3158
    %v3231 = vpop.f32.mrb[0].mxu0
    %v3232 = vadd.f32 %v3153, %v3231
    %v3233 = vpop.f32.mrb[0].mxu0
    %3234 = vdwg.mxu0
    %v3235 = vmax.f32 %v3227, 0.0
    %v3236 = vmax.f32 %v3232, 0.0
    %s3237 = scalar_lea.vmem [#allocation5], 544
    %v3238 = vld [vmem:[%s3237] sm:$0xff]
    %v3239 = vld [vmem:[%s3237 + $0x8] sm:$0xff]
    %v3240 = vld [vmem:[%s3237 + $0x10] sm:$0xff]
    %v3241 = vld [vmem:[%s3237 + $0x18] sm:$0xff]
    %v3242 = vlaneseq
    %v3243 = vshrl.u32 %v3242, 7
    %v3244 = vsub.s32 0, %v3243
    %v3245 = vrot.slane %v1866, %v3244
    %3246 = vmatprep.subr.mxu0 0.0
    %3247 = vmatpush1.msra.mxu0 %v3238
    %3248 = vmatprep.subr.mxu0 0.0
    %3249 = vmatpush1.msra.mxu0 %v3239
    %3250 = vmatprep.subr.mxu0 0.0
    %3251 = vmatpush1.msra.mxu0 %v3240
    %3252 = vmatprep.subr.mxu0 0.0
    %3253 = vmatpush1.msra.mxu0 %v3241
    %3254 = vmatprep.subr.mxu0 0.0
    %3255 = vmatpush1.msra.mxu0 0.0
    %3256 = vmatprep.subr.mxu0 0.0
    %3257 = vmatpush1.msra.mxu0 0.0
    %3258 = vmatprep.subr.mxu0 0.0
    %3259 = vmatpush1.msra.mxu0 0.0
    %3260 = vmatprep.subr.mxu0 0.0
    %3261 = vmatpush1.msra.mxu0 0.0
    %3262 = vmatprep.subr.mxu0 0.0
    %3263 = vmatpush1.msra.mxu0 0.0
    %3264 = vmatprep.subr.mxu0 0.0
    %3265 = vmatpush1.msra.mxu0 0.0
    %3266 = vmatprep.subr.mxu0 0.0
    %3267 = vmatpush1.msra.mxu0 0.0
    %3268 = vmatprep.subr.mxu0 0.0
    %3269 = vmatpush1.msra.mxu0 0.0
    %3270 = vmatprep.subr.mxu0 0.0
    %3271 = vmatpush1.msra.mxu0 0.0
    %3272 = vmatprep.subr.mxu0 0.0
    %3273 = vmatpush1.msra.mxu0 0.0
    %3274 = vmatprep.subr.mxu0 0.0
    %3275 = vmatpush1.msra.mxu0 0.0
    %3276 = vmatprep.subr.mxu0 0.0
    %3277 = vmatpush1.msra.mxu0 0.0
    %3278 = vmatprep.subr.mxu0 0.0
    %3279 = vmatpush1.msra.mxu0 0.0
    %3280 = vmatprep.subr.mxu0 0.0
    %3281 = vmatpush1.msra.mxu0 0.0
    %3282 = vmatprep.subr.mxu0 0.0
    %3283 = vmatpush1.msra.mxu0 0.0
    %3284 = vmatprep.subr.mxu0 0.0
    %3285 = vmatpush1.msra.mxu0 0.0
    %3286 = vmatprep.subr.mxu0 0.0
    %3287 = vmatpush1.msra.mxu0 0.0
    %3288 = vmatprep.subr.mxu0 0.0
    %3289 = vmatpush1.msra.mxu0 0.0
    %3290 = vmatprep.subr.mxu0 0.0
    %3291 = vmatpush1.msra.mxu0 0.0
    %3292 = vmatprep.subr.mxu0 0.0
    %3293 = vmatpush1.msra.mxu0 0.0
    %3294 = vmatprep.subr.mxu0 0.0
    %3295 = vmatpush1.msra.mxu0 0.0
    %3296 = vmatprep.subr.mxu0 0.0
    %3297 = vmatpush1.msra.mxu0 0.0
    %3298 = vmatprep.subr.mxu0 0.0
    %3299 = vmatpush1.msra.mxu0 0.0
    %3300 = vmatprep.subr.mxu0 0.0
    %3301 = vmatpush1.msra.mxu0 0.0
    %3302 = vmatprep.subr.mxu0 0.0
    %3303 = vmatpush1.msra.mxu0 0.0
    %3304 = vmatprep.subr.mxu0 0.0
    %3305 = vmatpush1.msra.mxu0 0.0
    %3306 = vmatprep.subr.mxu0 0.0
    %3307 = vmatpush1.msra.mxu0 0.0
    %3308 = vmatprep.subr.mxu0 0.0
    %3309 = vmatpush1.msra.mxu0 0.0
    %3310 = vmatprep.mubr.f32.mxu0 0.0
    %3311 = vmatmul.mubr.f32.gmra.mrb[0].mxu0 %v3155
    %v3312 = vpop.f32.mrb[0].mxu0
    %v3313 = vadd.f32 %v3245, %v3312
    %v3314 = vpop.f32.mrb[0].mxu0
    %3315 = vmatprep.mubr.f32.mxu0 0.0
    %3316 = vmatmul.mubr.f32.gmra.mrb[0].mxu0 %v3158
    %v3317 = vpop.f32.mrb[0].mxu0
    %v3318 = vadd.f32 %v3245, %v3317
    %v3319 = vpop.f32.mrb[0].mxu0
    %3320 = vdwg.mxu0
    %v3321 = vmax.f32 %v3313, 0.0
    %v3322 = vmax.f32 %v3318, 0.0
    %s3323 = scalar_lea.vmem [#allocation5], 576
    %v3324 = vld [vmem:[%s3323] sm:$0xff]
    %v3325 = vld [vmem:[%s3323 + $0x8] sm:$0xff]
    %v3326 = vld [vmem:[%s3323 + $0x10] sm:$0xff]
    %v3327 = vld [vmem:[%s3323 + $0x18] sm:$0xff]
    %s3328 = scalar_lea.vmem [#allocation5], 608
    %v3329 = vld [vmem:[%s3328] sm:$0xff]
    %v3330 = vld [vmem:[%s3328 + $0x8] sm:$0xff]
    %v3331 = vld [vmem:[%s3328 + $0x10] sm:$0xff]
    %v3332 = vld [vmem:[%s3328 + $0x18] sm:$0xff]
    %v3334 = vsel %vm189, %v3321, 0
    %v3337 = vsel %vm189, %v3322, 0
    %3339 = vmatprep.subr.mxu0 0.0
    %3340 = vmatpush1.msra.mxu0 %v3329
    %3341 = vmatprep.subr.mxu0 0.0
    %3342 = vmatpush1.msra.mxu0 %v3330
    %3343 = vmatprep.subr.mxu0 0.0
    %3344 = vmatpush1.msra.mxu0 %v3331
    %3345 = vmatprep.subr.mxu0 0.0
    %3346 = vmatpush1.msra.mxu0 %v3332
    %3347 = vmatprep.subr.mxu0 0.0
    %3348 = vmatpush1.msra.mxu0 0.0
    %3349 = vmatprep.subr.mxu0 0.0
    %3350 = vmatpush1.msra.mxu0 0.0
    %3351 = vmatprep.subr.mxu0 0.0
    %3352 = vmatpush1.msra.mxu0 0.0
    %3353 = vmatprep.subr.mxu0 0.0
    %3354 = vmatpush1.msra.mxu0 0.0
    %3355 = vmatprep.subr.mxu0 0.0
    %3356 = vmatpush1.msra.mxu0 0.0
    %3357 = vmatprep.subr.mxu0 0.0
    %3358 = vmatpush1.msra.mxu0 0.0
    %3359 = vmatprep.subr.mxu0 0.0
    %3360 = vmatpush1.msra.mxu0 0.0
    %3361 = vmatprep.subr.mxu0 0.0
    %3362 = vmatpush1.msra.mxu0 0.0
    %3363 = vmatprep.subr.mxu0 0.0
    %3364 = vmatpush1.msra.mxu0 0.0
    %3365 = vmatprep.subr.mxu0 0.0
    %3366 = vmatpush1.msra.mxu0 0.0
    %3367 = vmatprep.subr.mxu0 0.0
    %3368 = vmatpush1.msra.mxu0 0.0
    %3369 = vmatprep.subr.mxu0 0.0
    %3370 = vmatpush1.msra.mxu0 0.0
    %3371 = vmatprep.subr.mxu0 0.0
    %3372 = vmatpush1.msra.mxu0 0.0
    %3373 = vmatprep.subr.mxu0 0.0
    %3374 = vmatpush1.msra.mxu0 0.0
    %3375 = vmatprep.subr.mxu0 0.0
    %3376 = vmatpush1.msra.mxu0 0.0
    %3377 = vmatprep.subr.mxu0 0.0
    %3378 = vmatpush1.msra.mxu0 0.0
    %3379 = vmatprep.subr.mxu0 0.0
    %3380 = vmatpush1.msra.mxu0 0.0
    %3381 = vmatprep.subr.mxu0 0.0
    %3382 = vmatpush1.msra.mxu0 0.0
    %3383 = vmatprep.subr.mxu0 0.0
    %3384 = vmatpush1.msra.mxu0 0.0
    %3385 = vmatprep.subr.mxu0 0.0
    %3386 = vmatpush1.msra.mxu0 0.0
    %3387 = vmatprep.subr.mxu0 0.0
    %3388 = vmatpush1.msra.mxu0 0.0
    %3389 = vmatprep.subr.mxu0 0.0
    %3390 = vmatpush1.msra.mxu0 0.0
    %3391 = vmatprep.subr.mxu0 0.0
    %3392 = vmatpush1.msra.mxu0 0.0
    %3393 = vmatprep.subr.mxu0 0.0
    %3394 = vmatpush1.msra.mxu0 0.0
    %3395 = vmatprep.subr.mxu0 0.0
    %3396 = vmatpush1.msra.mxu0 0.0
    %3397 = vmatprep.subr.mxu0 0.0
    %3398 = vmatpush1.msra.mxu0 0.0
    %3399 = vmatprep.subr.mxu0 0.0
    %3400 = vmatpush1.msra.mxu0 0.0
    %3401 = vmatprep.subr.mxu0 0.0
    %3402 = vmatpush1.msra.mxu0 0.0
    %3403 = vmatprep.mubr.f32.mxu0 0.0
    %3404 = vmatmul.mubr.f32.gmra.mrb[0].mxu0 %v3334
    %v3405 = vpop.f32.mrb[0].mxu0
    %v3406 = vadd.f32 0.0, %v3405
    %v3407 = vpop.f32.mrb[0].mxu0
    %3408 = vmatprep.mubr.f32.mxu0 0.0
    %3409 = vmatmul.mubr.f32.gmra.mrb[0].mxu0 %v3337
    %v3410 = vpop.f32.mrb[0].mxu0
    %v3411 = vadd.f32 0.0, %v3410
    %v3412 = vpop.f32.mrb[0].mxu0
    %3413 = vdwg.mxu0
    %v3415 = vsel %vm189, %v3235, 0
    %v3418 = vsel %vm189, %v3236, 0
    %3420 = vmatprep.subr.mxu0 0.0
    %3421 = vmatpush1.msra.mxu0 %v3324
    %3422 = vmatprep.subr.mxu0 0.0
    %3423 = vmatpush1.msra.mxu0 %v3325
    %3424 = vmatprep.subr.mxu0 0.0
    %3425 = vmatpush1.msra.mxu0 %v3326
    %3426 = vmatprep.subr.mxu0 0.0
    %3427 = vmatpush1.msra.mxu0 %v3327
    %3428 = vmatprep.subr.mxu0 0.0
    %3429 = vmatpush1.msra.mxu0 0.0
    %3430 = vmatprep.subr.mxu0 0.0
    %3431 = vmatpush1.msra.mxu0 0.0
    %3432 = vmatprep.subr.mxu0 0.0
    %3433 = vmatpush1.msra.mxu0 0.0
    %3434 = vmatprep.subr.mxu0 0.0
    %3435 = vmatpush1.msra.mxu0 0.0
    %3436 = vmatprep.subr.mxu0 0.0
    %3437 = vmatpush1.msra.mxu0 0.0
    %3438 = vmatprep.subr.mxu0 0.0
    %3439 = vmatpush1.msra.mxu0 0.0
    %3440 = vmatprep.subr.mxu0 0.0
    %3441 = vmatpush1.msra.mxu0 0.0
    %3442 = vmatprep.subr.mxu0 0.0
    %3443 = vmatpush1.msra.mxu0 0.0
    %3444 = vmatprep.subr.mxu0 0.0
    %3445 = vmatpush1.msra.mxu0 0.0
    %3446 = vmatprep.subr.mxu0 0.0
    %3447 = vmatpush1.msra.mxu0 0.0
    %3448 = vmatprep.subr.mxu0 0.0
    %3449 = vmatpush1.msra.mxu0 0.0
    %3450 = vmatprep.subr.mxu0 0.0
    %3451 = vmatpush1.msra.mxu0 0.0
    %3452 = vmatprep.subr.mxu0 0.0
    %3453 = vmatpush1.msra.mxu0 0.0
    %3454 = vmatprep.subr.mxu0 0.0
    %3455 = vmatpush1.msra.mxu0 0.0
    %3456 = vmatprep.subr.mxu0 0.0
    %3457 = vmatpush1.msra.mxu0 0.0
    %3458 = vmatprep.subr.mxu0 0.0
    %3459 = vmatpush1.msra.mxu0 0.0
    %3460 = vmatprep.subr.mxu0 0.0
    %3461 = vmatpush1.msra.mxu0 0.0
    %3462 = vmatprep.subr.mxu0 0.0
    %3463 = vmatpush1.msra.mxu0 0.0
    %3464 = vmatprep.subr.mxu0 0.0
    %3465 = vmatpush1.msra.mxu0 0.0
    %3466 = vmatprep.subr.mxu0 0.0
    %3467 = vmatpush1.msra.mxu0 0.0
    %3468 = vmatprep.subr.mxu0 0.0
    %3469 = vmatpush1.msra.mxu0 0.0
    %3470 = vmatprep.subr.mxu0 0.0
    %3471 = vmatpush1.msra.mxu0 0.0
    %3472 = vmatprep.subr.mxu0 0.0
    %3473 = vmatpush1.msra.mxu0 0.0
    %3474 = vmatprep.subr.mxu0 0.0
    %3475 = vmatpush1.msra.mxu0 0.0
    %3476 = vmatprep.subr.mxu0 0.0
    %3477 = vmatpush1.msra.mxu0 0.0
    %3478 = vmatprep.subr.mxu0 0.0
    %3479 = vmatpush1.msra.mxu0 0.0
    %3480 = vmatprep.subr.mxu0 0.0
    %3481 = vmatpush1.msra.mxu0 0.0
    %3482 = vmatprep.subr.mxu0 0.0
    %3483 = vmatpush1.msra.mxu0 0.0
    %3484 = vmatprep.mubr.f32.mxu0 0.0
    %3485 = vmatmul.mubr.f32.gmra.mrb[0].mxu0 %v3415
    %v3486 = vpop.f32.mrb[0].mxu0
    %v3487 = vadd.f32 %v3406, %v3486
    %v3488 = vpop.f32.mrb[0].mxu0
    %3489 = vmatprep.mubr.f32.mxu0 0.0
    %3490 = vmatmul.mubr.f32.gmra.mrb[0].mxu0 %v3418
    %v3491 = vpop.f32.mrb[0].mxu0
    %v3492 = vadd.f32 %v3411, %v3491
    %v3493 = vpop.f32.mrb[0].mxu0
    %3494 = vdwg.mxu0
    %v3495 = vlaneseq
    %v3496 = vshrl.u32 %v3495, 7
    %v3497 = vsub.s32 0, %v3496
    %v3498 = vrot.slane %v1864, %v3497
    %v3499 = vadd.f32 %v3487, %v3498
    %v3500 = vadd.f32 %v3492, %v3498
    %v3501 = vadd.f32 %v3143, %v3499
    %v3502 = vadd.f32 %v3144, %v3500
    %v3503 = vsel %vm189, %v3501, 0.0
    %3504 = vadd.xlane.f32.xlu0 %v3503
    %v3505 = vpop.xlane.xlu0 %3504
    %v3506 = vsel %vm189, %v3502, 0.0
    %3507 = vadd.xlane.f32.xlu0 %v3506
    %v3508 = vpop.xlane.xlu0 %3507
    %v3509 = vmul.f32 %v3505, %v1428
    %v3510 = vmul.f32 %v3508, %v1428
    %v3511 = vsub.f32 %v3501, %v3509
    %v3512 = vsub.f32 %v3502, %v3510
    %v3513 = vmul.f32 %v3511, %v3511
    %v3514 = vmul.f32 %v3512, %v3512
    %v3515 = vsel %vm189, %v3513, 0.0
    %3516 = vadd.xlane.f32.xlu0 %v3515
    %v3517 = vpop.xlane.xlu0 %3516
    %v3518 = vsel %vm189, %v3514, 0.0
    %3519 = vadd.xlane.f32.xlu0 %v3518
    %v3520 = vpop.xlane.xlu0 %3519
    %v3521 = vmul.f32 %v3517, %v1428
    %v3522 = vmul.f32 %v3520, %v1428
    %v3523 = vadd.f32 %v3521, 1e-05
    %v3524 = vadd.f32 %v3522, 1e-05
    %v3525 = vrsqrt.pop %v3523
    %v3526 = vrsqrt.pop %v3524
    %v3527 = vmul.f32 %v3511, %v3525
    %v3528 = vmul.f32 %v3512, %v3526
    %v3529 = vlaneseq
    %v3530 = vshrl.u32 %v3529, 7
    %v3531 = vsub.s32 0, %v3530
    %v3532 = vrot.slane %v1862, %v3531
    %v3533 = vmul.f32 %v3527, %v3532
    %v3534 = vmul.f32 %v3528, %v3532
    %v3535 = vlaneseq
    %v3536 = vshrl.u32 %v3535, 7
    %v3537 = vsub.s32 0, %v3536
    %v3538 = vrot.slane %v1863, %v3537
    %v3539 = vadd.f32 %v3533, %v3538
    %v3540 = vadd.f32 %v3534, %v3538
    %s3541 = scalar_lea.vmem [#allocation5], 640
    %v3542 = vld [vmem:[%s3541] sm:$0xff]
    %v3543 = vld [vmem:[%s3541 + $0x8] sm:$0xff]
    %v3544 = vld [vmem:[%s3541 + $0x10] sm:$0xff]
    %v3545 = vld [vmem:[%s3541 + $0x18] sm:$0xff]
    %v3546 = vld [vmem:[%s3 + $0x14] sm:$0x1]
    %v3547 = vlaneseq
    %v3548 = vshrl.u32 %v3547, 7
    %v3549 = vsub.s32 0, %v3548
    %v3550 = vrot.slane %v3546, %v3549
    %v3552 = vsel %vm189, %v3539, 0
    %v3555 = vsel %vm189, %v3540, 0
    %3557 = vmatprep.subr.mxu0 0.0
    %3558 = vmatpush1.msra.mxu0 %v3542
    %3559 = vmatprep.subr.mxu0 0.0
    %3560 = vmatpush1.msra.mxu0 %v3543
    %3561 = vmatprep.subr.mxu0 0.0
    %3562 = vmatpush1.msra.mxu0 %v3544
    %3563 = vmatprep.subr.mxu0 0.0
    %3564 = vmatpush1.msra.mxu0 %v3545
    %3565 = vmatprep.subr.mxu0 0.0
    %3566 = vmatpush1.msra.mxu0 0.0
    %3567 = vmatprep.subr.mxu0 0.0
    %3568 = vmatpush1.msra.mxu0 0.0
    %3569 = vmatprep.subr.mxu0 0.0
    %3570 = vmatpush1.msra.mxu0 0.0
    %3571 = vmatprep.subr.mxu0 0.0
    %3572 = vmatpush1.msra.mxu0 0.0
    %3573 = vmatprep.subr.mxu0 0.0
    %3574 = vmatpush1.msra.mxu0 0.0
    %3575 = vmatprep.subr.mxu0 0.0
    %3576 = vmatpush1.msra.mxu0 0.0
    %3577 = vmatprep.subr.mxu0 0.0
    %3578 = vmatpush1.msra.mxu0 0.0
    %3579 = vmatprep.subr.mxu0 0.0
    %3580 = vmatpush1.msra.mxu0 0.0
    %3581 = vmatprep.subr.mxu0 0.0
    %3582 = vmatpush1.msra.mxu0 0.0
    %3583 = vmatprep.subr.mxu0 0.0
    %3584 = vmatpush1.msra.mxu0 0.0
    %3585 = vmatprep.subr.mxu0 0.0
    %3586 = vmatpush1.msra.mxu0 0.0
    %3587 = vmatprep.subr.mxu0 0.0
    %3588 = vmatpush1.msra.mxu0 0.0
    %3589 = vmatprep.subr.mxu0 0.0
    %3590 = vmatpush1.msra.mxu0 0.0
    %3591 = vmatprep.subr.mxu0 0.0
    %3592 = vmatpush1.msra.mxu0 0.0
    %3593 = vmatprep.subr.mxu0 0.0
    %3594 = vmatpush1.msra.mxu0 0.0
    %3595 = vmatprep.subr.mxu0 0.0
    %3596 = vmatpush1.msra.mxu0 0.0
    %3597 = vmatprep.subr.mxu0 0.0
    %3598 = vmatpush1.msra.mxu0 0.0
    %3599 = vmatprep.subr.mxu0 0.0
    %3600 = vmatpush1.msra.mxu0 0.0
    %3601 = vmatprep.subr.mxu0 0.0
    %3602 = vmatpush1.msra.mxu0 0.0
    %3603 = vmatprep.subr.mxu0 0.0
    %3604 = vmatpush1.msra.mxu0 0.0
    %3605 = vmatprep.subr.mxu0 0.0
    %3606 = vmatpush1.msra.mxu0 0.0
    %3607 = vmatprep.subr.mxu0 0.0
    %3608 = vmatpush1.msra.mxu0 0.0
    %3609 = vmatprep.subr.mxu0 0.0
    %3610 = vmatpush1.msra.mxu0 0.0
    %3611 = vmatprep.subr.mxu0 0.0
    %3612 = vmatpush1.msra.mxu0 0.0
    %3613 = vmatprep.subr.mxu0 0.0
    %3614 = vmatpush1.msra.mxu0 0.0
    %3615 = vmatprep.subr.mxu0 0.0
    %3616 = vmatpush1.msra.mxu0 0.0
    %3617 = vmatprep.subr.mxu0 0.0
    %3618 = vmatpush1.msra.mxu0 0.0
    %3619 = vmatprep.subr.mxu0 0.0
    %3620 = vmatpush1.msra.mxu0 0.0
    %3621 = vmatprep.mubr.f32.mxu0 0.0
    %3622 = vmatmul.mubr.f32.gmra.mrb[0].mxu0 %v3552
    %v3623 = vpop.f32.mrb[0].mxu0
    %v3624 = vadd.f32 %v3550, %v3623
    %v3625 = vpop.f32.mrb[0].mxu0
    %3626 = vmatprep.mubr.f32.mxu0 0.0
    %3627 = vmatmul.mubr.f32.gmra.mrb[0].mxu0 %v3555
    %v3628 = vpop.f32.mrb[0].mxu0
    %v3629 = vadd.f32 %v3550, %v3628
    %v3630 = vpop.f32.mrb[0].mxu0
    %3631 = vdwg.mxu0
    %3632 = vst.msk [vmem:[%s4] sm:$0xff] %vm452, %v3624
    %3633 = vst.msk [vmem:[%s4 + $0x8] sm:$0xff] %vm452, %v3629
    // Predicated region
    $region18: #{pose_transformer_forward.1} parent=1 // pred_check
      _
    $region19: #{pose_transformer_forward.1} parent=1 // pred_check_branch
      %3635 = sbr.rel (0) target = $region21
    $region20: #{pose_transformer_forward.1} parent=1 // pred_region
      _
    $region21: #{pose_transformer_forward.1} parent=1 // pred_fallthru
      _
    // Predicated region
    $region22: #{pose_transformer_forward.1} parent=1 // pred_check
      _
    $region23: #{pose_transformer_forward.1} parent=1 // pred_check_branch
      %3637 = sbr.rel (0) target = $region25
    $region24: #{pose_transformer_forward.1} parent=1 // pred_region
      _
    $region25: #{pose_transformer_forward.1} parent=1 // pred_fallthru
      _
    %3638 = vsyncpa [#allocation6], 1

</llo_original>
